<compile_context>
chip_gen: v5e
topology: v5e:2x2
jax: 0.10.0
libtpu: 0.0.40
codegen_flags: <defaults>
</compile_context>

<pallas_src>
import functools
import math

import jax
import jax.numpy as jnp
from jax.experimental import pallas as pl
from jax.experimental.pallas import tpu as pltpu

# ---------------------------------------------------------------------------
# Finite-difference stencil dictionary (15 x 5 x 5), transcribed from the
# PyTorch `partial_dict_0`.
# ---------------------------------------------------------------------------
PARTIAL_DICT_0 = jnp.array([
    [[0, 0, 0, 0, 0], [0, 0, 0, 0, 0], [0, 0, 1, 0, 0], [0, 0, 0, 0, 0], [0, 0, 0, 0, 0]],
    [[0, 0, 0, 0, 0], [0, 0, 0, 0, 0], [0, -0.5, 0, 0.5, 0], [0, 0, 0, 0, 0], [0, 0, 0, 0, 0]],
    [[0, 0, 0, 0, 0], [0, 0, 0.5, 0, 0], [0, 0, 0, 0, 0], [0, 0, -0.5, 0, 0], [0, 0, 0, 0, 0]],
    [[0, 0, 0, 0, 0], [0, 0, 0, 0, 0], [0, 1, -2, 1, 0], [0, 0, 0, 0, 0], [0, 0, 0, 0, 0]],
    [[0, 0, 0, 0, 0], [0, -0.25, 0, 0.25, 0], [0, 0, 0, 0, 0], [0, 0.25, 0, -0.25, 0], [0, 0, 0, 0, 0]],
    [[0, 0, 0, 0, 0], [0, 0, 1, 0, 0], [0, 0, -2, 0, 0], [0, 0, 1, 0, 0], [0, 0, 0, 0, 0]],
    [[0, 0, 0, 0, 0], [0, 0, 0, 0, 0], [-0.5, 1, 0, -1, 0.5], [0, 0, 0, 0, 0], [0, 0, 0, 0, 0]],
    [[0, 0, 0, 0, 0], [0, 0.5, -1, 0.5, 0], [0, 0, 0, 0, 0], [0, -0.5, 1, -0.5, 0], [0, 0, 0, 0, 0]],
    [[0, 0, 0, 0, 0], [0, -0.5, 0, 0.5, 0], [0, 1, 0, -1, 0], [0, -0.5, 0, 0.5, 0], [0, 0, 0, 0, 0]],
    [[0, 0, 0.5, 0, 0], [0, 0, -1, 0, 0], [0, 0, 0, 0, 0], [0, 0, 1, 0, 0], [0, 0, -0.5, 0, 0]],
    [[0, 0, 0, 0, 0], [0, 0, 0, 0, 0], [1, -4, 6, -4, 1], [0, 0, 0, 0, 0], [0, 0, 0, 0, 0]],
    [[0, 0, 0, 0, 0], [-0.25, 0.5, 0, -0.5, 0.25], [0, 0, 0, 0, 0], [0.25, -0.5, 0, 0.5, -0.25], [0, 0, 0, 0, 0]],
    [[0, 0, 0, 0, 0], [0, 1, -2, 1, 0], [0, -2, 4, -2, 0], [0, 1, -2, 1, 0], [0, 0, 0, 0, 0]],
    [[0, -0.25, 0, 0.25, 0], [0, 0.5, 0, -0.5, 0], [0, 0, 0, 0, 0], [0, -0.5, 0, 0.5, 0], [0, 0.25, 0, -0.25, 0]],
    [[0, 0, 1, 0, 0], [0, 0, -4, 0, 0], [0, 0, 6, 0, 0], [0, 0, -4, 0, 0], [0, 0, 1, 0, 0]],
], dtype=jnp.float32)

P = 8  # rotation group order (module-level `p` in the reference code)


# ---------------------------------------------------------------------------
# Parameter glue (plain JAX): reproduce get_coef + 5x5 kernel construction.
# ---------------------------------------------------------------------------
def get_coef(weight, num_inputs, num_outputs):
    idx = jnp.array([0, 1, 2, 3, 4, 5, 7, 8, 12])
    transformation = PARTIAL_DICT_0[idx][:, 1:4, 1:4].reshape(9, 9)
    inv_transformation = jnp.linalg.inv(transformation)
    betas = weight.reshape(-1, 9) @ inv_transformation
    return betas.reshape(num_inputs, num_outputs, 9)


def build_5x5_kernel(weight, tran, partial, p, ni_div, no):
    ci = ni_div * p
    betas = get_coef(weight, ci, no)
    og_coef = betas.reshape(ci * no, 9)
    pd = partial.reshape(15, 25)
    og_list = []
    for k in range(p):
        ok = (og_coef @ tran[k]) @ pd                 # (ci*no, 25)
        ok = ok.reshape(ni_div, p, no, 25)
        # torch.cat([x[:, -k:], x[:, :-k]], dim=1) == roll by k along dim 1
        ok = jnp.roll(ok, shift=k, axis=1)
        og_list.append(ok)
    kernel = jnp.stack(og_list, axis=3)               # (ni_div, p, no, p, 25)
    return kernel.reshape(ci, no * p, 5, 5)           # (Cout, Cin, 5, 5)


# ---------------------------------------------------------------------------
# Fused Pallas conv2d (stride=1): flat padded-spatial + single K=KH*KW*Cin MXU
# contraction per tile.
# ---------------------------------------------------------------------------
def _gconv_fused_kernel(w_ref, qm_ref, qh_ref, o_ref, qbuf_ref, patch_ref, *,
                        n_taps, kw, wp, tn, cin):
    # w_ref:    (Cout, KH*KW*Cin) bf16   — grid-invariant weight matrix.
    # qm_ref:   (Cin, tn)         bf16   — main flat-spatial tile.
    # qh_ref:   (Cin, halo)       bf16   — 128-aligned halo following the tile.
    # o_ref:    (Cout, tn)        f32    — lane-dense output tile.
    # qbuf_ref: (Cin, tn + halo)  bf16   — VMEM scratch (haloed tile).
    # patch_ref:(KH*KW*Cin, tn)   bf16   — VMEM scratch (fused im2col patch).
    #
    # Assemble the haloed tile once (both stores are lane-aligned).
    qbuf_ref[:, :tn] = qm_ref[...]
    qbuf_ref[:, tn:] = qh_ref[...]
    # Gather the KH*KW shifted views into one (KH*KW*Cin, tn) patch matrix so
    # the whole conv collapses into a single MXU contraction with K = KH*KW*Cin.
    for t in range(n_taps):                      # unrolled: 25 taps
        d = (t // kw) * wp + (t % kw)            # static flat tap offset
        patch_ref[t * cin:(t + 1) * cin, :] = qbuf_ref[:, d:d + tn]
    o_ref[...] = jnp.dot(w_ref[...], patch_ref[...],
                         preferred_element_type=jnp.float32).astype(o_ref.dtype)


def _round_up(x, m):
    return ((x + m - 1) // m) * m


def pallas_gconv2d(x, kernel5, *, padding=1, tn=None):
    """x: (B, Cin, H, W) NCHW; kernel5: (Cout, Cin, KH, KW) OIHW.
    Returns (B, Cout, Hout, Wout) in f32 (bf16 operands, f32 accumulation)."""
    B, Cin, H, W = x.shape
    Cout, Cin_w, KH, KW = kernel5.shape
    assert Cin == Cin_w
    Hp, Wp = H + 2 * padding, W + 2 * padding
    Hout, Wout = Hp - KH + 1, Wp - KW + 1
    assert Hout > 0 and Wout > 0

    # Flat padded-spatial trick: with q[ci, b*Hp*Wp + r*Wp + c] = xp[b, ci, r, c],
    #   out[b, co, h, w] = sum_{t, ci} W[co, t, ci] * q[ci, base + d(t)],
    # base = b*Hp*Wp + h*Wp + w, d(t) = kh*Wp + kw.  Valid outputs (h<Hout,
    # w<Wout) never read across the batch boundary; the cropped-away positions
    # read the next image / the trailing zero pad (halo >= d_max) harmlessly.
    d_max = (KH - 1) * Wp + (KW - 1)
    halo = _round_up(d_max, 128)          # 128-lane-aligned halo block width
    Ntotal = B * Hp * Wp                  # batch folded into the lane/N dim

    # Tile size: target ~2 grid steps (>=2 / even for v7x megacore), multiple of
    # `halo` so the halo BlockSpec index map stays a clean block index.
    if tn is None:
        cap = _round_up(2048, halo)
        tn = min(cap, _round_up(pl.cdiv(Ntotal, 2), halo))
    else:
        tn = _round_up(tn, halo)
    NT = pl.cdiv(Ntotal, tn)
    Npad = NT * tn

    # Wrapper layout glue (cast first so the pads move half the bytes).
    q = jnp.pad(x.astype(jnp.bfloat16),
                ((0, 0), (0, 0), (padding, padding), (padding, padding)))
    q = jnp.transpose(q, (1, 0, 2, 3)).reshape(Cin, Ntotal)
    q = jnp.pad(q, ((0, 0), (0, Npad + halo - Ntotal)))      # (Cin, Npad+halo)

    # Fused weight matrix: w[co, t*Cin + ci] = kernel5[co, ci, kh(t), kw(t)].
    Ktot = KH * KW * Cin
    w = jnp.transpose(kernel5, (0, 2, 3, 1)).reshape(Cout, Ktot)
    w = w.astype(jnp.bfloat16)

    flops = 2 * Cout * Ktot * Npad
    bytes_accessed = (Cout * Ktot * 2 + Cin * (Npad + halo) * 2
                      + NT * Cin * halo * 2 + Cout * Npad * 4)

    blocks_per_halo = tn // halo
    kernel = functools.partial(_gconv_fused_kernel, n_taps=KH * KW, kw=KW,
                               wp=Wp, tn=tn, cin=Cin)

    out_flat = pl.pallas_call(
        kernel,
        out_shape=jax.ShapeDtypeStruct((Cout, Npad), jnp.float32),
        grid=(NT,),
        in_specs=[
            # Weights: tiny (Cout*Ktot bf16) and grid-invariant.
            pl.BlockSpec((Cout, Ktot), lambda i: (0, 0)),
            # Main tile of q and the 128-aligned halo block that follows it
            # (same array passed twice -> no duplicated HBM copy).
            pl.BlockSpec((Cin, tn), lambda i: (0, i)),
            pl.BlockSpec((Cin, halo), lambda i: (0, (i + 1) * blocks_per_halo)),
        ],
        out_specs=pl.BlockSpec((Cout, tn), lambda i: (0, i)),
        scratch_shapes=[
            pltpu.VMEM((Cin, tn + halo), jnp.bfloat16),   # haloed tile buffer
            pltpu.VMEM((Ktot, tn), jnp.bfloat16),         # fused im2col patch
        ],
        compiler_params=pltpu.CompilerParams(
            dimension_semantics=("parallel",),
            vmem_limit_bytes=32 * 1024 * 1024),
        cost_estimate=pl.CostEstimate(flops=int(flops), transcendentals=0,
                                      bytes_accessed=int(bytes_accessed)),
    )(w, q, q)

    # Crop: valid outputs live at columns b*Hp*Wp + h*Wp + w with h<Hout, w<Wout.
    out = out_flat[:, :Ntotal].reshape(Cout, B, Hp, Wp)[:, :, :Hout, :Wout]
    return jnp.transpose(out, (1, 0, 2, 3))


# ---------------------------------------------------------------------------
# g_conv2d module equivalent.
# ---------------------------------------------------------------------------
class GConv2d:
    def __init__(self, num_inputs, num_outputs, p, partial, tran, key):
        self.p = p
        self.num_inputs = int(num_inputs / p)   # channels per group element
        self.num_outputs = num_outputs
        self.partial = partial
        self.tran = tran
        # The reference module's final .view() silently requires
        # num_inputs == num_outputs * p (i.e. ni_div == num_outputs).
        assert self.num_inputs == num_outputs, \
            "g_conv2d final view requires num_inputs == num_outputs * p"
        # kaiming_uniform_(a=sqrt(5)) => U(-1/sqrt(fan_in), 1/sqrt(fan_in)),
        # fan_in = num_outputs * 3 * 3 for a (p*ni, no, 3, 3) tensor.
        fan_in = num_outputs * 9
        bound = 1.0 / math.sqrt(fan_in)
        self.weight = jax.random.uniform(
            key, (self.p * self.num_inputs, self.num_outputs, 3, 3),
            minval=-bound, maxval=bound, dtype=jnp.float32)

    def __call__(self, x):
        kernel = build_5x5_kernel(self.weight, self.tran, self.partial,
                                  self.p, self.num_inputs, self.num_outputs)
        out = pallas_gconv2d(x, kernel, padding=1)
        b, _, hy, hx = out.shape
        return out.reshape(b, self.num_outputs * self.p, hy, hx)


if __name__ == "__main__":
    key = jax.random.PRNGKey(0)
    kw_key, kt_key, kx_key = jax.random.split(key, 3)

    p_ = P                      # 8
    num_inputs = 16             # -> ni_div = 2, Cout = 16
    num_outputs = 2             # -> Cin = num_outputs * p = 16 (== Cout, required)
    B, H, W = 2, 16, 16

    # `tran`: p deterministic (9, 15) transformation matrices (module input).
    tran = 0.1 * jax.random.normal(kt_key, (p_, 9, 15), dtype=jnp.float32)

    mod = GConv2d(num_inputs, num_outputs, p_, PARTIAL_DICT_0, tran, kw_key)
    x = jax.random.normal(kx_key, (B, num_outputs * p_, H, W), dtype=jnp.float32)

    fwd = jax.jit(mod.__call__)
    out = jax.block_until_ready(fwd(x))
    assert out.shape == (B, num_outputs * p_, H - 2, W - 2), out.shape

    # Cross-check against XLA's conv with identically bf16-quantized operands
    # (the Pallas kernel uses bf16 inputs with f32 accumulation).
    kernel5 = build_5x5_kernel(mod.weight, tran, PARTIAL_DICT_0, p_,
                               mod.num_inputs, num_outputs)
    ref = jax.lax.conv_general_dilated(
        x.astype(jnp.bfloat16), kernel5.astype(jnp.bfloat16),
        window_strides=(1, 1), padding=[(1, 1), (1, 1)],
        dimension_numbers=("NCHW", "OIHW", "NCHW"),
        preferred_element_type=jnp.float32,
    ).reshape(out.shape)
    err = float(jnp.abs(out - ref).max())
    assert err < 1e-2, err

    print("KERNEL_OK")
</pallas_src>

<mosaic_0001>
module attributes {stable_mosaic.version = 11 : i64} {
  func.func @_gconv_fused_kernel(%arg0: i32, %arg1: memref<16x400xbf16, #tpu.memory_space<vmem>>, %arg2: memref<16x384xbf16, #tpu.memory_space<vmem>>, %arg3: memref<16x128xbf16, #tpu.memory_space<vmem>>, %arg4: memref<16x384xf32, #tpu.memory_space<vmem>>, %arg5: memref<16x512xbf16, #tpu.memory_space<vmem>>, %arg6: memref<400x384xbf16, #tpu.memory_space<vmem>>) attributes {dimension_semantics = [#tpu.dimension_semantics<parallel>], iteration_bounds = array<i64: 2>, scalar_prefetch = 0 : i64, scratch_operands = 2 : i64, tpu.core_type = #tpu.core_type<tc>, window_params = [{pipeline_mode = #tpu.pipeline_mode<synchronous>, transform_indices = @transform_0, window_bounds = array<i64: 16, 400>}, {transform_indices = @transform_1, window_bounds = array<i64: 16, 384>}, {transform_indices = @transform_2, window_bounds = array<i64: 16, 128>}, {transform_indices = @transform_3, window_bounds = array<i64: 16, 384>}]} {
    %c0 = arith.constant 0 : index
    %c0_0 = arith.constant 0 : index
    %0 = vector.load %arg2[%c0, %c0_0] : memref<16x384xbf16, #tpu.memory_space<vmem>>, vector<16x384xbf16>
    %c0_1 = arith.constant 0 : index
    %c0_2 = arith.constant 0 : index
    %1 = vector.load %arg5[%c0_1, %c0_2] : memref<16x512xbf16, #tpu.memory_space<vmem>>, vector<16x384xbf16>
    tpu.vector_store %arg5[%c0_1, %c0_2], %0 {strides = array<i32>} : memref<16x512xbf16, #tpu.memory_space<vmem>>, vector<16x384xbf16>,
    %c0_3 = arith.constant 0 : index
    %c0_4 = arith.constant 0 : index
    %2 = vector.load %arg3[%c0_3, %c0_4] : memref<16x128xbf16, #tpu.memory_space<vmem>>, vector<16x128xbf16>
    %c0_5 = arith.constant 0 : index
    %c384 = arith.constant 384 : index
    %3 = vector.load %arg5[%c0_5, %c384] : memref<16x512xbf16, #tpu.memory_space<vmem>>, vector<16x128xbf16>
    tpu.vector_store %arg5[%c0_5, %c384], %2 {strides = array<i32>} : memref<16x512xbf16, #tpu.memory_space<vmem>>, vector<16x128xbf16>,
    %c0_6 = arith.constant 0 : index
    %c0_7 = arith.constant 0 : index
    %4 = vector.load %arg5[%c0_6, %c0_7] : memref<16x512xbf16, #tpu.memory_space<vmem>>, vector<16x384xbf16>
    %c0_8 = arith.constant 0 : index
    %c0_9 = arith.constant 0 : index
    %5 = vector.load %arg6[%c0_8, %c0_9] : memref<400x384xbf16, #tpu.memory_space<vmem>>, vector<16x384xbf16>
    tpu.vector_store %arg6[%c0_8, %c0_9], %4 {strides = array<i32>} : memref<400x384xbf16, #tpu.memory_space<vmem>>, vector<16x384xbf16>,
    %c0_10 = arith.constant 0 : index
    %c1 = arith.constant 1 : index
    %6 = vector.load %arg5[%c0_10, %c1] : memref<16x512xbf16, #tpu.memory_space<vmem>>, vector<16x384xbf16>
    %c16 = arith.constant 16 : index
    %c0_11 = arith.constant 0 : index
    %7 = vector.load %arg6[%c16, %c0_11] : memref<400x384xbf16, #tpu.memory_space<vmem>>, vector<16x384xbf16>
    tpu.vector_store %arg6[%c16, %c0_11], %6 {strides = array<i32>} : memref<400x384xbf16, #tpu.memory_space<vmem>>, vector<16x384xbf16>,
    %c0_12 = arith.constant 0 : index
    %c2 = arith.constant 2 : index
    %8 = vector.load %arg5[%c0_12, %c2] : memref<16x512xbf16, #tpu.memory_space<vmem>>, vector<16x384xbf16>
    %c32 = arith.constant 32 : index
    %c0_13 = arith.constant 0 : index
    %9 = vector.load %arg6[%c32, %c0_13] : memref<400x384xbf16, #tpu.memory_space<vmem>>, vector<16x384xbf16>
    tpu.vector_store %arg6[%c32, %c0_13], %8 {strides = array<i32>} : memref<400x384xbf16, #tpu.memory_space<vmem>>, vector<16x384xbf16>,
    %c0_14 = arith.constant 0 : index
    %c3 = arith.constant 3 : index
    %10 = vector.load %arg5[%c0_14, %c3] : memref<16x512xbf16, #tpu.memory_space<vmem>>, vector<16x384xbf16>
    %c48 = arith.constant 48 : index
    %c0_15 = arith.constant 0 : index
    %11 = vector.load %arg6[%c48, %c0_15] : memref<400x384xbf16, #tpu.memory_space<vmem>>, vector<16x384xbf16>
    tpu.vector_store %arg6[%c48, %c0_15], %10 {strides = array<i32>} : memref<400x384xbf16, #tpu.memory_space<vmem>>, vector<16x384xbf16>,
    %c0_16 = arith.constant 0 : index
    %c4 = arith.constant 4 : index
    %12 = vector.load %arg5[%c0_16, %c4] : memref<16x512xbf16, #tpu.memory_space<vmem>>, vector<16x384xbf16>
    %c64 = arith.constant 64 : index
    %c0_17 = arith.constant 0 : index
    %13 = vector.load %arg6[%c64, %c0_17] : memref<400x384xbf16, #tpu.memory_space<vmem>>, vector<16x384xbf16>
    tpu.vector_store %arg6[%c64, %c0_17], %12 {strides = array<i32>} : memref<400x384xbf16, #tpu.memory_space<vmem>>, vector<16x384xbf16>,
    %c0_18 = arith.constant 0 : index
    %c18 = arith.constant 18 : index
    %14 = vector.load %arg5[%c0_18, %c18] : memref<16x512xbf16, #tpu.memory_space<vmem>>, vector<16x384xbf16>
    %c80 = arith.constant 80 : index
    %c0_19 = arith.constant 0 : index
    %15 = vector.load %arg6[%c80, %c0_19] : memref<400x384xbf16, #tpu.memory_space<vmem>>, vector<16x384xbf16>
    tpu.vector_store %arg6[%c80, %c0_19], %14 {strides = array<i32>} : memref<400x384xbf16, #tpu.memory_space<vmem>>, vector<16x384xbf16>,
    %c0_20 = arith.constant 0 : index
    %c19 = arith.constant 19 : index
    %16 = vector.load %arg5[%c0_20, %c19] : memref<16x512xbf16, #tpu.memory_space<vmem>>, vector<16x384xbf16>
    %c96 = arith.constant 96 : index
    %c0_21 = arith.constant 0 : index
    %17 = vector.load %arg6[%c96, %c0_21] : memref<400x384xbf16, #tpu.memory_space<vmem>>, vector<16x384xbf16>
    tpu.vector_store %arg6[%c96, %c0_21], %16 {strides = array<i32>} : memref<400x384xbf16, #tpu.memory_space<vmem>>, vector<16x384xbf16>,
    %c0_22 = arith.constant 0 : index
    %c20 = arith.constant 20 : index
    %18 = vector.load %arg5[%c0_22, %c20] : memref<16x512xbf16, #tpu.memory_space<vmem>>, vector<16x384xbf16>
    %c112 = arith.constant 112 : index
    %c0_23 = arith.constant 0 : index
    %19 = vector.load %arg6[%c112, %c0_23] : memref<400x384xbf16, #tpu.memory_space<vmem>>, vector<16x384xbf16>
    tpu.vector_store %arg6[%c112, %c0_23], %18 {strides = array<i32>} : memref<400x384xbf16, #tpu.memory_space<vmem>>, vector<16x384xbf16>,
    %c0_24 = arith.constant 0 : index
    %c21 = arith.constant 21 : index
    %20 = vector.load %arg5[%c0_24, %c21] : memref<16x512xbf16, #tpu.memory_space<vmem>>, vector<16x384xbf16>
    %c128 = arith.constant 128 : index
    %c0_25 = arith.constant 0 : index
    %21 = vector.load %arg6[%c128, %c0_25] : memref<400x384xbf16, #tpu.memory_space<vmem>>, vector<16x384xbf16>
    tpu.vector_store %arg6[%c128, %c0_25], %20 {strides = array<i32>} : memref<400x384xbf16, #tpu.memory_space<vmem>>, vector<16x384xbf16>,
    %c0_26 = arith.constant 0 : index
    %c22 = arith.constant 22 : index
    %22 = vector.load %arg5[%c0_26, %c22] : memref<16x512xbf16, #tpu.memory_space<vmem>>, vector<16x384xbf16>
    %c144 = arith.constant 144 : index
    %c0_27 = arith.constant 0 : index
    %23 = vector.load %arg6[%c144, %c0_27] : memref<400x384xbf16, #tpu.memory_space<vmem>>, vector<16x384xbf16>
    tpu.vector_store %arg6[%c144, %c0_27], %22 {strides = array<i32>} : memref<400x384xbf16, #tpu.memory_space<vmem>>, vector<16x384xbf16>,
    %c0_28 = arith.constant 0 : index
    %c36 = arith.constant 36 : index
    %24 = vector.load %arg5[%c0_28, %c36] : memref<16x512xbf16, #tpu.memory_space<vmem>>, vector<16x384xbf16>
    %c160 = arith.constant 160 : index
    %c0_29 = arith.constant 0 : index
    %25 = vector.load %arg6[%c160, %c0_29] : memref<400x384xbf16, #tpu.memory_space<vmem>>, vector<16x384xbf16>
    tpu.vector_store %arg6[%c160, %c0_29], %24 {strides = array<i32>} : memref<400x384xbf16, #tpu.memory_space<vmem>>, vector<16x384xbf16>,
    %c0_30 = arith.constant 0 : index
    %c37 = arith.constant 37 : index
    %26 = vector.load %arg5[%c0_30, %c37] : memref<16x512xbf16, #tpu.memory_space<vmem>>, vector<16x384xbf16>
    %c176 = arith.constant 176 : index
    %c0_31 = arith.constant 0 : index
    %27 = vector.load %arg6[%c176, %c0_31] : memref<400x384xbf16, #tpu.memory_space<vmem>>, vector<16x384xbf16>
    tpu.vector_store %arg6[%c176, %c0_31], %26 {strides = array<i32>} : memref<400x384xbf16, #tpu.memory_space<vmem>>, vector<16x384xbf16>,
    %c0_32 = arith.constant 0 : index
    %c38 = arith.constant 38 : index
    %28 = vector.load %arg5[%c0_32, %c38] : memref<16x512xbf16, #tpu.memory_space<vmem>>, vector<16x384xbf16>
    %c192 = arith.constant 192 : index
    %c0_33 = arith.constant 0 : index
    %29 = vector.load %arg6[%c192, %c0_33] : memref<400x384xbf16, #tpu.memory_space<vmem>>, vector<16x384xbf16>
    tpu.vector_store %arg6[%c192, %c0_33], %28 {strides = array<i32>} : memref<400x384xbf16, #tpu.memory_space<vmem>>, vector<16x384xbf16>,
    %c0_34 = arith.constant 0 : index
    %c39 = arith.constant 39 : index
    %30 = vector.load %arg5[%c0_34, %c39] : memref<16x512xbf16, #tpu.memory_space<vmem>>, vector<16x384xbf16>
    %c208 = arith.constant 208 : index
    %c0_35 = arith.constant 0 : index
    %31 = vector.load %arg6[%c208, %c0_35] : memref<400x384xbf16, #tpu.memory_space<vmem>>, vector<16x384xbf16>
    tpu.vector_store %arg6[%c208, %c0_35], %30 {strides = array<i32>} : memref<400x384xbf16, #tpu.memory_space<vmem>>, vector<16x384xbf16>,
    %c0_36 = arith.constant 0 : index
    %c40 = arith.constant 40 : index
    %32 = vector.load %arg5[%c0_36, %c40] : memref<16x512xbf16, #tpu.memory_space<vmem>>, vector<16x384xbf16>
    %c224 = arith.constant 224 : index
    %c0_37 = arith.constant 0 : index
    %33 = vector.load %arg6[%c224, %c0_37] : memref<400x384xbf16, #tpu.memory_space<vmem>>, vector<16x384xbf16>
    tpu.vector_store %arg6[%c224, %c0_37], %32 {strides = array<i32>} : memref<400x384xbf16, #tpu.memory_space<vmem>>, vector<16x384xbf16>,
    %c0_38 = arith.constant 0 : index
    %c54 = arith.constant 54 : index
    %34 = vector.load %arg5[%c0_38, %c54] : memref<16x512xbf16, #tpu.memory_space<vmem>>, vector<16x384xbf16>
    %c240 = arith.constant 240 : index
    %c0_39 = arith.constant 0 : index
    %35 = vector.load %arg6[%c240, %c0_39] : memref<400x384xbf16, #tpu.memory_space<vmem>>, vector<16x384xbf16>
    tpu.vector_store %arg6[%c240, %c0_39], %34 {strides = array<i32>} : memref<400x384xbf16, #tpu.memory_space<vmem>>, vector<16x384xbf16>,
    %c0_40 = arith.constant 0 : index
    %c55 = arith.constant 55 : index
    %36 = vector.load %arg5[%c0_40, %c55] : memref<16x512xbf16, #tpu.memory_space<vmem>>, vector<16x384xbf16>
    %c256 = arith.constant 256 : index
    %c0_41 = arith.constant 0 : index
    %37 = vector.load %arg6[%c256, %c0_41] : memref<400x384xbf16, #tpu.memory_space<vmem>>, vector<16x384xbf16>
    tpu.vector_store %arg6[%c256, %c0_41], %36 {strides = array<i32>} : memref<400x384xbf16, #tpu.memory_space<vmem>>, vector<16x384xbf16>,
    %c0_42 = arith.constant 0 : index
    %c56 = arith.constant 56 : index
    %38 = vector.load %arg5[%c0_42, %c56] : memref<16x512xbf16, #tpu.memory_space<vmem>>, vector<16x384xbf16>
    %c272 = arith.constant 272 : index
    %c0_43 = arith.constant 0 : index
    %39 = vector.load %arg6[%c272, %c0_43] : memref<400x384xbf16, #tpu.memory_space<vmem>>, vector<16x384xbf16>
    tpu.vector_store %arg6[%c272, %c0_43], %38 {strides = array<i32>} : memref<400x384xbf16, #tpu.memory_space<vmem>>, vector<16x384xbf16>,
    %c0_44 = arith.constant 0 : index
    %c57 = arith.constant 57 : index
    %40 = vector.load %arg5[%c0_44, %c57] : memref<16x512xbf16, #tpu.memory_space<vmem>>, vector<16x384xbf16>
    %c288 = arith.constant 288 : index
    %c0_45 = arith.constant 0 : index
    %41 = vector.load %arg6[%c288, %c0_45] : memref<400x384xbf16, #tpu.memory_space<vmem>>, vector<16x384xbf16>
    tpu.vector_store %arg6[%c288, %c0_45], %40 {strides = array<i32>} : memref<400x384xbf16, #tpu.memory_space<vmem>>, vector<16x384xbf16>,
    %c0_46 = arith.constant 0 : index
    %c58 = arith.constant 58 : index
    %42 = vector.load %arg5[%c0_46, %c58] : memref<16x512xbf16, #tpu.memory_space<vmem>>, vector<16x384xbf16>
    %c304 = arith.constant 304 : index
    %c0_47 = arith.constant 0 : index
    %43 = vector.load %arg6[%c304, %c0_47] : memref<400x384xbf16, #tpu.memory_space<vmem>>, vector<16x384xbf16>
    tpu.vector_store %arg6[%c304, %c0_47], %42 {strides = array<i32>} : memref<400x384xbf16, #tpu.memory_space<vmem>>, vector<16x384xbf16>,
    %c0_48 = arith.constant 0 : index
    %c72 = arith.constant 72 : index
    %44 = vector.load %arg5[%c0_48, %c72] : memref<16x512xbf16, #tpu.memory_space<vmem>>, vector<16x384xbf16>
    %c320 = arith.constant 320 : index
    %c0_49 = arith.constant 0 : index
    %45 = vector.load %arg6[%c320, %c0_49] : memref<400x384xbf16, #tpu.memory_space<vmem>>, vector<16x384xbf16>
    tpu.vector_store %arg6[%c320, %c0_49], %44 {strides = array<i32>} : memref<400x384xbf16, #tpu.memory_space<vmem>>, vector<16x384xbf16>,
    %c0_50 = arith.constant 0 : index
    %c73 = arith.constant 73 : index
    %46 = vector.load %arg5[%c0_50, %c73] : memref<16x512xbf16, #tpu.memory_space<vmem>>, vector<16x384xbf16>
    %c336 = arith.constant 336 : index
    %c0_51 = arith.constant 0 : index
    %47 = vector.load %arg6[%c336, %c0_51] : memref<400x384xbf16, #tpu.memory_space<vmem>>, vector<16x384xbf16>
    tpu.vector_store %arg6[%c336, %c0_51], %46 {strides = array<i32>} : memref<400x384xbf16, #tpu.memory_space<vmem>>, vector<16x384xbf16>,
    %c0_52 = arith.constant 0 : index
    %c74 = arith.constant 74 : index
    %48 = vector.load %arg5[%c0_52, %c74] : memref<16x512xbf16, #tpu.memory_space<vmem>>, vector<16x384xbf16>
    %c352 = arith.constant 352 : index
    %c0_53 = arith.constant 0 : index
    %49 = vector.load %arg6[%c352, %c0_53] : memref<400x384xbf16, #tpu.memory_space<vmem>>, vector<16x384xbf16>
    tpu.vector_store %arg6[%c352, %c0_53], %48 {strides = array<i32>} : memref<400x384xbf16, #tpu.memory_space<vmem>>, vector<16x384xbf16>,
    %c0_54 = arith.constant 0 : index
    %c75 = arith.constant 75 : index
    %50 = vector.load %arg5[%c0_54, %c75] : memref<16x512xbf16, #tpu.memory_space<vmem>>, vector<16x384xbf16>
    %c368 = arith.constant 368 : index
    %c0_55 = arith.constant 0 : index
    %51 = vector.load %arg6[%c368, %c0_55] : memref<400x384xbf16, #tpu.memory_space<vmem>>, vector<16x384xbf16>
    tpu.vector_store %arg6[%c368, %c0_55], %50 {strides = array<i32>} : memref<400x384xbf16, #tpu.memory_space<vmem>>, vector<16x384xbf16>,
    %c0_56 = arith.constant 0 : index
    %c76 = arith.constant 76 : index
    %52 = vector.load %arg5[%c0_56, %c76] : memref<16x512xbf16, #tpu.memory_space<vmem>>, vector<16x384xbf16>
    %c384_57 = arith.constant 384 : index
    %c0_58 = arith.constant 0 : index
    %53 = vector.load %arg6[%c384_57, %c0_58] : memref<400x384xbf16, #tpu.memory_space<vmem>>, vector<16x384xbf16>
    tpu.vector_store %arg6[%c384_57, %c0_58], %52 {strides = array<i32>} : memref<400x384xbf16, #tpu.memory_space<vmem>>, vector<16x384xbf16>,
    %c0_59 = arith.constant 0 : index
    %c0_60 = arith.constant 0 : index
    %54 = vector.load %arg1[%c0_59, %c0_60] : memref<16x400xbf16, #tpu.memory_space<vmem>>, vector<16x400xbf16>
    %c0_61 = arith.constant 0 : index
    %c0_62 = arith.constant 0 : index
    %55 = vector.load %arg6[%c0_61, %c0_62] : memref<400x384xbf16, #tpu.memory_space<vmem>>, vector<400x384xbf16>
    %cst = arith.constant dense<0.000000e+00> : vector<16x384xf32>
    %56 = tpu.matmul %54, %55, %cst {dimension_numbers = #tpu.dot_dimension_numbers<[1], [0], [0], [1], [0, 0, 1, 1], [], []>} : vector<16x400xbf16>, vector<400x384xbf16>, vector<16x384xf32> -> vector<16x384xf32>
    %c0_63 = arith.constant 0 : index
    %c0_64 = arith.constant 0 : index
    %57 = vector.load %arg4[%c0_63, %c0_64] : memref<16x384xf32, #tpu.memory_space<vmem>>, vector<16x384xf32>
    tpu.vector_store %arg4[%c0_63, %c0_64], %56 {strides = array<i32>} : memref<16x384xf32, #tpu.memory_space<vmem>>, vector<16x384xf32>,
    return
  }
  func.func @transform_0(%arg0: i32) -> (i32, i32) {
    %c0_i32 = arith.constant 0 : i32
    %c0_i32_0 = arith.constant 0 : i32
    %c0_i32_1 = arith.constant 0 : i32
    return %c0_i32, %c0_i32_0 : i32, i32
  }
  func.func @transform_1(%arg0: i32) -> (i32, i32) {
    %c0_i32 = arith.constant 0 : i32
    %c0_i32_0 = arith.constant 0 : i32
    return %c0_i32, %arg0 : i32, i32
  }
  func.func @transform_2(%arg0: i32) -> (i32, i32) {
    %c1_i32 = arith.constant 1 : i32
    %0 = arith.addi %arg0, %c1_i32 : i32
    %c3_i32 = arith.constant 3 : i32
    %1 = arith.muli %0, %c3_i32 : i32
    %c0_i32 = arith.constant 0 : i32
    %c0_i32_0 = arith.constant 0 : i32
    return %c0_i32, %1 : i32, i32
  }
  func.func @transform_3(%arg0: i32) -> (i32, i32) {
    %c0_i32 = arith.constant 0 : i32
    %c0_i32_0 = arith.constant 0 : i32
    return %c0_i32, %arg0 : i32, i32
  }
}

</mosaic_0001>

<llo_original>
// kernel: custom-call.11
$region0: #{custom-call.11}
  %s0 = inlined_call_operand.hbm [shape: f32[9,9], index: 0, kind: input, shape index: {}]
  %s1 = inlined_call_operand.vmem [shape: f32[9,9], index: 1, kind: output, shape index: {0}]
  %s2 = inlined_call_operand.hbm [shape: s32[9], index: 2, kind: output, shape index: {1}]
  %s3 = inlined_call_operand.vmem [shape: s32[9], index: 3, kind: output, shape index: {2}]
  %4 = xla_tuple %s1, %s2, %s3
  $region1: #{custom-call.11} parent=0
    #allocation0 [shape = 'u8[8192]{0}', space=vmem, size = 0x2000, scoped, tag = 'operand span for operand 0']
    #allocation1 [shape = 's32[1]{0}', space=sflag, size = 0x4, scoped, tag = 'scoped memory for custom-call.11']
    #allocation2 [shape = 's32[1]{0}', space=sflag, size = 0x4, scoped, tag = 'scoped memory for custom-call.11']
    #allocation3 [shape = 'u8[8192]{0}', space=vmem, size = 0x2000, scoped, tag = 'operand span for operand 1']
    #allocation4 [shape = 'u8[4096]{0}', space=vmem, size = 0x1000, scoped, tag = 'operand span for operand 2']
    #allocation5 [shape = 'u8[512]{0}', space=vmem, size = 0x400, scoped, tag = 'packed  for operand 2']
    #allocation6 [shape = 'u8[4096]{0}', space=vmem, size = 0x1000, scoped, tag = 'operand span for operand 3']
    #allocation7 [shape = 'u8[512]{0}', space=vmem, size = 0x400, scoped, tag = 'packed  for operand 3']
    #allocation8 [shape = 's32[9,128]{1,0}', space=vmem, size = 0x2000, scoped, tag = 'scratch for permutations']
    %5 = vsyncpa [#allocation1], 0
    %6 = vsyncpa [#allocation2], 0
    %8 = vsyncadd [#allocation1], 0
    %s10 = sshll.u32 %s0, 4
    %s11 = int_to_ptr.hbm [resolvable:$true] %s10
    %s12 = sshll.u32 [#allocation0], 4
    %s13 = int_to_ptr.vmem [resolvable:$true] %s12
    %15 = dma.hbm_to_vmem [thread:$0]  %s11, 256, %s13, [#allocation1]
    %17 = dma.done [#allocation1], 256
    %v18 = vld [vmem:[#allocation0] sm:$0xff]
    %19 = vst [vmem:[#allocation3] sm:$0xff] %v18
    %s20 = scalar_lea.vmem [#allocation3], 8
    %s21 = scalar_lea.vmem [#allocation0], 8
    %v22 = vld [vmem:[%s21] sm:$0xff]
    %23 = vst [vmem:[%s20] sm:$0xff] %v22
    %24 = vst [vmem:[#allocation4] sm:$0x1] 0
    %v25 = vlaneseq
    %v26 = vshrl.u32 %v25, 7
    %v27 = vmov %v26
    loop: start=0, step=1, limit=2
    $region2: #{custom-call.11} parent=1 // loop_pre_header
      _
    $region3: #{custom-call.11} parent=1 // loop_header
      %s29 = sphi 0, %s33
      %p30 = scmp.ge.s32.totalorder %s29, 2
    $region4: #{custom-call.11} parent=1 // loop_header_branch
      %32 = sbr.rel (%p30) target = $region8
    $region5: #{custom-call.11} parent=1 // loop_body
      %s34 = smul.addr %s29, 8
      %s35 = scalar_lea.vmem [#allocation8], %s34
      %s36 = smul.u32 %s29, 8
      %v37 = vstv %s36
      %v38 = vadd.s32 %v27, %v37
      %39 = vst [vmem:[%s35] sm:$0xff] %v38
    $region6: #{custom-call.11} parent=1 // loop_footer
      %s33 = sadd.s32 1, %s29
    $region7: #{custom-call.11} parent=1 // loop_footer_branch
      %28 = sbr.rel target = $region3
    $region8: #{custom-call.11} parent=1 // loop_exit
      _
    loop: start=0, step=1, limit=9
    $region9: #{custom-call.11} parent=1 // loop_pre_header
      _
    $region10: #{custom-call.11} parent=1 // loop_header
      %s41 = sphi 0, %s45
      %p42 = scmp.ge.s32.totalorder %s41, 9
    $region11: #{custom-call.11} parent=1 // loop_header_branch
      %44 = sbr.rel (%p42) target = $region15
    $region12: #{custom-call.11} parent=1 // loop_body
      %v46 = vstv %s41
      %v47 = vlaneseq
      %v48 = vshrl.u32 %v47, 7
      %v49 = vmov %v48
      %v50 = vld [vmem:[#allocation3] sm:$0xff]
      %v51 = vand.u32 2147483647, %v50
      %v53 = vstv %s41
      %vm54 = vcmp.ge.s32.totalorder %v49, %v53
      %vm55 = vcmp.lt.s32.totalorder %v49, 9
      %vm56 = vmand %vm54, %vm55
      %vm57 = vcmp.lt.f32.partialorder -inf, %v51
      %vm58 = vmand %vm56, %vm57
      %v59 = vsel %vm58, %v49, %v46
      %v60 = vsel %vm58, %v51, -inf
      %s61 = scalar_lea.vmem [#allocation3], 8
      %v62 = vld [vmem:[%s61] sm:$0xff]
      %v63 = vand.u32 2147483647, %v62
      %v64 = vadd.s32 %v49, 8
      %v65 = vstv %s41
      %vm66 = vcmp.ge.s32.totalorder %v64, %v65
      %vm67 = vcmp.lt.s32.totalorder %v64, 9
      %vm68 = vmand %vm66, %vm67
      %vm69 = vcmp.lt.f32.partialorder %v60, %v63
      %vm70 = vmand %vm68, %vm69
      %v71 = vsel %vm70, %v64, %v59
      %v72 = vsel %vm70, %v63, %v60
      %v73 = vrot.slane %v72, 1
      %v74 = vrot.slane %v71, 1
      %vm75 = vcmp.ge.f32.partialorder %v73, %v72
      %v76 = vsel %vm75, %v73, %v72
      %v77 = vsel %vm75, %v74, %v71
      %v78 = vrot.slane %v73, 1
      %v79 = vrot.slane %v74, 1
      %vm80 = vcmp.ge.f32.partialorder %v78, %v76
      %v81 = vsel %vm80, %v78, %v76
      %v82 = vsel %vm80, %v79, %v77
      %v83 = vrot.slane %v78, 1
      %v84 = vrot.slane %v79, 1
      %vm85 = vcmp.ge.f32.partialorder %v83, %v81
      %v86 = vsel %vm85, %v83, %v81
      %v87 = vsel %vm85, %v84, %v82
      %v88 = vrot.slane %v83, 1
      %v89 = vrot.slane %v84, 1
      %vm90 = vcmp.ge.f32.partialorder %v88, %v86
      %v91 = vsel %vm90, %v88, %v86
      %v92 = vsel %vm90, %v89, %v87
      %v93 = vrot.slane %v88, 1
      %v94 = vrot.slane %v89, 1
      %vm95 = vcmp.ge.f32.partialorder %v93, %v91
      %v96 = vsel %vm95, %v93, %v91
      %v97 = vsel %vm95, %v94, %v92
      %v98 = vrot.slane %v93, 1
      %v99 = vrot.slane %v94, 1
      %vm100 = vcmp.ge.f32.partialorder %v98, %v96
      %v101 = vsel %vm100, %v98, %v96
      %v102 = vsel %vm100, %v99, %v97
      %v103 = vrot.slane %v98, 1
      %v104 = vrot.slane %v99, 1
      %vm105 = vcmp.ge.f32.partialorder %v103, %v101
      %v106 = vsel %vm105, %v103, %v101
      %v107 = vsel %vm105, %v104, %v102
      %s108 = ssub.s32 128, %s41
      %109 = vrot.lane.b32.xlu0 %v107, %s108
      %v110 = vpop.permute.xlu0 %109
      %s111 = vtos %v110
      %v112 = vstv %s41
      %v113 = vlaneseq
      %v114 = vand.u32 %v113, 127
      %vm115 = vcmp.eq.s32.totalorder %v114, %v112
      %v116 = vstv %s111
      %v117 = vld [vmem:[#allocation4] ss:$0 sm:$0xff]
      %v118 = vsel %vm115, %v116, %v117
      %119 = vst [vmem:[#allocation4] sm:$0x1] %v118
      %s120 = scalar_lea.vmem [#allocation3], %s41
      %s121 = scalar_lea.vmem [#allocation3], %s111
      %v122 = vld [vmem:[%s120] ss:$0 sm:$0xff]
      %v123 = vld [vmem:[%s121] ss:$0 sm:$0xff]
      %124 = vst [vmem:[%s121] sm:$0x1] %v122
      %125 = vst [vmem:[%s120] sm:$0x1] %v123
      %s126 = scalar_lea.vmem [#allocation8], %s41
      %s127 = scalar_lea.vmem [#allocation8], %s111
      %v128 = vld [vmem:[%s126] ss:$0 sm:$0xff]
      %v129 = vld [vmem:[%s127] ss:$0 sm:$0xff]
      %130 = vst [vmem:[%s127] sm:$0x1] %v128
      %131 = vst [vmem:[%s126] sm:$0x1] %v129
      %vm132 = vcmp.ne.f32.partialorder %v123, 0.0
      %vm133 = vmand %vm115, %vm132
      %v134 = vsel %vm133, %v123, 1.0
      %v135 = vlaneseq
      %v136 = vand.u32 %v135, 127
      %v137 = vstv %s41
      %vm138 = vcmp.gt.s32.totalorder %v136, %v137
      %v139 = vsel %vm138, %v123, 0.0
      %v140 = vlaneseq
      %v141 = vshrl.u32 %v140, 7
      %v142 = vmov %v141
      %v143 = vld [vmem:[#allocation3] sm:$0xff]
      %v145 = vstv %s41
      %vm146 = vcmp.gt.s32.totalorder %v142, %v145
      %v147 = vsel %vm146, %v134, 1.0
      %v148 = vrcp.pop %v147
      %v149 = vmul.f32 %v147, %v148
      %v150 = vsub.f32 1.0, %v149
      %v151 = vmul.f32 %v148, %v150
      %v152 = vadd.f32 %v148, %v151
      %vm153 = vweird.f32 %v147
      %vm154 = vweird.f32 %v148
      %vm155 = vmor %vm153, %vm154
      %v156 = vsel %vm155, %v148, %v152
      %v157 = vand.u32 2147483647, %v147
      %vm158 = vcmp.eq.f32.partialorder %v157, 8.507059e+37
      %v159 = vand.u32 %v147, 2147483648
      %v160 = vor.u32 1.1754944e-38, %v159
      %v161 = vsel %vm158, %v160, %v156
      %v162 = vmul.f32 %v143, %v161
      %vm163 = vmand %vm146, %vm115
      %v164 = vsel %vm163, %v162, 0.0
      %165 = vadd.xlane.f32.xlu0 %v164
      %v166 = vpop.xlane.xlu0 %165
      %v167 = vmul.f32 %v166, %v139
      %v168 = vsub.f32 %v162, %v167
      %169 = vst [vmem:[#allocation3] sm:$0xff] %v168
      %s170 = scalar_lea.vmem [#allocation3], 8
      %v171 = vld [vmem:[%s170] sm:$0xff]
      %v172 = vadd.s32 %v142, 8
      %v173 = vstv %s41
      %vm174 = vcmp.gt.s32.totalorder %v172, %v173
      %v175 = vsel %vm174, %v134, 1.0
      %v176 = vrcp.pop %v175
      %v177 = vmul.f32 %v175, %v176
      %v178 = vsub.f32 1.0, %v177
      %v179 = vmul.f32 %v176, %v178
      %v180 = vadd.f32 %v176, %v179
      %vm181 = vweird.f32 %v175
      %vm182 = vweird.f32 %v176
      %vm183 = vmor %vm181, %vm182
      %v184 = vsel %vm183, %v176, %v180
      %v185 = vand.u32 2147483647, %v175
      %vm186 = vcmp.eq.f32.partialorder %v185, 8.507059e+37
      %v187 = vand.u32 %v175, 2147483648
      %v188 = vor.u32 1.1754944e-38, %v187
      %v189 = vsel %vm186, %v188, %v184
      %v190 = vmul.f32 %v171, %v189
      %vm191 = vmand %vm174, %vm115
      %v192 = vsel %vm191, %v190, 0.0
      %193 = vadd.xlane.f32.xlu0 %v192
      %v194 = vpop.xlane.xlu0 %193
      %v195 = vmul.f32 %v194, %v139
      %v196 = vsub.f32 %v190, %v195
      %197 = vst [vmem:[%s170] sm:$0xff] %v196
    $region13: #{custom-call.11} parent=1 // loop_footer
      %s45 = sadd.s32 1, %s41
    $region14: #{custom-call.11} parent=1 // loop_footer_branch
      %40 = sbr.rel target = $region10
    $region15: #{custom-call.11} parent=1 // loop_exit
      _
    %v198 = vld [vmem:[#allocation8] sm:$0xff]
    %s199 = scalar_lea.vmem [#allocation8], 8
    %v200 = vld [vmem:[%s199] sm:$0xff]
    %s201 = scalar_lea.vmem [#allocation8], 16
    %s202 = scalar_lea.vmem [#allocation8], 24
    %s203 = scalar_lea.vmem [#allocation8], 32
    %s204 = scalar_lea.vmem [#allocation8], 40
    %s205 = scalar_lea.vmem [#allocation8], 48
    %s206 = scalar_lea.vmem [#allocation8], 56
    %s207 = scalar_lea.vmem [#allocation8], 64
    %s208 = scalar_lea.vmem [#allocation8], 72
    %s209 = scalar_lea.vmem [#allocation8], 80
    %s210 = scalar_lea.vmem [#allocation8], 88
    %s211 = scalar_lea.vmem [#allocation8], 96
    %s212 = scalar_lea.vmem [#allocation8], 104
    %s213 = scalar_lea.vmem [#allocation8], 112
    %s214 = scalar_lea.vmem [#allocation8], 120
    %215 = vxpose.xlu0.b32.start [1/16] %v198, 128
    %216 = vxpose.xlu0.b32.cont [2/16] %v200, 128
    %217 = vxpose.xlu0.b32.cont [3/16] 0, 128
    %218 = vxpose.xlu0.b32.cont [4/16] 0, 128
    %219 = vxpose.xlu0.b32.cont [5/16] 0, 128
    %220 = vxpose.xlu0.b32.cont [6/16] 0, 128
    %221 = vxpose.xlu0.b32.cont [7/16] 0, 128
    %222 = vxpose.xlu0.b32.cont [8/16] 0, 128
    %223 = vxpose.xlu0.b32.cont [9/16] 0, 128
    %224 = vxpose.xlu0.b32.cont [10/16] 0, 128
    %225 = vxpose.xlu0.b32.cont [11/16] 0, 128
    %226 = vxpose.xlu0.b32.cont [12/16] 0, 128
    %227 = vxpose.xlu0.b32.cont [13/16] 0, 128
    %228 = vxpose.xlu0.b32.cont [14/16] 0, 128
    %229 = vxpose.xlu0.b32.cont [15/16] 0, 128
    %230 = vxpose.xlu0.b32.end [16/16] 0, 128
    %v231 = vpop.trf.xlu0
    %v232 = vpop.trf.xlu0
    %v233 = vpop.trf.xlu0
    %v234 = vpop.trf.xlu0
    %v235 = vpop.trf.xlu0
    %v236 = vpop.trf.xlu0
    %v237 = vpop.trf.xlu0
    %v238 = vpop.trf.xlu0
    %v239 = vpop.trf.xlu0
    %v240 = vpop.trf.xlu0
    %v241 = vpop.trf.xlu0
    %v242 = vpop.trf.xlu0
    %v243 = vpop.trf.xlu0
    %v244 = vpop.trf.xlu0
    %v245 = vpop.trf.xlu0
    %v246 = vpop.trf.xlu0
    %247 = vst [vmem:[#allocation6] sm:$0x1] %v231
    %s249 = ssub.s32 2, 1
    %v250 = vld [vmem:[#allocation4] sm:%s249]
    %s252 = ssub.s32 2, 1
    %253 = vst [vmem:[#allocation5] sm:%s252] %v250
    %s255 = ssub.s32 2, 1
    %v256 = vld [vmem:[#allocation6] sm:%s255]
    %s258 = ssub.s32 2, 1
    %259 = vst [vmem:[#allocation7] sm:%s258] %v256
    // Predicated region
    $region16: #{custom-call.11} parent=1 // pred_check
      _
    $region17: #{custom-call.11} parent=1 // pred_check_branch
      %261 = sbr.rel (0) target = $region19
    $region18: #{custom-call.11} parent=1 // pred_region
      %p263 = scmp.gt.s32.totalorder 2, 0
      // Predicated region
      $region20: #{custom-call.11} parent=18 // pred_check
        %p264 = pneg %p263
      $region21: #{custom-call.11} parent=18 // pred_check_branch
        %266 = sbr.rel (%p264) target = $region23
      $region22: #{custom-call.11} parent=18 // pred_region
        %s267 = ssub.s32 2, 1
        %s268 = smul.u32 %s267, 8
        %s269 = scalar_lea.vmem [#allocation3], %s268
        %v270 = vld [vmem:[#allocation3] sm:$0xff]
        // While loop
        $region24: #{custom-call.11} parent=22 // loop_pre_header
          _
        $region25: #{custom-call.11} parent=22 // loop_header
          %s271 = sphi [#allocation3], %s293
          %s272 = sphi %s1, %s294
          %v273 = vphi %v270, %v295
          %s274 = ssub.s32 %s269, 64
          %p275 = scmp.gt.s32.totalorder %s271, %s274
        $region26: #{custom-call.11} parent=22 // loop_header_branch
          %277 = sbr.rel (%p275) target = $region30
        $region27: #{custom-call.11} parent=22 // loop_body
          %278 = vst [vmem:[%s272] sm:$0xff] %v273
          %v279 = vld [vmem:[%s271 + $0x8] sm:$0xff]
          %280 = vst [vmem:[%s272 + $0x8] sm:$0xff] %v279
          %v281 = vld [vmem:[%s271 + $0x10] sm:$0xff]
          %282 = vst [vmem:[%s272 + $0x10] sm:$0xff] %v281
          %v283 = vld [vmem:[%s271 + $0x18] sm:$0xff]
          %284 = vst [vmem:[%s272 + $0x18] sm:$0xff] %v283
          %v285 = vld [vmem:[%s271 + $0x20] sm:$0xff]
          %286 = vst [vmem:[%s272 + $0x20] sm:$0xff] %v285
          %v287 = vld [vmem:[%s271 + $0x28] sm:$0xff]
          %288 = vst [vmem:[%s272 + $0x28] sm:$0xff] %v287
          %v289 = vld [vmem:[%s271 + $0x30] sm:$0xff]
          %290 = vst [vmem:[%s272 + $0x30] sm:$0xff] %v289
          %v291 = vld [vmem:[%s271 + $0x38] sm:$0xff]
          %292 = vst [vmem:[%s272 + $0x38] sm:$0xff] %v291
        $region28: #{custom-call.11} parent=22 // loop_footer
          %s293 = scalar_lea.vmem %s271, 64
          %s294 = scalar_lea.vmem %s272, 64
          %v295 = vld [vmem:[%s271 + $0x40] sm:$0xff]
        $region29: #{custom-call.11} parent=22 // loop_footer_branch
          %296 = sbr.rel target = $region25
        $region30: #{custom-call.11} parent=22 // loop_exit
          _
        // While loop
        $region31: #{custom-call.11} parent=22 // loop_pre_header
          _
        $region32: #{custom-call.11} parent=22 // loop_header
          %s297 = sphi %s271, %s305
          %s298 = sphi %s272, %s306
          %v299 = vphi %v273, %v299
          %p300 = scmp.gt.s32.totalorder %s297, %s269
        $region33: #{custom-call.11} parent=22 // loop_header_branch
          %302 = sbr.rel (%p300) target = $region37
        $region34: #{custom-call.11} parent=22 // loop_body
          %v303 = vld [vmem:[%s297] sm:$0xff]
          %304 = vst [vmem:[%s298] sm:$0xff] %v303
        $region35: #{custom-call.11} parent=22 // loop_footer
          %s305 = scalar_lea.vmem %s297, 8
          %s306 = scalar_lea.vmem %s298, 8
        $region36: #{custom-call.11} parent=22 // loop_footer_branch
          %307 = sbr.rel target = $region32
        $region37: #{custom-call.11} parent=22 // loop_exit
          _
      $region23: #{custom-call.11} parent=18 // pred_fallthru
        _
      %s309 = ssub.s32 1, 1
      %s310 = smul.u32 2, 8
      %s311 = scalar_lea.vmem %s1, %s310
      %s312 = smul.u32 2, 8
      %s313 = scalar_lea.vmem [#allocation3], %s312
      %v314 = vld [vmem:[%s313] sm:%s309]
      %315 = vst [vmem:[%s311] sm:%s309] %v314
    $region19: #{custom-call.11} parent=1 // pred_fallthru
      _
    // Predicated region
    $region38: #{custom-call.11} parent=1 // pred_check
      _
    $region39: #{custom-call.11} parent=1 // pred_check_branch
      %317 = sbr.rel (0) target = $region41
    $region40: #{custom-call.11} parent=1 // pred_region
      %319 = vsyncadd [#allocation2], 0
      %s321 = sshll.u32 [#allocation5], 4
      %s322 = int_to_ptr.vmem [resolvable:$true] %s321
      %s323 = sshll.u32 %s2, 4
      %s324 = int_to_ptr.hbm [resolvable:$true] %s323
      %326 = dma.vmem_to_hbm [thread:$0]  %s322, 16, %s324, [#allocation2]
    $region41: #{custom-call.11} parent=1 // pred_fallthru
      _
    // Predicated region
    $region42: #{custom-call.11} parent=1 // pred_check
      _
    $region43: #{custom-call.11} parent=1 // pred_check_branch
      %328 = sbr.rel (0) target = $region45
    $region44: #{custom-call.11} parent=1 // pred_region
      // Predicated region
      $region46: #{custom-call.11} parent=44 // pred_check
        _
      $region47: #{custom-call.11} parent=44 // pred_check_branch
        %330 = sbr.rel (0) target = $region49
      $region48: #{custom-call.11} parent=44 // pred_region
        %p332 = scmp.gt.s32.totalorder 0, 0
        // Predicated region
        $region50: #{custom-call.11} parent=48 // pred_check
          %p333 = pneg %p332
        $region51: #{custom-call.11} parent=48 // pred_check_branch
          %335 = sbr.rel (%p333) target = $region53
        $region52: #{custom-call.11} parent=48 // pred_region
          %s336 = ssub.s32 0, 1
          %s337 = smul.u32 %s336, 8
          %s338 = scalar_lea.vmem [#allocation7], %s337
          %v339 = vld [vmem:[#allocation7] sm:$0xff]
          // While loop
          $region54: #{custom-call.11} parent=52 // loop_pre_header
            _
          $region55: #{custom-call.11} parent=52 // loop_header
            %s340 = sphi [#allocation7], %s362
            %s341 = sphi %s3, %s363
            %v342 = vphi %v339, %v364
            %s343 = ssub.s32 %s338, 64
            %p344 = scmp.gt.s32.totalorder %s340, %s343
          $region56: #{custom-call.11} parent=52 // loop_header_branch
            %346 = sbr.rel (%p344) target = $region60
          $region57: #{custom-call.11} parent=52 // loop_body
            %347 = vst [vmem:[%s341] sm:$0xff] %v342
            %v348 = vld [vmem:[%s340 + $0x8] sm:$0xff]
            %349 = vst [vmem:[%s341 + $0x8] sm:$0xff] %v348
            %v350 = vld [vmem:[%s340 + $0x10] sm:$0xff]
            %351 = vst [vmem:[%s341 + $0x10] sm:$0xff] %v350
            %v352 = vld [vmem:[%s340 + $0x18] sm:$0xff]
            %353 = vst [vmem:[%s341 + $0x18] sm:$0xff] %v352
            %v354 = vld [vmem:[%s340 + $0x20] sm:$0xff]
            %355 = vst [vmem:[%s341 + $0x20] sm:$0xff] %v354
            %v356 = vld [vmem:[%s340 + $0x28] sm:$0xff]
            %357 = vst [vmem:[%s341 + $0x28] sm:$0xff] %v356
            %v358 = vld [vmem:[%s340 + $0x30] sm:$0xff]
            %359 = vst [vmem:[%s341 + $0x30] sm:$0xff] %v358
            %v360 = vld [vmem:[%s340 + $0x38] sm:$0xff]
            %361 = vst [vmem:[%s341 + $0x38] sm:$0xff] %v360
          $region58: #{custom-call.11} parent=52 // loop_footer
            %s362 = scalar_lea.vmem %s340, 64
            %s363 = scalar_lea.vmem %s341, 64
            %v364 = vld [vmem:[%s340 + $0x40] sm:$0xff]
          $region59: #{custom-call.11} parent=52 // loop_footer_branch
            %365 = sbr.rel target = $region55
          $region60: #{custom-call.11} parent=52 // loop_exit
            _
          // While loop
          $region61: #{custom-call.11} parent=52 // loop_pre_header
            _
          $region62: #{custom-call.11} parent=52 // loop_header
            %s366 = sphi %s340, %s374
            %s367 = sphi %s341, %s375
            %v368 = vphi %v342, %v368
            %p369 = scmp.gt.s32.totalorder %s366, %s338
          $region63: #{custom-call.11} parent=52 // loop_header_branch
            %371 = sbr.rel (%p369) target = $region67
          $region64: #{custom-call.11} parent=52 // loop_body
            %v372 = vld [vmem:[%s366] sm:$0xff]
            %373 = vst [vmem:[%s367] sm:$0xff] %v372
          $region65: #{custom-call.11} parent=52 // loop_footer
            %s374 = scalar_lea.vmem %s366, 8
            %s375 = scalar_lea.vmem %s367, 8
          $region66: #{custom-call.11} parent=52 // loop_footer_branch
            %376 = sbr.rel target = $region62
          $region67: #{custom-call.11} parent=52 // loop_exit
            _
        $region53: #{custom-call.11} parent=48 // pred_fallthru
          _
        %s378 = ssub.s32 2, 1
        %s379 = smul.u32 0, 8
        %s380 = scalar_lea.vmem %s3, %s379
        %s381 = smul.u32 0, 8
        %s382 = scalar_lea.vmem [#allocation7], %s381
        %v383 = vld [vmem:[%s382] sm:%s378]
        %384 = vst [vmem:[%s380] sm:%s378] %v383
      $region49: #{custom-call.11} parent=44 // pred_fallthru
        _
    $region45: #{custom-call.11} parent=1 // pred_fallthru
      _
    // Predicated region
    $region68: #{custom-call.11} parent=1 // pred_check
      _
    $region69: #{custom-call.11} parent=1 // pred_check_branch
      %386 = sbr.rel (0) target = $region71
    $region70: #{custom-call.11} parent=1 // pred_region
      %388 = dma.done [#allocation2], 16
    $region71: #{custom-call.11} parent=1 // pred_fallthru
      _
    // Predicated region
    $region72: #{custom-call.11} parent=1 // pred_check
      _
    $region73: #{custom-call.11} parent=1 // pred_check_branch
      %390 = sbr.rel (0) target = $region75
    $region74: #{custom-call.11} parent=1 // pred_region
      _
    $region75: #{custom-call.11} parent=1 // pred_fallthru
      _
    %391 = vsyncpa [#allocation1], 1
    %392 = vsyncpa [#allocation2], 1

// kernel: custom-call.12
$region0: #{custom-call.12}
  %s0 = inlined_call_operand.vmem [shape: f32[1,9,9], index: 0, kind: input, shape index: {}]
  %s1 = inlined_call_operand.vmem [shape: f32[1,9,9], index: 1, kind: output, shape index: {}]
  $region1: #{custom-call.12} parent=0
    #allocation0 [shape = 'u8[8192]{0}', space=vmem, size = 0x2000, scoped, tag = 'operand span for operand 0']
    #allocation1 [shape = 'u8[8192]{0}', space=vmem, size = 0x2000, scoped, tag = 'operand span for operand 1']
    #allocation2 [shape = 'f32[9,9]{1,0}', space=vmem, size = 0x2000, scoped, tag = 'rescaled input a']
    // Predicated region
    $region2: #{custom-call.12} parent=1 // pred_check
      _
    $region3: #{custom-call.12} parent=1 // pred_check_branch
      %3 = sbr.rel (0) target = $region5
    $region4: #{custom-call.12} parent=1 // pred_region
      // Predicated region
      $region6: #{custom-call.12} parent=4 // pred_check
        _
      $region7: #{custom-call.12} parent=4 // pred_check_branch
        %5 = sbr.rel (0) target = $region9
      $region8: #{custom-call.12} parent=4 // pred_region
        // Predicated region
        $region21: #{custom-call.12} parent=8 // pred_check
          _
        $region22: #{custom-call.12} parent=8 // pred_check_branch
          %23 = sbr.rel (0) target = $region24
        $region23: #{custom-call.12} parent=8 // pred_region
          loop: start=0, step=1, limit=1
          $region25: #{custom-call.12} parent=23 // loop_pre_header
            _
          $region26: #{custom-call.12} parent=23 // loop_header
            %s25 = sphi 0, %s29
            %p26 = scmp.ge.s32.totalorder %s25, 1
            %s30 = sphi %s0, %s0
            %s31 = sphi [#allocation0], [#allocation0]
          $region27: #{custom-call.12} parent=23 // loop_header_branch
            %28 = sbr.rel (%p26) target = $region31
          $region28: #{custom-call.12} parent=23 // loop_body
            %v32 = vld [vmem:[%s30] sm:$0xff]
            %33 = vst [vmem:[%s31] sm:$0xff] %v32
            %v34 = vld [vmem:[%s30 + $0x8] sm:$0xff]
            %35 = vst [vmem:[%s31 + $0x8] sm:$0xff] %v34
          $region29: #{custom-call.12} parent=23 // loop_footer
            %s29 = sadd.s32 1, %s25
          $region30: #{custom-call.12} parent=23 // loop_footer_branch
            %24 = sbr.rel target = $region26
          $region31: #{custom-call.12} parent=23 // loop_exit
            _
        $region24: #{custom-call.12} parent=8 // pred_fallthru
          _
        // Predicated region
        $region32: #{custom-call.12} parent=8 // pred_check
          _
        $region33: #{custom-call.12} parent=8 // pred_check_branch
          %37 = sbr.rel target = $region35
        $region34: #{custom-call.12} parent=8 // pred_region
          _
        $region35: #{custom-call.12} parent=8 // pred_fallthru
          _
      $region9: #{custom-call.12} parent=4 // pred_fallthru
        _
      // Predicated region
      $region10: #{custom-call.12} parent=4 // pred_check
        _
      $region11: #{custom-call.12} parent=4 // pred_check_branch
        %7 = sbr.rel target = $region13
      $region12: #{custom-call.12} parent=4 // pred_region
        %s9 = ssub.s32 256, 1
        loop: start=0, step=1, limit=1
        $region14: #{custom-call.12} parent=12 // loop_pre_header
          _
        $region15: #{custom-call.12} parent=12 // loop_header
          %s11 = sphi 0, %s15
          %p12 = scmp.ge.s32.totalorder %s11, 1
          %s16 = sphi %s0, %s0
          %s17 = sphi [#allocation0], [#allocation0]
        $region16: #{custom-call.12} parent=12 // loop_header_branch
          %14 = sbr.rel (%p12) target = $region20
        $region17: #{custom-call.12} parent=12 // loop_body
          %v18 = vld [vmem:[%s16] sm:%s9]
          %19 = vst [vmem:[%s17] sm:%s9] %v18
          %v20 = vld [vmem:[%s16 + $0x8] sm:%s9]
          %21 = vst [vmem:[%s17 + $0x8] sm:%s9] %v20
        $region18: #{custom-call.12} parent=12 // loop_footer
          %s15 = sadd.s32 1, %s11
        $region19: #{custom-call.12} parent=12 // loop_footer_branch
          %10 = sbr.rel target = $region15
        $region20: #{custom-call.12} parent=12 // loop_exit
          _
      $region13: #{custom-call.12} parent=4 // pred_fallthru
        _
    $region5: #{custom-call.12} parent=1 // pred_fallthru
      _
    %38 = vnop
    %v39 = vlaneseq
    %v40 = vand.u32 %v39, 127
    %vm41 = vcmp.lt.s32.totalorder %v40, 9
    %v42 = vlaneseq
    %v43 = vshrl.u32 %v42, 7
    %vm45 = vcmp.eq.s32.totalorder %v43, %v40
    %v46 = vld [vmem:[#allocation0] sm:$0xff]
    %v47 = vsel %vm45, %v46, 0.0
    %48 = vadd.xlane.f32.xlu0 %v47
    %v49 = vpop.xlane.xlu0 %48
    %vm50 = vcmp.le.s32.totalorder %v43, %v40
    %vm51 = vmand %vm50, %vm41
    %v52 = vsel %vm51, %v46, 0.0
    %v53 = vrcp.pop %v49
    %v54 = vmul.f32 %v49, %v53
    %v55 = vsub.f32 1.0, %v54
    %v56 = vmul.f32 %v53, %v55
    %v57 = vadd.f32 %v53, %v56
    %vm58 = vweird.f32 %v49
    %vm59 = vweird.f32 %v53
    %vm60 = vmor %vm58, %vm59
    %v61 = vsel %vm60, %v53, %v57
    %v62 = vand.u32 2147483647, %v49
    %vm63 = vcmp.eq.f32.partialorder %v62, 8.507059e+37
    %v64 = vand.u32 %v49, 2147483648
    %v65 = vor.u32 1.1754944e-38, %v64
    %v66 = vsel %vm63, %v65, %v61
    %v67 = vmul.f32 %v52, %v66
    %68 = vst [vmem:[#allocation2] sm:$0xff] %v67
    %s69 = scalar_lea.vmem [#allocation0], 8
    %s70 = scalar_lea.vmem [#allocation2], 8
    %v71 = vlaneseq
    %v72 = vshrl.u32 %v71, 7
    %v73 = vadd.s32 %v72, 8
    %vm74 = vcmp.eq.s32.totalorder %v73, %v40
    %v75 = vld [vmem:[%s69] sm:$0xff]
    %v76 = vsel %vm74, %v75, 0.0
    %77 = vadd.xlane.f32.xlu0 %v76
    %v78 = vpop.xlane.xlu0 %77
    %vm79 = vcmp.le.s32.totalorder %v73, %v40
    %vm80 = vmand %vm79, %vm41
    %v81 = vsel %vm80, %v75, 0.0
    %v82 = vrcp.pop %v78
    %v83 = vmul.f32 %v78, %v82
    %v84 = vsub.f32 1.0, %v83
    %v85 = vmul.f32 %v82, %v84
    %v86 = vadd.f32 %v82, %v85
    %vm87 = vweird.f32 %v78
    %vm88 = vweird.f32 %v82
    %vm89 = vmor %vm87, %vm88
    %v90 = vsel %vm89, %v82, %v86
    %v91 = vand.u32 2147483647, %v78
    %vm92 = vcmp.eq.f32.partialorder %v91, 8.507059e+37
    %v93 = vand.u32 %v78, 2147483648
    %v94 = vor.u32 1.1754944e-38, %v93
    %v95 = vsel %vm92, %v94, %v90
    %v96 = vmul.f32 %v81, %v95
    %97 = vst [vmem:[%s70] sm:$0xff] %v96
    %v98 = vlaneseq
    %v99 = vand.u32 %v98, 127
    %v100 = vlaneseq
    %v101 = vshrl.u32 %v100, 7
    %vm103 = vcmp.eq.s32.totalorder %v99, %v101
    %v104 = vsel %vm103, -1.0, 0.0
    %v105 = vlaneseq
    %v106 = vand.u32 %v105, 127
    %v107 = vlaneseq
    %v108 = vshrl.u32 %v107, 7
    %v109 = vadd.s32 %v108, 8
    %vm110 = vcmp.eq.s32.totalorder %v106, %v109
    %v111 = vlaneseq
    %v112 = vand.u32 %v111, 127
    %vm113 = vcmp.eq.s32.totalorder %v112, 8
    %v114 = vsel %vm113, 1.0, -1.0
    %v115 = vsel %vm110, %v114, 0.0
    %s116 = scalar_lea.vmem [#allocation2], 7
    %v117 = vld [vmem:[%s116] ss:$0 sm:$0xff]
    %v118 = vxor.u32 %v117, 2147483648
    %v119 = vlaneseq
    %v120 = vand.u32 %v119, 127
    %vm121 = vcmp.eq.s32.totalorder %v120, 7
    %v122 = vmul.f32 %v118, %v104
    %123 = vadd.xlane.f32.xlu0 %v122
    %v124 = vpop.xlane.xlu0 %123
    %v125 = vsel %vm121, %v124, %v104
    %v126 = vmul.f32 %v118, %v115
    %127 = vadd.xlane.f32.xlu0 %v126
    %v128 = vpop.xlane.xlu0 %127
    %v129 = vsel %vm121, %v128, %v115
    %s130 = scalar_lea.vmem [#allocation2], 6
    %v131 = vld [vmem:[%s130] ss:$0 sm:$0xff]
    %v132 = vxor.u32 %v131, 2147483648
    %v133 = vlaneseq
    %v134 = vand.u32 %v133, 127
    %vm135 = vcmp.eq.s32.totalorder %v134, 6
    %v136 = vmul.f32 %v132, %v125
    %137 = vadd.xlane.f32.xlu0 %v136
    %v138 = vpop.xlane.xlu0 %137
    %v139 = vsel %vm135, %v138, %v125
    %v140 = vmul.f32 %v132, %v129
    %141 = vadd.xlane.f32.xlu0 %v140
    %v142 = vpop.xlane.xlu0 %141
    %v143 = vsel %vm135, %v142, %v129
    %s144 = scalar_lea.vmem [#allocation2], 5
    %v145 = vld [vmem:[%s144] ss:$0 sm:$0xff]
    %v146 = vxor.u32 %v145, 2147483648
    %v147 = vlaneseq
    %v148 = vand.u32 %v147, 127
    %vm149 = vcmp.eq.s32.totalorder %v148, 5
    %v150 = vmul.f32 %v146, %v139
    %151 = vadd.xlane.f32.xlu0 %v150
    %v152 = vpop.xlane.xlu0 %151
    %v153 = vsel %vm149, %v152, %v139
    %v154 = vmul.f32 %v146, %v143
    %155 = vadd.xlane.f32.xlu0 %v154
    %v156 = vpop.xlane.xlu0 %155
    %v157 = vsel %vm149, %v156, %v143
    %s158 = scalar_lea.vmem [#allocation2], 4
    %v159 = vld [vmem:[%s158] ss:$0 sm:$0xff]
    %v160 = vxor.u32 %v159, 2147483648
    %v161 = vlaneseq
    %v162 = vand.u32 %v161, 127
    %vm163 = vcmp.eq.s32.totalorder %v162, 4
    %v164 = vmul.f32 %v160, %v153
    %165 = vadd.xlane.f32.xlu0 %v164
    %v166 = vpop.xlane.xlu0 %165
    %v167 = vsel %vm163, %v166, %v153
    %v168 = vmul.f32 %v160, %v157
    %169 = vadd.xlane.f32.xlu0 %v168
    %v170 = vpop.xlane.xlu0 %169
    %v171 = vsel %vm163, %v170, %v157
    %s172 = scalar_lea.vmem [#allocation2], 3
    %v173 = vld [vmem:[%s172] ss:$0 sm:$0xff]
    %v174 = vxor.u32 %v173, 2147483648
    %v175 = vlaneseq
    %v176 = vand.u32 %v175, 127
    %vm177 = vcmp.eq.s32.totalorder %v176, 3
    %v178 = vmul.f32 %v174, %v167
    %179 = vadd.xlane.f32.xlu0 %v178
    %v180 = vpop.xlane.xlu0 %179
    %v181 = vsel %vm177, %v180, %v167
    %v182 = vmul.f32 %v174, %v171
    %183 = vadd.xlane.f32.xlu0 %v182
    %v184 = vpop.xlane.xlu0 %183
    %v185 = vsel %vm177, %v184, %v171
    %s186 = scalar_lea.vmem [#allocation2], 2
    %v187 = vld [vmem:[%s186] ss:$0 sm:$0xff]
    %v188 = vxor.u32 %v187, 2147483648
    %v189 = vlaneseq
    %v190 = vand.u32 %v189, 127
    %vm191 = vcmp.eq.s32.totalorder %v190, 2
    %v192 = vmul.f32 %v188, %v181
    %193 = vadd.xlane.f32.xlu0 %v192
    %v194 = vpop.xlane.xlu0 %193
    %v195 = vsel %vm191, %v194, %v181
    %v196 = vmul.f32 %v188, %v185
    %197 = vadd.xlane.f32.xlu0 %v196
    %v198 = vpop.xlane.xlu0 %197
    %v199 = vsel %vm191, %v198, %v185
    %s200 = scalar_lea.vmem [#allocation2], 1
    %v201 = vld [vmem:[%s200] ss:$0 sm:$0xff]
    %v202 = vxor.u32 %v201, 2147483648
    %v203 = vlaneseq
    %v204 = vand.u32 %v203, 127
    %vm205 = vcmp.eq.s32.totalorder %v204, 1
    %v206 = vmul.f32 %v202, %v195
    %207 = vadd.xlane.f32.xlu0 %v206
    %v208 = vpop.xlane.xlu0 %207
    %v209 = vsel %vm205, %v208, %v195
    %v210 = vmul.f32 %v202, %v199
    %211 = vadd.xlane.f32.xlu0 %v210
    %v212 = vpop.xlane.xlu0 %211
    %v213 = vsel %vm205, %v212, %v199
    %v214 = vld [vmem:[#allocation2] ss:$0 sm:$0xff]
    %v215 = vxor.u32 %v214, 2147483648
    %v216 = vlaneseq
    %v217 = vand.u32 %v216, 127
    %vm218 = vcmp.eq.s32.totalorder %v217, 0
    %v219 = vmul.f32 %v215, %v209
    %220 = vadd.xlane.f32.xlu0 %v219
    %v221 = vpop.xlane.xlu0 %220
    %v222 = vsel %vm218, %v221, %v209
    %v223 = vmul.f32 %v215, %v213
    %224 = vadd.xlane.f32.xlu0 %v223
    %v225 = vpop.xlane.xlu0 %224
    %v226 = vsel %vm218, %v225, %v213
    %v227 = vrcp.pop %v49
    %v228 = vmul.f32 %v49, %v227
    %v229 = vsub.f32 1.0, %v228
    %v230 = vmul.f32 %v227, %v229
    %v231 = vadd.f32 %v227, %v230
    %vm232 = vweird.f32 %v49
    %vm233 = vweird.f32 %v227
    %vm234 = vmor %vm232, %vm233
    %v235 = vsel %vm234, %v227, %v231
    %v236 = vand.u32 2147483647, %v49
    %vm237 = vcmp.eq.f32.partialorder %v236, 8.507059e+37
    %v238 = vand.u32 %v49, 2147483648
    %v239 = vor.u32 1.1754944e-38, %v238
    %v240 = vsel %vm237, %v239, %v235
    %v241 = vmul.f32 %v222, %v240
    %vm242 = vweird.f32 %v49
    %v243 = vsel %vm242, %v222, %v241
    %244 = vst [vmem:[#allocation1] sm:$0xff] %v243
    %v245 = vrcp.pop %v78
    %v246 = vmul.f32 %v78, %v245
    %v247 = vsub.f32 1.0, %v246
    %v248 = vmul.f32 %v245, %v247
    %v249 = vadd.f32 %v245, %v248
    %vm250 = vweird.f32 %v78
    %vm251 = vweird.f32 %v245
    %vm252 = vmor %vm250, %vm251
    %v253 = vsel %vm252, %v245, %v249
    %v254 = vand.u32 2147483647, %v78
    %vm255 = vcmp.eq.f32.partialorder %v254, 8.507059e+37
    %v256 = vand.u32 %v78, 2147483648
    %v257 = vor.u32 1.1754944e-38, %v256
    %v258 = vsel %vm255, %v257, %v253
    %v259 = vmul.f32 %v226, %v258
    %vm260 = vweird.f32 %v78
    %v261 = vsel %vm260, %v226, %v259
    %s262 = scalar_lea.vmem [#allocation1], 8
    %263 = vst [vmem:[%s262] sm:$0xff] %v261
    // Predicated region
    $region36: #{custom-call.12} parent=1 // pred_check
      _
    $region37: #{custom-call.12} parent=1 // pred_check_branch
      %265 = sbr.rel (0) target = $region39
    $region38: #{custom-call.12} parent=1 // pred_region
      // Predicated region
      $region40: #{custom-call.12} parent=38 // pred_check
        _
      $region41: #{custom-call.12} parent=38 // pred_check_branch
        %267 = sbr.rel (0) target = $region43
      $region42: #{custom-call.12} parent=38 // pred_region
        // Predicated region
        $region55: #{custom-call.12} parent=42 // pred_check
          _
        $region56: #{custom-call.12} parent=42 // pred_check_branch
          %285 = sbr.rel (0) target = $region58
        $region57: #{custom-call.12} parent=42 // pred_region
          loop: start=0, step=1, limit=1
          $region59: #{custom-call.12} parent=57 // loop_pre_header
            _
          $region60: #{custom-call.12} parent=57 // loop_header
            %s287 = sphi 0, %s291
            %p288 = scmp.ge.s32.totalorder %s287, 1
            %s292 = sphi [#allocation1], [#allocation1]
            %s293 = sphi %s1, %s1
          $region61: #{custom-call.12} parent=57 // loop_header_branch
            %290 = sbr.rel (%p288) target = $region65
          $region62: #{custom-call.12} parent=57 // loop_body
            %v294 = vld [vmem:[%s292] sm:$0xff]
            %295 = vst [vmem:[%s293] sm:$0xff] %v294
            %v296 = vld [vmem:[%s292 + $0x8] sm:$0xff]
            %297 = vst [vmem:[%s293 + $0x8] sm:$0xff] %v296
          $region63: #{custom-call.12} parent=57 // loop_footer
            %s291 = sadd.s32 1, %s287
          $region64: #{custom-call.12} parent=57 // loop_footer_branch
            %286 = sbr.rel target = $region60
          $region65: #{custom-call.12} parent=57 // loop_exit
            _
        $region58: #{custom-call.12} parent=42 // pred_fallthru
          _
        // Predicated region
        $region66: #{custom-call.12} parent=42 // pred_check
          _
        $region67: #{custom-call.12} parent=42 // pred_check_branch
          %299 = sbr.rel target = $region69
        $region68: #{custom-call.12} parent=42 // pred_region
          _
        $region69: #{custom-call.12} parent=42 // pred_fallthru
          _
      $region43: #{custom-call.12} parent=38 // pred_fallthru
        _
      // Predicated region
      $region44: #{custom-call.12} parent=38 // pred_check
        _
      $region45: #{custom-call.12} parent=38 // pred_check_branch
        %269 = sbr.rel target = $region47
      $region46: #{custom-call.12} parent=38 // pred_region
        %s271 = ssub.s32 256, 1
        loop: start=0, step=1, limit=1
        $region48: #{custom-call.12} parent=46 // loop_pre_header
          _
        $region49: #{custom-call.12} parent=46 // loop_header
          %s273 = sphi 0, %s277
          %p274 = scmp.ge.s32.totalorder %s273, 1
          %s278 = sphi [#allocation1], [#allocation1]
          %s279 = sphi %s1, %s1
        $region50: #{custom-call.12} parent=46 // loop_header_branch
          %276 = sbr.rel (%p274) target = $region54
        $region51: #{custom-call.12} parent=46 // loop_body
          %v280 = vld [vmem:[%s278] sm:%s271]
          %281 = vst [vmem:[%s279] sm:%s271] %v280
          %v282 = vld [vmem:[%s278 + $0x8] sm:%s271]
          %283 = vst [vmem:[%s279 + $0x8] sm:%s271] %v282
        $region52: #{custom-call.12} parent=46 // loop_footer
          %s277 = sadd.s32 1, %s273
        $region53: #{custom-call.12} parent=46 // loop_footer_branch
          %272 = sbr.rel target = $region49
        $region54: #{custom-call.12} parent=46 // loop_exit
          _
      $region47: #{custom-call.12} parent=38 // pred_fallthru
        _
    $region39: #{custom-call.12} parent=1 // pred_fallthru
      _
    %300 = vnop

// kernel: custom-call.13
$region0: #{custom-call.13}
  %s0 = inlined_call_operand.vmem [shape: f32[1,9,9], index: 0, kind: input, shape index: {}]
  %s1 = inlined_call_operand.vmem [shape: f32[1,9,9], index: 1, kind: output, shape index: {}]
  $region1: #{custom-call.13} parent=0
    #allocation0 [shape = 'u8[8192]{0}', space=vmem, size = 0x2000, scoped, tag = 'operand span for operand 0']
    #allocation1 [shape = 'u8[8192]{0}', space=vmem, size = 0x2000, scoped, tag = 'operand span for operand 1']
    #allocation2 [shape = 'f32[9,9]{1,0}', space=vmem, size = 0x2000, scoped, tag = 'rescaled input a']
    // Predicated region
    $region2: #{custom-call.13} parent=1 // pred_check
      _
    $region3: #{custom-call.13} parent=1 // pred_check_branch
      %3 = sbr.rel (0) target = $region5
    $region4: #{custom-call.13} parent=1 // pred_region
      // Predicated region
      $region6: #{custom-call.13} parent=4 // pred_check
        _
      $region7: #{custom-call.13} parent=4 // pred_check_branch
        %5 = sbr.rel (0) target = $region9
      $region8: #{custom-call.13} parent=4 // pred_region
        // Predicated region
        $region21: #{custom-call.13} parent=8 // pred_check
          _
        $region22: #{custom-call.13} parent=8 // pred_check_branch
          %23 = sbr.rel (0) target = $region24
        $region23: #{custom-call.13} parent=8 // pred_region
          loop: start=0, step=1, limit=1
          $region25: #{custom-call.13} parent=23 // loop_pre_header
            _
          $region26: #{custom-call.13} parent=23 // loop_header
            %s25 = sphi 0, %s29
            %p26 = scmp.ge.s32.totalorder %s25, 1
            %s30 = sphi %s0, %s0
            %s31 = sphi [#allocation0], [#allocation0]
          $region27: #{custom-call.13} parent=23 // loop_header_branch
            %28 = sbr.rel (%p26) target = $region31
          $region28: #{custom-call.13} parent=23 // loop_body
            %v32 = vld [vmem:[%s30] sm:$0xff]
            %33 = vst [vmem:[%s31] sm:$0xff] %v32
            %v34 = vld [vmem:[%s30 + $0x8] sm:$0xff]
            %35 = vst [vmem:[%s31 + $0x8] sm:$0xff] %v34
          $region29: #{custom-call.13} parent=23 // loop_footer
            %s29 = sadd.s32 1, %s25
          $region30: #{custom-call.13} parent=23 // loop_footer_branch
            %24 = sbr.rel target = $region26
          $region31: #{custom-call.13} parent=23 // loop_exit
            _
        $region24: #{custom-call.13} parent=8 // pred_fallthru
          _
        // Predicated region
        $region32: #{custom-call.13} parent=8 // pred_check
          _
        $region33: #{custom-call.13} parent=8 // pred_check_branch
          %37 = sbr.rel target = $region35
        $region34: #{custom-call.13} parent=8 // pred_region
          _
        $region35: #{custom-call.13} parent=8 // pred_fallthru
          _
      $region9: #{custom-call.13} parent=4 // pred_fallthru
        _
      // Predicated region
      $region10: #{custom-call.13} parent=4 // pred_check
        _
      $region11: #{custom-call.13} parent=4 // pred_check_branch
        %7 = sbr.rel target = $region13
      $region12: #{custom-call.13} parent=4 // pred_region
        %s9 = ssub.s32 256, 1
        loop: start=0, step=1, limit=1
        $region14: #{custom-call.13} parent=12 // loop_pre_header
          _
        $region15: #{custom-call.13} parent=12 // loop_header
          %s11 = sphi 0, %s15
          %p12 = scmp.ge.s32.totalorder %s11, 1
          %s16 = sphi %s0, %s0
          %s17 = sphi [#allocation0], [#allocation0]
        $region16: #{custom-call.13} parent=12 // loop_header_branch
          %14 = sbr.rel (%p12) target = $region20
        $region17: #{custom-call.13} parent=12 // loop_body
          %v18 = vld [vmem:[%s16] sm:%s9]
          %19 = vst [vmem:[%s17] sm:%s9] %v18
          %v20 = vld [vmem:[%s16 + $0x8] sm:%s9]
          %21 = vst [vmem:[%s17 + $0x8] sm:%s9] %v20
        $region18: #{custom-call.13} parent=12 // loop_footer
          %s15 = sadd.s32 1, %s11
        $region19: #{custom-call.13} parent=12 // loop_footer_branch
          %10 = sbr.rel target = $region15
        $region20: #{custom-call.13} parent=12 // loop_exit
          _
      $region13: #{custom-call.13} parent=4 // pred_fallthru
        _
    $region5: #{custom-call.13} parent=1 // pred_fallthru
      _
    %38 = vnop
    %v39 = vlaneseq
    %v40 = vand.u32 %v39, 127
    %vm41 = vcmp.lt.s32.totalorder %v40, 9
    %v42 = vlaneseq
    %v43 = vshrl.u32 %v42, 7
    %vm45 = vcmp.eq.s32.totalorder %v43, %v40
    %v46 = vld [vmem:[#allocation0] sm:$0xff]
    %v47 = vsel %vm45, %v46, 0.0
    %48 = vadd.xlane.f32.xlu0 %v47
    %v49 = vpop.xlane.xlu0 %48
    %vm50 = vcmp.ge.s32.totalorder %v43, %v40
    %vm51 = vmand %vm50, %vm41
    %v52 = vsel %vm51, %v46, 0.0
    %v53 = vrcp.pop %v49
    %v54 = vmul.f32 %v49, %v53
    %v55 = vsub.f32 1.0, %v54
    %v56 = vmul.f32 %v53, %v55
    %v57 = vadd.f32 %v53, %v56
    %vm58 = vweird.f32 %v49
    %vm59 = vweird.f32 %v53
    %vm60 = vmor %vm58, %vm59
    %v61 = vsel %vm60, %v53, %v57
    %v62 = vand.u32 2147483647, %v49
    %vm63 = vcmp.eq.f32.partialorder %v62, 8.507059e+37
    %v64 = vand.u32 %v49, 2147483648
    %v65 = vor.u32 1.1754944e-38, %v64
    %v66 = vsel %vm63, %v65, %v61
    %v67 = vmul.f32 %v52, %v66
    %68 = vst [vmem:[#allocation2] sm:$0xff] %v67
    %s69 = scalar_lea.vmem [#allocation0], 8
    %s70 = scalar_lea.vmem [#allocation2], 8
    %v71 = vlaneseq
    %v72 = vshrl.u32 %v71, 7
    %v73 = vadd.s32 %v72, 8
    %vm74 = vcmp.eq.s32.totalorder %v73, %v40
    %v75 = vld [vmem:[%s69] sm:$0xff]
    %v76 = vsel %vm74, %v75, 0.0
    %77 = vadd.xlane.f32.xlu0 %v76
    %v78 = vpop.xlane.xlu0 %77
    %vm79 = vcmp.ge.s32.totalorder %v73, %v40
    %vm80 = vmand %vm79, %vm41
    %v81 = vsel %vm80, %v75, 0.0
    %v82 = vrcp.pop %v78
    %v83 = vmul.f32 %v78, %v82
    %v84 = vsub.f32 1.0, %v83
    %v85 = vmul.f32 %v82, %v84
    %v86 = vadd.f32 %v82, %v85
    %vm87 = vweird.f32 %v78
    %vm88 = vweird.f32 %v82
    %vm89 = vmor %vm87, %vm88
    %v90 = vsel %vm89, %v82, %v86
    %v91 = vand.u32 2147483647, %v78
    %vm92 = vcmp.eq.f32.partialorder %v91, 8.507059e+37
    %v93 = vand.u32 %v78, 2147483648
    %v94 = vor.u32 1.1754944e-38, %v93
    %v95 = vsel %vm92, %v94, %v90
    %v96 = vmul.f32 %v81, %v95
    %97 = vst [vmem:[%s70] sm:$0xff] %v96
    %v98 = vlaneseq
    %v99 = vand.u32 %v98, 127
    %v100 = vlaneseq
    %v101 = vshrl.u32 %v100, 7
    %vm103 = vcmp.eq.s32.totalorder %v99, %v101
    %v104 = vlaneseq
    %v105 = vand.u32 %v104, 127
    %vm106 = vcmp.eq.s32.totalorder %v105, 0
    %v107 = vsel %vm106, 1.0, -1.0
    %v108 = vsel %vm103, %v107, 0.0
    %v109 = vlaneseq
    %v110 = vand.u32 %v109, 127
    %v111 = vlaneseq
    %v112 = vshrl.u32 %v111, 7
    %v113 = vadd.s32 %v112, 8
    %vm114 = vcmp.eq.s32.totalorder %v110, %v113
    %v115 = vsel %vm114, -1.0, 0.0
    %s116 = scalar_lea.vmem [#allocation2], 1
    %v117 = vld [vmem:[%s116] ss:$0 sm:$0xff]
    %v118 = vxor.u32 %v117, 2147483648
    %v119 = vlaneseq
    %v120 = vand.u32 %v119, 127
    %vm121 = vcmp.eq.s32.totalorder %v120, 1
    %v122 = vmul.f32 %v118, %v108
    %123 = vadd.xlane.f32.xlu0 %v122
    %v124 = vpop.xlane.xlu0 %123
    %v125 = vsel %vm121, %v124, %v108
    %s126 = scalar_lea.vmem [#allocation2], 2
    %v127 = vld [vmem:[%s126] ss:$0 sm:$0xff]
    %v128 = vxor.u32 %v127, 2147483648
    %v129 = vlaneseq
    %v130 = vand.u32 %v129, 127
    %vm131 = vcmp.eq.s32.totalorder %v130, 2
    %v132 = vmul.f32 %v128, %v125
    %133 = vadd.xlane.f32.xlu0 %v132
    %v134 = vpop.xlane.xlu0 %133
    %v135 = vsel %vm131, %v134, %v125
    %s136 = scalar_lea.vmem [#allocation2], 3
    %v137 = vld [vmem:[%s136] ss:$0 sm:$0xff]
    %v138 = vxor.u32 %v137, 2147483648
    %v139 = vlaneseq
    %v140 = vand.u32 %v139, 127
    %vm141 = vcmp.eq.s32.totalorder %v140, 3
    %v142 = vmul.f32 %v138, %v135
    %143 = vadd.xlane.f32.xlu0 %v142
    %v144 = vpop.xlane.xlu0 %143
    %v145 = vsel %vm141, %v144, %v135
    %s146 = scalar_lea.vmem [#allocation2], 4
    %v147 = vld [vmem:[%s146] ss:$0 sm:$0xff]
    %v148 = vxor.u32 %v147, 2147483648
    %v149 = vlaneseq
    %v150 = vand.u32 %v149, 127
    %vm151 = vcmp.eq.s32.totalorder %v150, 4
    %v152 = vmul.f32 %v148, %v145
    %153 = vadd.xlane.f32.xlu0 %v152
    %v154 = vpop.xlane.xlu0 %153
    %v155 = vsel %vm151, %v154, %v145
    %s156 = scalar_lea.vmem [#allocation2], 5
    %v157 = vld [vmem:[%s156] ss:$0 sm:$0xff]
    %v158 = vxor.u32 %v157, 2147483648
    %v159 = vlaneseq
    %v160 = vand.u32 %v159, 127
    %vm161 = vcmp.eq.s32.totalorder %v160, 5
    %v162 = vmul.f32 %v158, %v155
    %163 = vadd.xlane.f32.xlu0 %v162
    %v164 = vpop.xlane.xlu0 %163
    %v165 = vsel %vm161, %v164, %v155
    %s166 = scalar_lea.vmem [#allocation2], 6
    %v167 = vld [vmem:[%s166] ss:$0 sm:$0xff]
    %v168 = vxor.u32 %v167, 2147483648
    %v169 = vlaneseq
    %v170 = vand.u32 %v169, 127
    %vm171 = vcmp.eq.s32.totalorder %v170, 6
    %v172 = vmul.f32 %v168, %v165
    %173 = vadd.xlane.f32.xlu0 %v172
    %v174 = vpop.xlane.xlu0 %173
    %v175 = vsel %vm171, %v174, %v165
    %s176 = scalar_lea.vmem [#allocation2], 7
    %v177 = vld [vmem:[%s176] ss:$0 sm:$0xff]
    %v178 = vxor.u32 %v177, 2147483648
    %v179 = vlaneseq
    %v180 = vand.u32 %v179, 127
    %vm181 = vcmp.eq.s32.totalorder %v180, 7
    %v182 = vmul.f32 %v178, %v175
    %183 = vadd.xlane.f32.xlu0 %v182
    %v184 = vpop.xlane.xlu0 %183
    %v185 = vsel %vm181, %v184, %v175
    %s186 = scalar_lea.vmem [#allocation2], 8
    %v187 = vld [vmem:[%s186] ss:$0 sm:$0xff]
    %v188 = vxor.u32 %v187, 2147483648
    %v189 = vlaneseq
    %v190 = vand.u32 %v189, 127
    %vm191 = vcmp.eq.s32.totalorder %v190, 8
    %v192 = vmul.f32 %v188, %v185
    %193 = vadd.xlane.f32.xlu0 %v192
    %v194 = vpop.xlane.xlu0 %193
    %v195 = vsel %vm191, %v194, %v185
    %v196 = vmul.f32 %v188, %v115
    %197 = vadd.xlane.f32.xlu0 %v196
    %v198 = vpop.xlane.xlu0 %197
    %v199 = vsel %vm191, %v198, %v115
    %v200 = vrcp.pop %v49
    %v201 = vmul.f32 %v49, %v200
    %v202 = vsub.f32 1.0, %v201
    %v203 = vmul.f32 %v200, %v202
    %v204 = vadd.f32 %v200, %v203
    %vm205 = vweird.f32 %v49
    %vm206 = vweird.f32 %v200
    %vm207 = vmor %vm205, %vm206
    %v208 = vsel %vm207, %v200, %v204
    %v209 = vand.u32 2147483647, %v49
    %vm210 = vcmp.eq.f32.partialorder %v209, 8.507059e+37
    %v211 = vand.u32 %v49, 2147483648
    %v212 = vor.u32 1.1754944e-38, %v211
    %v213 = vsel %vm210, %v212, %v208
    %v214 = vmul.f32 %v195, %v213
    %vm215 = vweird.f32 %v49
    %v216 = vsel %vm215, %v195, %v214
    %217 = vst [vmem:[#allocation1] sm:$0xff] %v216
    %v218 = vrcp.pop %v78
    %v219 = vmul.f32 %v78, %v218
    %v220 = vsub.f32 1.0, %v219
    %v221 = vmul.f32 %v218, %v220
    %v222 = vadd.f32 %v218, %v221
    %vm223 = vweird.f32 %v78
    %vm224 = vweird.f32 %v218
    %vm225 = vmor %vm223, %vm224
    %v226 = vsel %vm225, %v218, %v222
    %v227 = vand.u32 2147483647, %v78
    %vm228 = vcmp.eq.f32.partialorder %v227, 8.507059e+37
    %v229 = vand.u32 %v78, 2147483648
    %v230 = vor.u32 1.1754944e-38, %v229
    %v231 = vsel %vm228, %v230, %v226
    %v232 = vmul.f32 %v199, %v231
    %vm233 = vweird.f32 %v78
    %v234 = vsel %vm233, %v199, %v232
    %s235 = scalar_lea.vmem [#allocation1], 8
    %236 = vst [vmem:[%s235] sm:$0xff] %v234
    // Predicated region
    $region36: #{custom-call.13} parent=1 // pred_check
      _
    $region37: #{custom-call.13} parent=1 // pred_check_branch
      %238 = sbr.rel (0) target = $region39
    $region38: #{custom-call.13} parent=1 // pred_region
      // Predicated region
      $region40: #{custom-call.13} parent=38 // pred_check
        _
      $region41: #{custom-call.13} parent=38 // pred_check_branch
        %240 = sbr.rel (0) target = $region43
      $region42: #{custom-call.13} parent=38 // pred_region
        // Predicated region
        $region55: #{custom-call.13} parent=42 // pred_check
          _
        $region56: #{custom-call.13} parent=42 // pred_check_branch
          %258 = sbr.rel (0) target = $region58
        $region57: #{custom-call.13} parent=42 // pred_region
          loop: start=0, step=1, limit=1
          $region59: #{custom-call.13} parent=57 // loop_pre_header
            _
          $region60: #{custom-call.13} parent=57 // loop_header
            %s260 = sphi 0, %s264
            %p261 = scmp.ge.s32.totalorder %s260, 1
            %s265 = sphi [#allocation1], [#allocation1]
            %s266 = sphi %s1, %s1
          $region61: #{custom-call.13} parent=57 // loop_header_branch
            %263 = sbr.rel (%p261) target = $region65
          $region62: #{custom-call.13} parent=57 // loop_body
            %v267 = vld [vmem:[%s265] sm:$0xff]
            %268 = vst [vmem:[%s266] sm:$0xff] %v267
            %v269 = vld [vmem:[%s265 + $0x8] sm:$0xff]
            %270 = vst [vmem:[%s266 + $0x8] sm:$0xff] %v269
          $region63: #{custom-call.13} parent=57 // loop_footer
            %s264 = sadd.s32 1, %s260
          $region64: #{custom-call.13} parent=57 // loop_footer_branch
            %259 = sbr.rel target = $region60
          $region65: #{custom-call.13} parent=57 // loop_exit
            _
        $region58: #{custom-call.13} parent=42 // pred_fallthru
          _
        // Predicated region
        $region66: #{custom-call.13} parent=42 // pred_check
          _
        $region67: #{custom-call.13} parent=42 // pred_check_branch
          %272 = sbr.rel target = $region69
        $region68: #{custom-call.13} parent=42 // pred_region
          _
        $region69: #{custom-call.13} parent=42 // pred_fallthru
          _
      $region43: #{custom-call.13} parent=38 // pred_fallthru
        _
      // Predicated region
      $region44: #{custom-call.13} parent=38 // pred_check
        _
      $region45: #{custom-call.13} parent=38 // pred_check_branch
        %242 = sbr.rel target = $region47
      $region46: #{custom-call.13} parent=38 // pred_region
        %s244 = ssub.s32 256, 1
        loop: start=0, step=1, limit=1
        $region48: #{custom-call.13} parent=46 // loop_pre_header
          _
        $region49: #{custom-call.13} parent=46 // loop_header
          %s246 = sphi 0, %s250
          %p247 = scmp.ge.s32.totalorder %s246, 1
          %s251 = sphi [#allocation1], [#allocation1]
          %s252 = sphi %s1, %s1
        $region50: #{custom-call.13} parent=46 // loop_header_branch
          %249 = sbr.rel (%p247) target = $region54
        $region51: #{custom-call.13} parent=46 // loop_body
          %v253 = vld [vmem:[%s251] sm:%s244]
          %254 = vst [vmem:[%s252] sm:%s244] %v253
          %v255 = vld [vmem:[%s251 + $0x8] sm:%s244]
          %256 = vst [vmem:[%s252 + $0x8] sm:%s244] %v255
        $region52: #{custom-call.13} parent=46 // loop_footer
          %s250 = sadd.s32 1, %s246
        $region53: #{custom-call.13} parent=46 // loop_footer_branch
          %245 = sbr.rel target = $region49
        $region54: #{custom-call.13} parent=46 // loop_exit
          _
      $region47: #{custom-call.13} parent=38 // pred_fallthru
        _
    $region39: #{custom-call.13} parent=1 // pred_fallthru
      _
    %273 = vnop

// kernel: a_call__.1
$region0: #{a_call__.1}
  #allocation0 [shape = 'u32[]', space=smem, size = 0x4, offset = 0x4, fixed_abs, tag = 'smem constant byte address 0x4 - core index']
  #allocation1 [shape = 'u32[72,128]{1,0:T(1,128)}', space=vmem, size = 0x9000, scoped, tag = 'internal scratch']
  #allocation2 [shape = 'bf16[16,512]{1,0:T(8,128)(2,1)}', space=vmem, size = 0x4000, scoped, tag = 'scratch operand']
  #allocation3 [shape = 'bf16[400,384]{1,0:T(8,128)(2,1)}', space=vmem, size = 0x4b000, scoped, tag = 'scratch operand']
  %s0 = inlined_call_operand.vmem [shape: bf16[16,400], index: 0, kind: input, shape index: {}]
  %s1 = inlined_call_operand.vmem [shape: bf16[16,896], index: 1, kind: input, shape index: {}, may-alias: {1,2}]
  %s2 = inlined_call_operand.vmem [shape: bf16[16,896], index: 2, kind: input, shape index: {}, may-alias: {1,2}]
  %s3 = inlined_call_operand.vmem [shape: f32[16,768], index: 3, kind: output, shape index: {}]
  %s4 = sld [smem:[#allocation0]]
  $region171: #{a_call__.1} parent=0
    _
  %s6 = ssub.s32 1, %s4
  %s7 = scalar_select 0, %s6, %s4
  $region1: #{a_call__.1} parent=0
    #allocation4 [shape = 'u8[24576]{0}', space=vmem, size = 0x6000, scoped, tag = 'input window, operand 1']
    #allocation5 [shape = 'u8[8192]{0}', space=vmem, size = 0x2000, scoped, tag = 'input window, operand 2']
    #allocation6 [shape = 'u8[49152]{0}', space=vmem, size = 0xc000, scoped, tag = 'output window, operand 0']
    loop: start=0, step=1, limit=4
    $region2: #{a_call__.1} parent=1 // loop_pre_header
      _
    $region3: #{a_call__.1} parent=1 // loop_header
      %s9 = sphi 0, %s13
      %p10 = scmp.ge.s32.totalorder %s9, 4
      %s17 = sphi 0, %s17
      %s19 = sphi 0, %s17
      %s20 = sphi 0, %s19
      %s34 = sphi 0, %s20
      %s40 = sphi 0, %s42
      %s43 = sphi 0, %s40
      %s44 = sphi 0, %s43
      %s60 = sphi 0, %s44
      %s70 = sphi 0, %s72
      %s73 = sphi 0, %s70
      %s74 = sphi 0, %s73
      %s90 = sphi 0, %s74
      %s96 = sphi 0, %s98
      %s99 = sphi 0, %s96
      %s100 = sphi 0, %s99
      %s116 = sphi 0, %s100
    $region4: #{a_call__.1} parent=1 // loop_header_branch
      %12 = sbr.rel (%p10) target = $region8
    $region5: #{a_call__.1} parent=1 // loop_body
      %s14 = ssub.s32 %s9, 1
      %s15 = ssub.s32 %s9, 2
      %s16 = sadd.s32 %s9, 1
      %s18 = sadd.s32 %s17, 1
      %p21 = scmp.eq.s32.totalorder %s9, 1
      %p22 = scmp.ne.s32.totalorder %s17, %s19
      %p23 = scmp.eq.s32.totalorder %s9, 0
      %p24 = por %p22, %p23
      %p25 = scmp.ne.s32.totalorder %s17, %s19
      %p26 = scmp.eq.s32.totalorder %s14, 1
      %p27 = por %p25, %p26
      %p28 = scmp.ne.s32.totalorder %s19, %s20
      %p29 = scmp.eq.s32.totalorder %s14, 0
      %p30 = por %p28, %p29
      %p31 = scmp.ne.s32.totalorder %s19, %s20
      %p32 = scmp.eq.s32.totalorder %s15, 1
      %p33 = por %p31, %p32
      %p35 = scmp.ne.s32.totalorder %s20, %s34
      %p36 = scmp.eq.s32.totalorder %s15, 0
      %p37 = por %p35, %p36
      %s38 = ssub.s32 %s9, %s16
      %p39 = scmp.eq.s32.totalorder %s38, 0
      %s41 = sadd.s32 %s40, 1
      %s42 = scalar_select %p39, %s40, %s41
      %p45 = pneg %p39
      %p46 = scmp.eq.s32.totalorder %s9, 1
      %p47 = por %p45, %p46
      %p48 = scmp.ne.s32.totalorder %s40, %s43
      %p49 = scmp.eq.s32.totalorder %s9, 0
      %p50 = por %p48, %p49
      %p51 = scmp.ne.s32.totalorder %s40, %s43
      %p52 = scmp.eq.s32.totalorder %s14, 1
      %p53 = por %p51, %p52
      %p54 = scmp.ne.s32.totalorder %s43, %s44
      %p55 = scmp.eq.s32.totalorder %s14, 0
      %p56 = por %p54, %p55
      %p57 = scmp.ne.s32.totalorder %s43, %s44
      %p58 = scmp.eq.s32.totalorder %s15, 1
      %p59 = por %p57, %p58
      %p61 = scmp.ne.s32.totalorder %s44, %s60
      %p62 = scmp.eq.s32.totalorder %s15, 0
      %p63 = por %p61, %p62
      %s64 = sadd.s32 %s9, 1
      %s65 = smul.u32 %s64, 3
      %s66 = sadd.s32 %s16, 1
      %s67 = smul.u32 %s66, 3
      %s68 = ssub.s32 %s65, %s67
      %p69 = scmp.eq.s32.totalorder %s68, 0
      %s71 = sadd.s32 %s70, 1
      %s72 = scalar_select %p69, %s70, %s71
      %p75 = pneg %p69
      %p76 = scmp.eq.s32.totalorder %s9, 1
      %p77 = por %p75, %p76
      %p78 = scmp.ne.s32.totalorder %s70, %s73
      %p79 = scmp.eq.s32.totalorder %s9, 0
      %p80 = por %p78, %p79
      %p81 = scmp.ne.s32.totalorder %s70, %s73
      %p82 = scmp.eq.s32.totalorder %s14, 1
      %p83 = por %p81, %p82
      %p84 = scmp.ne.s32.totalorder %s73, %s74
      %p85 = scmp.eq.s32.totalorder %s14, 0
      %p86 = por %p84, %p85
      %p87 = scmp.ne.s32.totalorder %s73, %s74
      %p88 = scmp.eq.s32.totalorder %s15, 1
      %p89 = por %p87, %p88
      %p91 = scmp.ne.s32.totalorder %s74, %s90
      %p92 = scmp.eq.s32.totalorder %s15, 0
      %p93 = por %p91, %p92
      %s94 = ssub.s32 %s9, %s16
      %p95 = scmp.eq.s32.totalorder %s94, 0
      %s97 = sadd.s32 %s96, 1
      %s98 = scalar_select %p95, %s96, %s97
      %p101 = pneg %p95
      %p102 = scmp.eq.s32.totalorder %s9, 1
      %p103 = por %p101, %p102
      %p104 = scmp.ne.s32.totalorder %s96, %s99
      %p105 = scmp.eq.s32.totalorder %s9, 0
      %p106 = por %p104, %p105
      %p107 = scmp.ne.s32.totalorder %s96, %s99
      %p108 = scmp.eq.s32.totalorder %s14, 1
      %p109 = por %p107, %p108
      %p110 = scmp.ne.s32.totalorder %s99, %s100
      %p111 = scmp.eq.s32.totalorder %s14, 0
      %p112 = por %p110, %p111
      %p113 = scmp.ne.s32.totalorder %s99, %s100
      %p114 = scmp.eq.s32.totalorder %s15, 1
      %p115 = por %p113, %p114
      %p117 = scmp.ne.s32.totalorder %s100, %s116
      %p118 = scmp.eq.s32.totalorder %s15, 0
      %p119 = por %p117, %p118
      %p120 = scmp.le.s32.totalorder 1, %s9
      %p121 = scmp.lt.s32.totalorder %s9, 3
      %p122 = pnand %p120, %p121
      %p123 = pneg %p122
      // Predicated region
      $region9: #{a_call__.1} parent=5 // pred_check
        _
      $region10: #{a_call__.1} parent=5 // pred_check_branch
        %125 = sbr.rel (%p122) target = $region12
      $region11: #{a_call__.1} parent=5 // pred_region
        %s126 = ssub.s32 %s9, 1
        // Predicated region
        $region13: #{a_call__.1} parent=11 // pred_check
          %p127 = pneg %p30
        $region14: #{a_call__.1} parent=11 // pred_check_branch
          %129 = sbr.rel (%p127) target = $region16
        $region15: #{a_call__.1} parent=11 // pred_region
          _
        $region16: #{a_call__.1} parent=11 // pred_fallthru
          _
      $region12: #{a_call__.1} parent=5 // pred_fallthru
        _
      %p130 = scmp.lt.s32.totalorder %s9, 2
      // Predicated region
      $region17: #{a_call__.1} parent=5 // pred_check
        %p131 = pneg %p130
      $region18: #{a_call__.1} parent=5 // pred_check_branch
        %133 = sbr.rel (%p131) target = $region20
      $region19: #{a_call__.1} parent=5 // pred_region
        // Predicated region
        $region21: #{a_call__.1} parent=19 // pred_check
          %p134 = pneg %p50
        $region22: #{a_call__.1} parent=19 // pred_check_branch
          %136 = sbr.rel (%p134) target = $region24
        $region23: #{a_call__.1} parent=19 // pred_region
          %s137 = sand.u32 %s40, 1
          %s138 = sand.u32 %s40, 1
          %s139 = smul.addr %s138, 24
          %s140 = scalar_lea.vmem [#allocation4], %s139
          %s141 = smul.u32 3, %s9
          %s142 = ssub.s32 7, %s141
          %p143 = scmp.lt.s32.totalorder %s142, 3
          %s144 = scalar_select %p143, %s142, 3
          %s145 = smul.u32 8, %s144
          %p146 = scmp.ne.s32.totalorder 0, %s145
          %s147 = smul.addr %s141, 4
          %s148 = scalar_lea.vmem %s1, %s147
          %s149 = smul.u32 %s144, 4
          // Predicated region
          $region25: #{a_call__.1} parent=23 // pred_check
            %p150 = pneg %p146
          $region26: #{a_call__.1} parent=23 // pred_check_branch
            %152 = sbr.rel (%p150) target = $region28
          $region27: #{a_call__.1} parent=23 // pred_region
            %p153 = scmp.lt.u32.totalorder %s149, 8
            %p154 = pneg %p153
            // Predicated region
            $region29: #{a_call__.1} parent=27 // pred_check
              _
            $region30: #{a_call__.1} parent=27 // pred_check_branch
              %156 = sbr.rel (%p153) target = $region32
            $region31: #{a_call__.1} parent=27 // pred_region
              %s174 = sand.u32 %s149, 7
              %p175 = scmp.eq.s32.totalorder %s174, 0
              // Predicated region
              $region44: #{a_call__.1} parent=31 // pred_check
                %p176 = pneg %p175
              $region45: #{a_call__.1} parent=31 // pred_check_branch
                %178 = sbr.rel (%p176) target = $region47
              $region46: #{a_call__.1} parent=31 // pred_region
                %s179 = sshrl.u32 %s149, 3
                %s180 = sshrl.u32 %s179, 4
                // While loop
                $region48: #{a_call__.1} parent=46 // loop_pre_header
                  _
                $region49: #{a_call__.1} parent=46 // loop_header
                  %s182 = sphi 0, %s184
                  %p183 = scmp.ge.s32.totalorder %s182, %s180
                  %s187 = sphi 0, %s256
                  %s188 = sphi %s148, %s259
                  %s189 = sphi %s140, %s260
                $region50: #{a_call__.1} parent=46 // loop_header_branch
                  %186 = sbr.rel (%p183) target = $region54
                $region51: #{a_call__.1} parent=46 // loop_body
                  %v190 = vld [vmem:[%s188] sm:$0xff]
                  %191 = vst [vmem:[%s189] sm:$0xff] %v190
                  %v192 = vld [vmem:[%s188 + $0x8] sm:$0xff]
                  %193 = vst [vmem:[%s189 + $0x8] sm:$0xff] %v192
                  %v194 = vld [vmem:[%s188 + $0x10] sm:$0xff]
                  %195 = vst [vmem:[%s189 + $0x10] sm:$0xff] %v194
                  %v196 = vld [vmem:[%s188 + $0x18] sm:$0xff]
                  %197 = vst [vmem:[%s189 + $0x18] sm:$0xff] %v196
                  %v198 = vld [vmem:[%s188 + $0x20] sm:$0xff]
                  %199 = vst [vmem:[%s189 + $0x20] sm:$0xff] %v198
                  %v200 = vld [vmem:[%s188 + $0x28] sm:$0xff]
                  %201 = vst [vmem:[%s189 + $0x28] sm:$0xff] %v200
                  %v202 = vld [vmem:[%s188 + $0x30] sm:$0xff]
                  %203 = vst [vmem:[%s189 + $0x30] sm:$0xff] %v202
                  %v204 = vld [vmem:[%s188 + $0x38] sm:$0xff]
                  %205 = vst [vmem:[%s189 + $0x38] sm:$0xff] %v204
                  %v206 = vld [vmem:[%s188 + $0x40] sm:$0xff]
                  %207 = vst [vmem:[%s189 + $0x40] sm:$0xff] %v206
                  %v208 = vld [vmem:[%s188 + $0x48] sm:$0xff]
                  %209 = vst [vmem:[%s189 + $0x48] sm:$0xff] %v208
                  %v210 = vld [vmem:[%s188 + $0x50] sm:$0xff]
                  %211 = vst [vmem:[%s189 + $0x50] sm:$0xff] %v210
                  %v212 = vld [vmem:[%s188 + $0x58] sm:$0xff]
                  %213 = vst [vmem:[%s189 + $0x58] sm:$0xff] %v212
                  %v214 = vld [vmem:[%s188 + $0x60] sm:$0xff]
                  %215 = vst [vmem:[%s189 + $0x60] sm:$0xff] %v214
                  %v216 = vld [vmem:[%s188 + $0x68] sm:$0xff]
                  %217 = vst [vmem:[%s189 + $0x68] sm:$0xff] %v216
                  %v218 = vld [vmem:[%s188 + $0x70] sm:$0xff]
                  %219 = vst [vmem:[%s189 + $0x70] sm:$0xff] %v218
                  %v220 = vld [vmem:[%s188 + $0x78] sm:$0xff]
                  %221 = vst [vmem:[%s189 + $0x78] sm:$0xff] %v220
                  %v222 = vld [vmem:[%s188 + $0x1c] sm:$0xff]
                  %223 = vst [vmem:[%s189 + $0xc] sm:$0xff] %v222
                  %v224 = vld [vmem:[%s188 + $0x24] sm:$0xff]
                  %225 = vst [vmem:[%s189 + $0x14] sm:$0xff] %v224
                  %v226 = vld [vmem:[%s188 + $0x2c] sm:$0xff]
                  %227 = vst [vmem:[%s189 + $0x1c] sm:$0xff] %v226
                  %v228 = vld [vmem:[%s188 + $0x34] sm:$0xff]
                  %229 = vst [vmem:[%s189 + $0x24] sm:$0xff] %v228
                  %v230 = vld [vmem:[%s188 + $0x3c] sm:$0xff]
                  %231 = vst [vmem:[%s189 + $0x2c] sm:$0xff] %v230
                  %v232 = vld [vmem:[%s188 + $0x44] sm:$0xff]
                  %233 = vst [vmem:[%s189 + $0x34] sm:$0xff] %v232
                  %v234 = vld [vmem:[%s188 + $0x4c] sm:$0xff]
                  %235 = vst [vmem:[%s189 + $0x3c] sm:$0xff] %v234
                  %v236 = vld [vmem:[%s188 + $0x54] sm:$0xff]
                  %237 = vst [vmem:[%s189 + $0x44] sm:$0xff] %v236
                  %v238 = vld [vmem:[%s188 + $0x5c] sm:$0xff]
                  %239 = vst [vmem:[%s189 + $0x4c] sm:$0xff] %v238
                  %v240 = vld [vmem:[%s188 + $0x64] sm:$0xff]
                  %241 = vst [vmem:[%s189 + $0x54] sm:$0xff] %v240
                  %v242 = vld [vmem:[%s188 + $0x6c] sm:$0xff]
                  %243 = vst [vmem:[%s189 + $0x5c] sm:$0xff] %v242
                  %v244 = vld [vmem:[%s188 + $0x74] sm:$0xff]
                  %245 = vst [vmem:[%s189 + $0x64] sm:$0xff] %v244
                  %v246 = vld [vmem:[%s188 + $0x7c] sm:$0xff]
                  %247 = vst [vmem:[%s189 + $0x6c] sm:$0xff] %v246
                  %v248 = vld [vmem:[%s188 + $0x84] sm:$0xff]
                  %249 = vst [vmem:[%s189 + $0x74] sm:$0xff] %v248
                  %v250 = vld [vmem:[%s188 + $0x8c] sm:$0xff]
                  %251 = vst [vmem:[%s189 + $0x7c] sm:$0xff] %v250
                  %v252 = vld [vmem:[%s188 + $0x94] sm:$0xff]
                  %253 = vst [vmem:[%s189 + $0x84] sm:$0xff] %v252
                  %s254 = sadd.s32 1, %s187
                  %p255 = scmp.ge.s32.totalorder %s254, %s180
                  %s256 = scalar_select %p255, 0, %s254
                  %s257 = smul.u32 %s256, 128
                  %s258 = smul.u32 %s256, 128
                  %s259 = scalar_lea.vmem %s148, %s257
                  %s260 = scalar_lea.vmem %s140, %s258 [#allocation4]
                $region52: #{a_call__.1} parent=46 // loop_footer
                  %s184 = sadd.s32 %s182, 1
                $region53: #{a_call__.1} parent=46 // loop_footer_branch
                  %181 = sbr.rel target = $region49
                $region54: #{a_call__.1} parent=46 // loop_exit
                  _
                %s261 = sshrl.u32 %s179, 4
                %s262 = sand.u32 %s179, 15
                %s263 = smul.u32 %s261, 16
                %s264 = smul.u32 8, %s263
                %s265 = scalar_lea.vmem %s148, %s264
                %s266 = smul.u32 8, %s263
                %s267 = scalar_lea.vmem %s140, %s266 [#allocation4]
                // While loop
                $region55: #{a_call__.1} parent=46 // loop_pre_header
                  _
                $region56: #{a_call__.1} parent=46 // loop_header
                  %s269 = sphi 0, %s271
                  %p270 = scmp.ge.s32.totalorder %s269, %s262
                  %s274 = sphi 0, %s283
                  %s275 = sphi %s265, %s286
                  %s276 = sphi %s267, %s287
                $region57: #{a_call__.1} parent=46 // loop_header_branch
                  %273 = sbr.rel (%p270) target = $region61
                $region58: #{a_call__.1} parent=46 // loop_body
                  %v277 = vld [vmem:[%s275] sm:$0xff]
                  %278 = vst [vmem:[%s276] sm:$0xff] %v277
                  %v279 = vld [vmem:[%s275 + $0x1c] sm:$0xff]
                  %280 = vst [vmem:[%s276 + $0xc] sm:$0xff] %v279
                  %s281 = sadd.s32 1, %s274
                  %p282 = scmp.ge.s32.totalorder %s281, %s262
                  %s283 = scalar_select %p282, 0, %s281
                  %s284 = smul.u32 %s283, 8
                  %s285 = smul.u32 %s283, 8
                  %s286 = scalar_lea.vmem %s265, %s284
                  %s287 = scalar_lea.vmem %s267, %s285 [#allocation4]
                $region59: #{a_call__.1} parent=46 // loop_footer
                  %s271 = sadd.s32 %s269, 1
                $region60: #{a_call__.1} parent=46 // loop_footer_branch
                  %268 = sbr.rel target = $region56
                $region61: #{a_call__.1} parent=46 // loop_exit
                  _
              $region47: #{a_call__.1} parent=31 // pred_fallthru
                _
              %p288 = pneg %p175
              // Predicated region
              $region62: #{a_call__.1} parent=31 // pred_check
                _
              $region63: #{a_call__.1} parent=31 // pred_check_branch
                %290 = sbr.rel (%p175) target = $region65
              $region64: #{a_call__.1} parent=31 // pred_region
                %s291 = sand.u32 %s149, 7
                %s292 = ssub.s32 %s149, %s291
                %s293 = scalar_lea.vmem %s148, %s292
                %s294 = ssub.s32 %s149, %s291
                %s295 = scalar_lea.vmem %s140, %s294 [#allocation4]
                %s296 = sshrl.u32 %s149, 3
                %s297 = sshrl.u32 %s296, 4
                // While loop
                $region66: #{a_call__.1} parent=64 // loop_pre_header
                  _
                $region67: #{a_call__.1} parent=64 // loop_header
                  %s299 = sphi 0, %s301
                  %p300 = scmp.ge.s32.totalorder %s299, %s297
                  %s304 = sphi 0, %s373
                  %s305 = sphi %s148, %s376
                  %s306 = sphi %s140, %s377
                $region68: #{a_call__.1} parent=64 // loop_header_branch
                  %303 = sbr.rel (%p300) target = $region72
                $region69: #{a_call__.1} parent=64 // loop_body
                  %v307 = vld [vmem:[%s305] sm:$0xff]
                  %308 = vst [vmem:[%s306] sm:$0xff] %v307
                  %v309 = vld [vmem:[%s305 + $0x8] sm:$0xff]
                  %310 = vst [vmem:[%s306 + $0x8] sm:$0xff] %v309
                  %v311 = vld [vmem:[%s305 + $0x10] sm:$0xff]
                  %312 = vst [vmem:[%s306 + $0x10] sm:$0xff] %v311
                  %v313 = vld [vmem:[%s305 + $0x18] sm:$0xff]
                  %314 = vst [vmem:[%s306 + $0x18] sm:$0xff] %v313
                  %v315 = vld [vmem:[%s305 + $0x20] sm:$0xff]
                  %316 = vst [vmem:[%s306 + $0x20] sm:$0xff] %v315
                  %v317 = vld [vmem:[%s305 + $0x28] sm:$0xff]
                  %318 = vst [vmem:[%s306 + $0x28] sm:$0xff] %v317
                  %v319 = vld [vmem:[%s305 + $0x30] sm:$0xff]
                  %320 = vst [vmem:[%s306 + $0x30] sm:$0xff] %v319
                  %v321 = vld [vmem:[%s305 + $0x38] sm:$0xff]
                  %322 = vst [vmem:[%s306 + $0x38] sm:$0xff] %v321
                  %v323 = vld [vmem:[%s305 + $0x40] sm:$0xff]
                  %324 = vst [vmem:[%s306 + $0x40] sm:$0xff] %v323
                  %v325 = vld [vmem:[%s305 + $0x48] sm:$0xff]
                  %326 = vst [vmem:[%s306 + $0x48] sm:$0xff] %v325
                  %v327 = vld [vmem:[%s305 + $0x50] sm:$0xff]
                  %328 = vst [vmem:[%s306 + $0x50] sm:$0xff] %v327
                  %v329 = vld [vmem:[%s305 + $0x58] sm:$0xff]
                  %330 = vst [vmem:[%s306 + $0x58] sm:$0xff] %v329
                  %v331 = vld [vmem:[%s305 + $0x60] sm:$0xff]
                  %332 = vst [vmem:[%s306 + $0x60] sm:$0xff] %v331
                  %v333 = vld [vmem:[%s305 + $0x68] sm:$0xff]
                  %334 = vst [vmem:[%s306 + $0x68] sm:$0xff] %v333
                  %v335 = vld [vmem:[%s305 + $0x70] sm:$0xff]
                  %336 = vst [vmem:[%s306 + $0x70] sm:$0xff] %v335
                  %v337 = vld [vmem:[%s305 + $0x78] sm:$0xff]
                  %338 = vst [vmem:[%s306 + $0x78] sm:$0xff] %v337
                  %v339 = vld [vmem:[%s305 + $0x1c] sm:$0xff]
                  %340 = vst [vmem:[%s306 + $0xc] sm:$0xff] %v339
                  %v341 = vld [vmem:[%s305 + $0x24] sm:$0xff]
                  %342 = vst [vmem:[%s306 + $0x14] sm:$0xff] %v341
                  %v343 = vld [vmem:[%s305 + $0x2c] sm:$0xff]
                  %344 = vst [vmem:[%s306 + $0x1c] sm:$0xff] %v343
                  %v345 = vld [vmem:[%s305 + $0x34] sm:$0xff]
                  %346 = vst [vmem:[%s306 + $0x24] sm:$0xff] %v345
                  %v347 = vld [vmem:[%s305 + $0x3c] sm:$0xff]
                  %348 = vst [vmem:[%s306 + $0x2c] sm:$0xff] %v347
                  %v349 = vld [vmem:[%s305 + $0x44] sm:$0xff]
                  %350 = vst [vmem:[%s306 + $0x34] sm:$0xff] %v349
                  %v351 = vld [vmem:[%s305 + $0x4c] sm:$0xff]
                  %352 = vst [vmem:[%s306 + $0x3c] sm:$0xff] %v351
                  %v353 = vld [vmem:[%s305 + $0x54] sm:$0xff]
                  %354 = vst [vmem:[%s306 + $0x44] sm:$0xff] %v353
                  %v355 = vld [vmem:[%s305 + $0x5c] sm:$0xff]
                  %356 = vst [vmem:[%s306 + $0x4c] sm:$0xff] %v355
                  %v357 = vld [vmem:[%s305 + $0x64] sm:$0xff]
                  %358 = vst [vmem:[%s306 + $0x54] sm:$0xff] %v357
                  %v359 = vld [vmem:[%s305 + $0x6c] sm:$0xff]
                  %360 = vst [vmem:[%s306 + $0x5c] sm:$0xff] %v359
                  %v361 = vld [vmem:[%s305 + $0x74] sm:$0xff]
                  %362 = vst [vmem:[%s306 + $0x64] sm:$0xff] %v361
                  %v363 = vld [vmem:[%s305 + $0x7c] sm:$0xff]
                  %364 = vst [vmem:[%s306 + $0x6c] sm:$0xff] %v363
                  %v365 = vld [vmem:[%s305 + $0x84] sm:$0xff]
                  %366 = vst [vmem:[%s306 + $0x74] sm:$0xff] %v365
                  %v367 = vld [vmem:[%s305 + $0x8c] sm:$0xff]
                  %368 = vst [vmem:[%s306 + $0x7c] sm:$0xff] %v367
                  %v369 = vld [vmem:[%s305 + $0x94] sm:$0xff]
                  %370 = vst [vmem:[%s306 + $0x84] sm:$0xff] %v369
                  %s371 = sadd.s32 1, %s304
                  %p372 = scmp.ge.s32.totalorder %s371, %s297
                  %s373 = scalar_select %p372, 0, %s371
                  %s374 = smul.u32 %s373, 128
                  %s375 = smul.u32 %s373, 128
                  %s376 = scalar_lea.vmem %s148, %s374
                  %s377 = scalar_lea.vmem %s140, %s375 [#allocation4]
                $region70: #{a_call__.1} parent=64 // loop_footer
                  %s301 = sadd.s32 %s299, 1
                $region71: #{a_call__.1} parent=64 // loop_footer_branch
                  %298 = sbr.rel target = $region67
                $region72: #{a_call__.1} parent=64 // loop_exit
                  _
                %s378 = sshrl.u32 %s296, 4
                %s379 = sand.u32 %s296, 15
                %s380 = smul.u32 %s378, 16
                %s381 = smul.u32 8, %s380
                %s382 = scalar_lea.vmem %s148, %s381
                %s383 = smul.u32 8, %s380
                %s384 = scalar_lea.vmem %s140, %s383 [#allocation4]
                // While loop
                $region73: #{a_call__.1} parent=64 // loop_pre_header
                  _
                $region74: #{a_call__.1} parent=64 // loop_header
                  %s386 = sphi 0, %s388
                  %p387 = scmp.ge.s32.totalorder %s386, %s379
                  %s391 = sphi 0, %s400
                  %s392 = sphi %s382, %s403
                  %s393 = sphi %s384, %s404
                $region75: #{a_call__.1} parent=64 // loop_header_branch
                  %390 = sbr.rel (%p387) target = $region79
                $region76: #{a_call__.1} parent=64 // loop_body
                  %v394 = vld [vmem:[%s392] sm:$0xff]
                  %395 = vst [vmem:[%s393] sm:$0xff] %v394
                  %v396 = vld [vmem:[%s392 + $0x1c] sm:$0xff]
                  %397 = vst [vmem:[%s393 + $0xc] sm:$0xff] %v396
                  %s398 = sadd.s32 1, %s391
                  %p399 = scmp.ge.s32.totalorder %s398, %s379
                  %s400 = scalar_select %p399, 0, %s398
                  %s401 = smul.u32 %s400, 8
                  %s402 = smul.u32 %s400, 8
                  %s403 = scalar_lea.vmem %s382, %s401
                  %s404 = scalar_lea.vmem %s384, %s402 [#allocation4]
                $region77: #{a_call__.1} parent=64 // loop_footer
                  %s388 = sadd.s32 %s386, 1
                $region78: #{a_call__.1} parent=64 // loop_footer_branch
                  %385 = sbr.rel target = $region74
                $region79: #{a_call__.1} parent=64 // loop_exit
                  _
                %s405 = sshll.u32 1, %s291
                %s406 = ssub.s32 %s405, 1
                loop: start=0, step=1, limit=1
                $region80: #{a_call__.1} parent=64 // loop_pre_header
                  _
                $region81: #{a_call__.1} parent=64 // loop_header
                  %s408 = sphi 0, %s412
                  %p409 = scmp.ge.s32.totalorder %s408, 1
                  %s413 = sphi %s293, %s293
                  %s414 = sphi %s295, %s295
                $region82: #{a_call__.1} parent=64 // loop_header_branch
                  %411 = sbr.rel (%p409) target = $region86
                $region83: #{a_call__.1} parent=64 // loop_body
                  %v415 = vld [vmem:[%s413] sm:%s406]
                  %416 = vst [vmem:[%s414] sm:%s406] %v415
                  %v417 = vld [vmem:[%s413 + $0x1c] sm:%s406]
                  %418 = vst [vmem:[%s414 + $0xc] sm:%s406] %v417
                $region84: #{a_call__.1} parent=64 // loop_footer
                  %s412 = sadd.s32 1, %s408
                $region85: #{a_call__.1} parent=64 // loop_footer_branch
                  %407 = sbr.rel target = $region81
                $region86: #{a_call__.1} parent=64 // loop_exit
                  _
              $region65: #{a_call__.1} parent=31 // pred_fallthru
                _
            $region32: #{a_call__.1} parent=27 // pred_fallthru
              _
            // Predicated region
            $region33: #{a_call__.1} parent=27 // pred_check
              %p157 = pneg %p153
            $region34: #{a_call__.1} parent=27 // pred_check_branch
              %159 = sbr.rel (%p157) target = $region36
            $region35: #{a_call__.1} parent=27 // pred_region
              %s160 = sshll.u32 1, %s149
              %s161 = ssub.s32 %s160, 1
              loop: start=0, step=1, limit=1
              $region37: #{a_call__.1} parent=35 // loop_pre_header
                _
              $region38: #{a_call__.1} parent=35 // loop_header
                %s163 = sphi 0, %s167
                %p164 = scmp.ge.s32.totalorder %s163, 1
                %s168 = sphi %s148, %s148
                %s169 = sphi %s140, %s140
              $region39: #{a_call__.1} parent=35 // loop_header_branch
                %166 = sbr.rel (%p164) target = $region43
              $region40: #{a_call__.1} parent=35 // loop_body
                %v170 = vld [vmem:[%s168] sm:%s161]
                %171 = vst [vmem:[%s169] sm:%s161] %v170
                %v172 = vld [vmem:[%s168 + $0x1c] sm:%s161]
                %173 = vst [vmem:[%s169 + $0xc] sm:%s161] %v172
              $region41: #{a_call__.1} parent=35 // loop_footer
                %s167 = sadd.s32 1, %s163
              $region42: #{a_call__.1} parent=35 // loop_footer_branch
                %162 = sbr.rel target = $region38
              $region43: #{a_call__.1} parent=35 // loop_exit
                _
            $region36: #{a_call__.1} parent=27 // pred_fallthru
              _
          $region28: #{a_call__.1} parent=23 // pred_fallthru
            _
          %419 = vnop
        $region24: #{a_call__.1} parent=19 // pred_fallthru
          _
        // Predicated region
        $region87: #{a_call__.1} parent=19 // pred_check
          %p420 = pneg %p80
        $region88: #{a_call__.1} parent=19 // pred_check_branch
          %422 = sbr.rel (%p420) target = $region90
        $region89: #{a_call__.1} parent=19 // pred_region
          %s423 = sand.u32 %s70, 1
          %s424 = sand.u32 %s70, 1
          %s425 = smul.addr %s424, 8
          %s426 = scalar_lea.vmem [#allocation5], %s425
          %s427 = sadd.s32 %s9, 1
          %s428 = smul.u32 %s427, 3
          %s429 = smul.addr %s428, 4
          %s430 = scalar_lea.vmem %s2, %s429
          // Predicated region
          $region91: #{a_call__.1} parent=89 // pred_check
            _
          $region92: #{a_call__.1} parent=89 // pred_check_branch
            %432 = sbr.rel (0) target = $region94
          $region93: #{a_call__.1} parent=89 // pred_region
            // Predicated region
            $region95: #{a_call__.1} parent=93 // pred_check
              _
            $region96: #{a_call__.1} parent=93 // pred_check_branch
              %434 = sbr.rel target = $region98
            $region97: #{a_call__.1} parent=93 // pred_region
              // Predicated region
              $region110: #{a_call__.1} parent=97 // pred_check
                _
              $region111: #{a_call__.1} parent=97 // pred_check_branch
                %452 = sbr.rel (0) target = $region113
              $region112: #{a_call__.1} parent=97 // pred_region
                loop: start=0, step=1, limit=1
                $region114: #{a_call__.1} parent=112 // loop_pre_header
                  _
                $region115: #{a_call__.1} parent=112 // loop_header
                  %s454 = sphi 0, %s458
                  %p455 = scmp.ge.s32.totalorder %s454, 1
                  %s459 = sphi %s430, %s430
                  %s460 = sphi %s426, %s426
                $region116: #{a_call__.1} parent=112 // loop_header_branch
                  %457 = sbr.rel (%p455) target = $region120
                $region117: #{a_call__.1} parent=112 // loop_body
                  _
                $region118: #{a_call__.1} parent=112 // loop_footer
                  %s458 = sadd.s32 1, %s454
                $region119: #{a_call__.1} parent=112 // loop_footer_branch
                  %453 = sbr.rel target = $region115
                $region120: #{a_call__.1} parent=112 // loop_exit
                  _
                %s462 = ssub.s32 16, 1
                loop: start=0, step=1, limit=1
                $region121: #{a_call__.1} parent=112 // loop_pre_header
                  _
                $region122: #{a_call__.1} parent=112 // loop_header
                  %s464 = sphi 0, %s468
                  %p465 = scmp.ge.s32.totalorder %s464, 1
                  %s469 = sphi %s430, %s430
                  %s470 = sphi %s426, %s426
                $region123: #{a_call__.1} parent=112 // loop_header_branch
                  %467 = sbr.rel (%p465) target = $region127
                $region124: #{a_call__.1} parent=112 // loop_body
                  %v471 = vld [vmem:[%s469] sm:%s462]
                  %472 = vst [vmem:[%s470] sm:%s462] %v471
                  %v473 = vld [vmem:[%s469 + $0x1c] sm:%s462]
                  %474 = vst [vmem:[%s470 + $0x4] sm:%s462] %v473
                $region125: #{a_call__.1} parent=112 // loop_footer
                  %s468 = sadd.s32 1, %s464
                $region126: #{a_call__.1} parent=112 // loop_footer_branch
                  %463 = sbr.rel target = $region122
                $region127: #{a_call__.1} parent=112 // loop_exit
                  _
              $region113: #{a_call__.1} parent=97 // pred_fallthru
                _
            $region98: #{a_call__.1} parent=93 // pred_fallthru
              _
            // Predicated region
            $region99: #{a_call__.1} parent=93 // pred_check
              _
            $region100: #{a_call__.1} parent=93 // pred_check_branch
              %436 = sbr.rel (0) target = $region102
            $region101: #{a_call__.1} parent=93 // pred_region
              %s438 = ssub.s32 16, 1
              loop: start=0, step=1, limit=1
              $region103: #{a_call__.1} parent=101 // loop_pre_header
                _
              $region104: #{a_call__.1} parent=101 // loop_header
                %s440 = sphi 0, %s444
                %p441 = scmp.ge.s32.totalorder %s440, 1
                %s445 = sphi %s430, %s430
                %s446 = sphi %s426, %s426
              $region105: #{a_call__.1} parent=101 // loop_header_branch
                %443 = sbr.rel (%p441) target = $region109
              $region106: #{a_call__.1} parent=101 // loop_body
                %v447 = vld [vmem:[%s445] sm:%s438]
                %448 = vst [vmem:[%s446] sm:%s438] %v447
                %v449 = vld [vmem:[%s445 + $0x1c] sm:%s438]
                %450 = vst [vmem:[%s446 + $0x4] sm:%s438] %v449
              $region107: #{a_call__.1} parent=101 // loop_footer
                %s444 = sadd.s32 1, %s440
              $region108: #{a_call__.1} parent=101 // loop_footer_branch
                %439 = sbr.rel target = $region104
              $region109: #{a_call__.1} parent=101 // loop_exit
                _
            $region102: #{a_call__.1} parent=93 // pred_fallthru
              _
          $region94: #{a_call__.1} parent=89 // pred_fallthru
            _
          %475 = vnop
        $region90: #{a_call__.1} parent=19 // pred_fallthru
          _
      $region20: #{a_call__.1} parent=5 // pred_fallthru
        _
      %p476 = scmp.le.s32.totalorder 1, %s9
      %p477 = scmp.lt.s32.totalorder %s9, 3
      %p478 = pnand %p476, %p477
      %p479 = pneg %p478
      // Predicated region
      $region128: #{a_call__.1} parent=5 // pred_check
        _
      $region129: #{a_call__.1} parent=5 // pred_check_branch
        %481 = sbr.rel (%p478) target = $region131
      $region130: #{a_call__.1} parent=5 // pred_region
        %s482 = ssub.s32 %s9, 1
        %s483 = sand.u32 %s43, 1
        %s484 = sand.u32 %s43, 1
        %s485 = smul.addr %s484, 24
        %s486 = scalar_lea.vmem [#allocation4], %s485
        // Predicated region
        $region132: #{a_call__.1} parent=130 // pred_check
          %p487 = pneg %p56
        $region133: #{a_call__.1} parent=130 // pred_check_branch
          %489 = sbr.rel (%p487) target = $region135
        $region134: #{a_call__.1} parent=130 // pred_region
          _
        $region135: #{a_call__.1} parent=130 // pred_fallthru
          _
        %s490 = sand.u32 %s73, 1
        %s491 = sand.u32 %s73, 1
        %s492 = smul.addr %s491, 8
        %s493 = scalar_lea.vmem [#allocation5], %s492
        // Predicated region
        $region136: #{a_call__.1} parent=130 // pred_check
          %p494 = pneg %p86
        $region137: #{a_call__.1} parent=130 // pred_check_branch
          %496 = sbr.rel (%p494) target = $region139
        $region138: #{a_call__.1} parent=130 // pred_region
          _
        $region139: #{a_call__.1} parent=130 // pred_fallthru
          _
        %p497 = pneg %p30
        %p498 = pneg %p27
        %s499 = sand.u32 %s43, 1
        %s500 = sand.u32 %s43, 1
        %s501 = smul.addr %s500, 24
        %s502 = scalar_lea.vmem [#allocation4], %s501
        %p503 = pneg %p56
        %p504 = pneg %p53
        %s505 = sand.u32 %s73, 1
        %s506 = sand.u32 %s73, 1
        %s507 = smul.addr %s506, 8
        %s508 = scalar_lea.vmem [#allocation5], %s507
        %p509 = pneg %p86
        %p510 = pneg %p83
        %p511 = pneg %p112
        %p512 = pneg %p109
        %s513 = sand.u32 %s99, 1
        %s514 = sand.u32 %s99, 1
        %s515 = smul.addr %s514, 48
        %s516 = scalar_lea.vmem [#allocation6], %s515
        %s517 = smul.u32 3, %s14
        %s518 = ssub.s32 7, %s517
        %p519 = scmp.lt.s32.totalorder %s518, 3
        %s520 = scalar_select %p519, %s518, 3
        %s521 = smul.u32 8, %s520
        %s522 = sadd.s32 %s14, 1
        %s523 = smul.u32 %s522, 3
        %s524 = smul.u32 3, %s14
        %v526 = vld [vmem:[%s486] sm:$0xff]
        %v527 = vld [vmem:[%s486 + $0x8] sm:$0xf]
        %v528 = vld [vmem:[%s486 + $0xc] sm:$0xff]
        %v529 = vld [vmem:[%s486 + $0x14] sm:$0xf]
        %530 = vst [vmem:[#allocation2] sm:$0xff] %v526
        %531 = vst [vmem:[#allocation2 + $0x8] sm:$0xf] %v527
        %532 = vst [vmem:[#allocation2 + $0x10] sm:$0xff] %v528
        %533 = vst [vmem:[#allocation2 + $0x18] sm:$0xf] %v529
        %v534 = vld [vmem:[%s493] sm:$0xf]
        %v535 = vld [vmem:[%s493 + $0x4] sm:$0xf]
        %536 = vst [vmem:[#allocation2 + $0xc] sm:$0xf] %v534
        %537 = vst [vmem:[#allocation2 + $0x1c] sm:$0xf] %v535
        %v538 = vld [vmem:[#allocation2] sm:$0xff]
        %v539 = vld [vmem:[#allocation2 + $0x8] sm:$0xf]
        %v540 = vld [vmem:[#allocation2 + $0x10] sm:$0xff]
        %v541 = vld [vmem:[#allocation2 + $0x18] sm:$0xf]
        %542 = vst [vmem:[#allocation3] sm:$0xff] %v538
        %543 = vst [vmem:[#allocation3 + $0x8] sm:$0xf] %v539
        %544 = vst [vmem:[#allocation3 + $0xc] sm:$0xff] %v540
        %545 = vst [vmem:[#allocation3 + $0x14] sm:$0xf] %v541
        %v546 = vld [vmem:[#allocation2] sm:$0xff]
        %v547 = vld [vmem:[#allocation2 + $0x8] sm:$0xff]
        %v548 = vld [vmem:[#allocation2 + $0x10] sm:$0xff]
        %v549 = vld [vmem:[#allocation2 + $0x18] sm:$0xff]
        %554 = vrot.lane.b32.xlu0 %v546, 127
        %v555 = vpop.permute.xlu0 %554
        %556 = vrot.lane.b32.xlu0 %v547, 127
        %v557 = vpop.permute.xlu0 %556
        %558 = vrot.lane.b32.xlu0 %v548, 127
        %v559 = vpop.permute.xlu0 %558
        %560 = vrot.lane.b32.xlu0 %v549, 127
        %v561 = vpop.permute.xlu0 %560
        %v562 = vrot.slane %v555, 4
        %v563 = vrot.slane %v557, 4
        %v564 = vrot.slane %v559, 4
        %v565 = vrot.slane %v561, 4
        %vm566 = vcmask 1043456
        %v567 = vsel %vm566, %v562, %v563
        %vm568 = vcmask 1039360
        %v569 = vsel %vm568, %v555, %v567
        %v570 = vsel %vm568, %v557, %v563
        %v571 = vsel %vm566, %v564, %v565
        %v572 = vsel %vm568, %v559, %v571
        %v573 = vsel %vm568, %v561, %v565
        %578 = vst [vmem:[#allocation3 + $0x18] sm:$0xff] %v569
        %579 = vst [vmem:[#allocation3 + $0x20] sm:$0xf] %v570
        %580 = vst [vmem:[#allocation3 + $0x24] sm:$0xff] %v572
        %581 = vst [vmem:[#allocation3 + $0x2c] sm:$0xf] %v573
        %v582 = vld [vmem:[#allocation2] sm:$0xff]
        %v583 = vld [vmem:[#allocation2 + $0x8] sm:$0xff]
        %v584 = vld [vmem:[#allocation2 + $0x10] sm:$0xff]
        %v585 = vld [vmem:[#allocation2 + $0x18] sm:$0xff]
        %590 = vrot.lane.b32.xlu0 %v582, 126
        %v591 = vpop.permute.xlu0 %590
        %592 = vrot.lane.b32.xlu0 %v583, 126
        %v593 = vpop.permute.xlu0 %592
        %594 = vrot.lane.b32.xlu0 %v584, 126
        %v595 = vpop.permute.xlu0 %594
        %596 = vrot.lane.b32.xlu0 %v585, 126
        %v597 = vpop.permute.xlu0 %596
        %v598 = vrot.slane %v591, 4
        %v599 = vrot.slane %v593, 4
        %v600 = vrot.slane %v595, 4
        %v601 = vrot.slane %v597, 4
        %v602 = vsel %vm566, %v598, %v599
        %vm603 = vcmask 1031168
        %v604 = vsel %vm603, %v591, %v602
        %v605 = vsel %vm603, %v593, %v599
        %v606 = vsel %vm566, %v600, %v601
        %v607 = vsel %vm603, %v595, %v606
        %v608 = vsel %vm603, %v597, %v601
        %613 = vst [vmem:[#allocation3 + $0x30] sm:$0xff] %v604
        %614 = vst [vmem:[#allocation3 + $0x38] sm:$0xf] %v605
        %615 = vst [vmem:[#allocation3 + $0x3c] sm:$0xff] %v607
        %616 = vst [vmem:[#allocation3 + $0x44] sm:$0xf] %v608
        %v617 = vld [vmem:[#allocation2] sm:$0xff]
        %v618 = vld [vmem:[#allocation2 + $0x8] sm:$0xff]
        %v619 = vld [vmem:[#allocation2 + $0x10] sm:$0xff]
        %v620 = vld [vmem:[#allocation2 + $0x18] sm:$0xff]
        %625 = vrot.lane.b32.xlu0 %v617, 125
        %v626 = vpop.permute.xlu0 %625
        %627 = vrot.lane.b32.xlu0 %v618, 125
        %v628 = vpop.permute.xlu0 %627
        %629 = vrot.lane.b32.xlu0 %v619, 125
        %v630 = vpop.permute.xlu0 %629
        %631 = vrot.lane.b32.xlu0 %v620, 125
        %v632 = vpop.permute.xlu0 %631
        %v633 = vrot.slane %v626, 4
        %v634 = vrot.slane %v628, 4
        %v635 = vrot.slane %v630, 4
        %v636 = vrot.slane %v632, 4
        %v637 = vsel %vm566, %v633, %v634
        %vm638 = vcmask 1022976
        %v639 = vsel %vm638, %v626, %v637
        %v640 = vsel %vm638, %v628, %v634
        %v641 = vsel %vm566, %v635, %v636
        %v642 = vsel %vm638, %v630, %v641
        %v643 = vsel %vm638, %v632, %v636
        %648 = vst [vmem:[#allocation3 + $0x48] sm:$0xff] %v639
        %649 = vst [vmem:[#allocation3 + $0x50] sm:$0xf] %v640
        %650 = vst [vmem:[#allocation3 + $0x54] sm:$0xff] %v642
        %651 = vst [vmem:[#allocation3 + $0x5c] sm:$0xf] %v643
        %v652 = vld [vmem:[#allocation2] sm:$0xff]
        %v653 = vld [vmem:[#allocation2 + $0x8] sm:$0xff]
        %v654 = vld [vmem:[#allocation2 + $0x10] sm:$0xff]
        %v655 = vld [vmem:[#allocation2 + $0x18] sm:$0xff]
        %660 = vrot.lane.b32.xlu0 %v652, 124
        %v661 = vpop.permute.xlu0 %660
        %662 = vrot.lane.b32.xlu0 %v653, 124
        %v663 = vpop.permute.xlu0 %662
        %664 = vrot.lane.b32.xlu0 %v654, 124
        %v665 = vpop.permute.xlu0 %664
        %666 = vrot.lane.b32.xlu0 %v655, 124
        %v667 = vpop.permute.xlu0 %666
        %v668 = vrot.slane %v661, 4
        %v669 = vrot.slane %v663, 4
        %v670 = vrot.slane %v665, 4
        %v671 = vrot.slane %v667, 4
        %v672 = vsel %vm566, %v668, %v669
        %vm673 = vcmask 1014784
        %v674 = vsel %vm673, %v661, %v672
        %v675 = vsel %vm673, %v663, %v669
        %v676 = vsel %vm566, %v670, %v671
        %v677 = vsel %vm673, %v665, %v676
        %v678 = vsel %vm673, %v667, %v671
        %683 = vst [vmem:[#allocation3 + $0x60] sm:$0xff] %v674
        %684 = vst [vmem:[#allocation3 + $0x68] sm:$0xf] %v675
        %685 = vst [vmem:[#allocation3 + $0x6c] sm:$0xff] %v677
        %686 = vst [vmem:[#allocation3 + $0x74] sm:$0xf] %v678
        %v687 = vld [vmem:[#allocation2] sm:$0xff]
        %v688 = vld [vmem:[#allocation2 + $0x8] sm:$0xff]
        %v689 = vld [vmem:[#allocation2 + $0x10] sm:$0xff]
        %v690 = vld [vmem:[#allocation2 + $0x18] sm:$0xff]
        %695 = vrot.lane.b32.xlu0 %v687, 110
        %v696 = vpop.permute.xlu0 %695
        %697 = vrot.lane.b32.xlu0 %v688, 110
        %v698 = vpop.permute.xlu0 %697
        %699 = vrot.lane.b32.xlu0 %v689, 110
        %v700 = vpop.permute.xlu0 %699
        %701 = vrot.lane.b32.xlu0 %v690, 110
        %v702 = vpop.permute.xlu0 %701
        %v703 = vrot.slane %v696, 4
        %v704 = vrot.slane %v698, 4
        %v705 = vrot.slane %v700, 4
        %v706 = vrot.slane %v702, 4
        %v707 = vsel %vm566, %v703, %v704
        %vm708 = vcmask 900096
        %v709 = vsel %vm708, %v696, %v707
        %v710 = vsel %vm708, %v698, %v704
        %v711 = vsel %vm566, %v705, %v706
        %v712 = vsel %vm708, %v700, %v711
        %v713 = vsel %vm708, %v702, %v706
        %718 = vst [vmem:[#allocation3 + $0x78] sm:$0xff] %v709
        %719 = vst [vmem:[#allocation3 + $0x80] sm:$0xf] %v710
        %720 = vst [vmem:[#allocation3 + $0x84] sm:$0xff] %v712
        %721 = vst [vmem:[#allocation3 + $0x8c] sm:$0xf] %v713
        %v722 = vld [vmem:[#allocation2] sm:$0xff]
        %v723 = vld [vmem:[#allocation2 + $0x8] sm:$0xff]
        %v724 = vld [vmem:[#allocation2 + $0x10] sm:$0xff]
        %v725 = vld [vmem:[#allocation2 + $0x18] sm:$0xff]
        %730 = vrot.lane.b32.xlu0 %v722, 109
        %v731 = vpop.permute.xlu0 %730
        %732 = vrot.lane.b32.xlu0 %v723, 109
        %v733 = vpop.permute.xlu0 %732
        %734 = vrot.lane.b32.xlu0 %v724, 109
        %v735 = vpop.permute.xlu0 %734
        %736 = vrot.lane.b32.xlu0 %v725, 109
        %v737 = vpop.permute.xlu0 %736
        %v738 = vrot.slane %v731, 4
        %v739 = vrot.slane %v733, 4
        %v740 = vrot.slane %v735, 4
        %v741 = vrot.slane %v737, 4
        %v742 = vsel %vm566, %v738, %v739
        %vm743 = vcmask 891904
        %v744 = vsel %vm743, %v731, %v742
        %v745 = vsel %vm743, %v733, %v739
        %v746 = vsel %vm566, %v740, %v741
        %v747 = vsel %vm743, %v735, %v746
        %v748 = vsel %vm743, %v737, %v741
        %753 = vst [vmem:[#allocation3 + $0x90] sm:$0xff] %v744
        %754 = vst [vmem:[#allocation3 + $0x98] sm:$0xf] %v745
        %755 = vst [vmem:[#allocation3 + $0x9c] sm:$0xff] %v747
        %756 = vst [vmem:[#allocation3 + $0xa4] sm:$0xf] %v748
        %v757 = vld [vmem:[#allocation2] sm:$0xff]
        %v758 = vld [vmem:[#allocation2 + $0x8] sm:$0xff]
        %v759 = vld [vmem:[#allocation2 + $0x10] sm:$0xff]
        %v760 = vld [vmem:[#allocation2 + $0x18] sm:$0xff]
        %765 = vrot.lane.b32.xlu0 %v757, 108
        %v766 = vpop.permute.xlu0 %765
        %767 = vrot.lane.b32.xlu0 %v758, 108
        %v768 = vpop.permute.xlu0 %767
        %769 = vrot.lane.b32.xlu0 %v759, 108
        %v770 = vpop.permute.xlu0 %769
        %771 = vrot.lane.b32.xlu0 %v760, 108
        %v772 = vpop.permute.xlu0 %771
        %v773 = vrot.slane %v766, 4
        %v774 = vrot.slane %v768, 4
        %v775 = vrot.slane %v770, 4
        %v776 = vrot.slane %v772, 4
        %v777 = vsel %vm566, %v773, %v774
        %vm778 = vcmask 883712
        %v779 = vsel %vm778, %v766, %v777
        %v780 = vsel %vm778, %v768, %v774
        %v781 = vsel %vm566, %v775, %v776
        %v782 = vsel %vm778, %v770, %v781
        %v783 = vsel %vm778, %v772, %v776
        %788 = vst [vmem:[#allocation3 + $0xa8] sm:$0xff] %v779
        %789 = vst [vmem:[#allocation3 + $0xb0] sm:$0xf] %v780
        %790 = vst [vmem:[#allocation3 + $0xb4] sm:$0xff] %v782
        %791 = vst [vmem:[#allocation3 + $0xbc] sm:$0xf] %v783
        %v792 = vld [vmem:[#allocation2] sm:$0xff]
        %v793 = vld [vmem:[#allocation2 + $0x8] sm:$0xff]
        %v794 = vld [vmem:[#allocation2 + $0x10] sm:$0xff]
        %v795 = vld [vmem:[#allocation2 + $0x18] sm:$0xff]
        %800 = vrot.lane.b32.xlu0 %v792, 107
        %v801 = vpop.permute.xlu0 %800
        %802 = vrot.lane.b32.xlu0 %v793, 107
        %v803 = vpop.permute.xlu0 %802
        %804 = vrot.lane.b32.xlu0 %v794, 107
        %v805 = vpop.permute.xlu0 %804
        %806 = vrot.lane.b32.xlu0 %v795, 107
        %v807 = vpop.permute.xlu0 %806
        %v808 = vrot.slane %v801, 4
        %v809 = vrot.slane %v803, 4
        %v810 = vrot.slane %v805, 4
        %v811 = vrot.slane %v807, 4
        %v812 = vsel %vm566, %v808, %v809
        %vm813 = vcmask 875520
        %v814 = vsel %vm813, %v801, %v812
        %v815 = vsel %vm813, %v803, %v809
        %v816 = vsel %vm566, %v810, %v811
        %v817 = vsel %vm813, %v805, %v816
        %v818 = vsel %vm813, %v807, %v811
        %823 = vst [vmem:[#allocation3 + $0xc0] sm:$0xff] %v814
        %824 = vst [vmem:[#allocation3 + $0xc8] sm:$0xf] %v815
        %825 = vst [vmem:[#allocation3 + $0xcc] sm:$0xff] %v817
        %826 = vst [vmem:[#allocation3 + $0xd4] sm:$0xf] %v818
        %v827 = vld [vmem:[#allocation2] sm:$0xff]
        %v828 = vld [vmem:[#allocation2 + $0x8] sm:$0xff]
        %v829 = vld [vmem:[#allocation2 + $0x10] sm:$0xff]
        %v830 = vld [vmem:[#allocation2 + $0x18] sm:$0xff]
        %835 = vrot.lane.b32.xlu0 %v827, 106
        %v836 = vpop.permute.xlu0 %835
        %837 = vrot.lane.b32.xlu0 %v828, 106
        %v838 = vpop.permute.xlu0 %837
        %839 = vrot.lane.b32.xlu0 %v829, 106
        %v840 = vpop.permute.xlu0 %839
        %841 = vrot.lane.b32.xlu0 %v830, 106
        %v842 = vpop.permute.xlu0 %841
        %v843 = vrot.slane %v836, 4
        %v844 = vrot.slane %v838, 4
        %v845 = vrot.slane %v840, 4
        %v846 = vrot.slane %v842, 4
        %v847 = vsel %vm566, %v843, %v844
        %vm848 = vcmask 867328
        %v849 = vsel %vm848, %v836, %v847
        %v850 = vsel %vm848, %v838, %v844
        %v851 = vsel %vm566, %v845, %v846
        %v852 = vsel %vm848, %v840, %v851
        %v853 = vsel %vm848, %v842, %v846
        %858 = vst [vmem:[#allocation3 + $0xd8] sm:$0xff] %v849
        %859 = vst [vmem:[#allocation3 + $0xe0] sm:$0xf] %v850
        %860 = vst [vmem:[#allocation3 + $0xe4] sm:$0xff] %v852
        %861 = vst [vmem:[#allocation3 + $0xec] sm:$0xf] %v853
        %v862 = vld [vmem:[#allocation2] sm:$0xff]
        %v863 = vld [vmem:[#allocation2 + $0x8] sm:$0xff]
        %v864 = vld [vmem:[#allocation2 + $0x10] sm:$0xff]
        %v865 = vld [vmem:[#allocation2 + $0x18] sm:$0xff]
        %870 = vrot.lane.b32.xlu0 %v862, 92
        %v871 = vpop.permute.xlu0 %870
        %872 = vrot.lane.b32.xlu0 %v863, 92
        %v873 = vpop.permute.xlu0 %872
        %874 = vrot.lane.b32.xlu0 %v864, 92
        %v875 = vpop.permute.xlu0 %874
        %876 = vrot.lane.b32.xlu0 %v865, 92
        %v877 = vpop.permute.xlu0 %876
        %v878 = vrot.slane %v871, 4
        %v879 = vrot.slane %v873, 4
        %v880 = vrot.slane %v875, 4
        %v881 = vrot.slane %v877, 4
        %v882 = vsel %vm566, %v878, %v879
        %vm883 = vcmask 752640
        %v884 = vsel %vm883, %v871, %v882
        %v885 = vsel %vm883, %v873, %v879
        %v886 = vsel %vm566, %v880, %v881
        %v887 = vsel %vm883, %v875, %v886
        %v888 = vsel %vm883, %v877, %v881
        %893 = vst [vmem:[#allocation3 + $0xf0] sm:$0xff] %v884
        %894 = vst [vmem:[#allocation3 + $0xf8] sm:$0xf] %v885
        %895 = vst [vmem:[#allocation3 + $0xfc] sm:$0xff] %v887
        %896 = vst [vmem:[#allocation3 + $0x104] sm:$0xf] %v888
        %v897 = vld [vmem:[#allocation2] sm:$0xff]
        %v898 = vld [vmem:[#allocation2 + $0x8] sm:$0xff]
        %v899 = vld [vmem:[#allocation2 + $0x10] sm:$0xff]
        %v900 = vld [vmem:[#allocation2 + $0x18] sm:$0xff]
        %905 = vrot.lane.b32.xlu0 %v897, 91
        %v906 = vpop.permute.xlu0 %905
        %907 = vrot.lane.b32.xlu0 %v898, 91
        %v908 = vpop.permute.xlu0 %907
        %909 = vrot.lane.b32.xlu0 %v899, 91
        %v910 = vpop.permute.xlu0 %909
        %911 = vrot.lane.b32.xlu0 %v900, 91
        %v912 = vpop.permute.xlu0 %911
        %v913 = vrot.slane %v906, 4
        %v914 = vrot.slane %v908, 4
        %v915 = vrot.slane %v910, 4
        %v916 = vrot.slane %v912, 4
        %v917 = vsel %vm566, %v913, %v914
        %vm918 = vcmask 744448
        %v919 = vsel %vm918, %v906, %v917
        %v920 = vsel %vm918, %v908, %v914
        %v921 = vsel %vm566, %v915, %v916
        %v922 = vsel %vm918, %v910, %v921
        %v923 = vsel %vm918, %v912, %v916
        %928 = vst [vmem:[#allocation3 + $0x108] sm:$0xff] %v919
        %929 = vst [vmem:[#allocation3 + $0x110] sm:$0xf] %v920
        %930 = vst [vmem:[#allocation3 + $0x114] sm:$0xff] %v922
        %931 = vst [vmem:[#allocation3 + $0x11c] sm:$0xf] %v923
        %v932 = vld [vmem:[#allocation2] sm:$0xff]
        %v933 = vld [vmem:[#allocation2 + $0x8] sm:$0xff]
        %v934 = vld [vmem:[#allocation2 + $0x10] sm:$0xff]
        %v935 = vld [vmem:[#allocation2 + $0x18] sm:$0xff]
        %940 = vrot.lane.b32.xlu0 %v932, 90
        %v941 = vpop.permute.xlu0 %940
        %942 = vrot.lane.b32.xlu0 %v933, 90
        %v943 = vpop.permute.xlu0 %942
        %944 = vrot.lane.b32.xlu0 %v934, 90
        %v945 = vpop.permute.xlu0 %944
        %946 = vrot.lane.b32.xlu0 %v935, 90
        %v947 = vpop.permute.xlu0 %946
        %v948 = vrot.slane %v941, 4
        %v949 = vrot.slane %v943, 4
        %v950 = vrot.slane %v945, 4
        %v951 = vrot.slane %v947, 4
        %v952 = vsel %vm566, %v948, %v949
        %vm953 = vcmask 736256
        %v954 = vsel %vm953, %v941, %v952
        %v955 = vsel %vm953, %v943, %v949
        %v956 = vsel %vm566, %v950, %v951
        %v957 = vsel %vm953, %v945, %v956
        %v958 = vsel %vm953, %v947, %v951
        %963 = vst [vmem:[#allocation3 + $0x120] sm:$0xff] %v954
        %964 = vst [vmem:[#allocation3 + $0x128] sm:$0xf] %v955
        %965 = vst [vmem:[#allocation3 + $0x12c] sm:$0xff] %v957
        %966 = vst [vmem:[#allocation3 + $0x134] sm:$0xf] %v958
        %v967 = vld [vmem:[#allocation2] sm:$0xff]
        %v968 = vld [vmem:[#allocation2 + $0x8] sm:$0xff]
        %v969 = vld [vmem:[#allocation2 + $0x10] sm:$0xff]
        %v970 = vld [vmem:[#allocation2 + $0x18] sm:$0xff]
        %975 = vrot.lane.b32.xlu0 %v967, 89
        %v976 = vpop.permute.xlu0 %975
        %977 = vrot.lane.b32.xlu0 %v968, 89
        %v978 = vpop.permute.xlu0 %977
        %979 = vrot.lane.b32.xlu0 %v969, 89
        %v980 = vpop.permute.xlu0 %979
        %981 = vrot.lane.b32.xlu0 %v970, 89
        %v982 = vpop.permute.xlu0 %981
        %v983 = vrot.slane %v976, 4
        %v984 = vrot.slane %v978, 4
        %v985 = vrot.slane %v980, 4
        %v986 = vrot.slane %v982, 4
        %v987 = vsel %vm566, %v983, %v984
        %vm988 = vcmask 728064
        %v989 = vsel %vm988, %v976, %v987
        %v990 = vsel %vm988, %v978, %v984
        %v991 = vsel %vm566, %v985, %v986
        %v992 = vsel %vm988, %v980, %v991
        %v993 = vsel %vm988, %v982, %v986
        %998 = vst [vmem:[#allocation3 + $0x138] sm:$0xff] %v989
        %999 = vst [vmem:[#allocation3 + $0x140] sm:$0xf] %v990
        %1000 = vst [vmem:[#allocation3 + $0x144] sm:$0xff] %v992
        %1001 = vst [vmem:[#allocation3 + $0x14c] sm:$0xf] %v993
        %v1002 = vld [vmem:[#allocation2] sm:$0xff]
        %v1003 = vld [vmem:[#allocation2 + $0x8] sm:$0xff]
        %v1004 = vld [vmem:[#allocation2 + $0x10] sm:$0xff]
        %v1005 = vld [vmem:[#allocation2 + $0x18] sm:$0xff]
        %1010 = vrot.lane.b32.xlu0 %v1002, 88
        %v1011 = vpop.permute.xlu0 %1010
        %1012 = vrot.lane.b32.xlu0 %v1003, 88
        %v1013 = vpop.permute.xlu0 %1012
        %1014 = vrot.lane.b32.xlu0 %v1004, 88
        %v1015 = vpop.permute.xlu0 %1014
        %1016 = vrot.lane.b32.xlu0 %v1005, 88
        %v1017 = vpop.permute.xlu0 %1016
        %v1018 = vrot.slane %v1011, 4
        %v1019 = vrot.slane %v1013, 4
        %v1020 = vrot.slane %v1015, 4
        %v1021 = vrot.slane %v1017, 4
        %v1022 = vsel %vm566, %v1018, %v1019
        %vm1023 = vcmask 719872
        %v1024 = vsel %vm1023, %v1011, %v1022
        %v1025 = vsel %vm1023, %v1013, %v1019
        %v1026 = vsel %vm566, %v1020, %v1021
        %v1027 = vsel %vm1023, %v1015, %v1026
        %v1028 = vsel %vm1023, %v1017, %v1021
        %1033 = vst [vmem:[#allocation3 + $0x150] sm:$0xff] %v1024
        %1034 = vst [vmem:[#allocation3 + $0x158] sm:$0xf] %v1025
        %1035 = vst [vmem:[#allocation3 + $0x15c] sm:$0xff] %v1027
        %1036 = vst [vmem:[#allocation3 + $0x164] sm:$0xf] %v1028
        %v1037 = vld [vmem:[#allocation2] sm:$0xff]
        %v1038 = vld [vmem:[#allocation2 + $0x8] sm:$0xff]
        %v1039 = vld [vmem:[#allocation2 + $0x10] sm:$0xff]
        %v1040 = vld [vmem:[#allocation2 + $0x18] sm:$0xff]
        %1045 = vrot.lane.b32.xlu0 %v1037, 74
        %v1046 = vpop.permute.xlu0 %1045
        %1047 = vrot.lane.b32.xlu0 %v1038, 74
        %v1048 = vpop.permute.xlu0 %1047
        %1049 = vrot.lane.b32.xlu0 %v1039, 74
        %v1050 = vpop.permute.xlu0 %1049
        %1051 = vrot.lane.b32.xlu0 %v1040, 74
        %v1052 = vpop.permute.xlu0 %1051
        %v1053 = vrot.slane %v1046, 4
        %v1054 = vrot.slane %v1048, 4
        %v1055 = vrot.slane %v1050, 4
        %v1056 = vrot.slane %v1052, 4
        %v1057 = vsel %vm566, %v1053, %v1054
        %vm1058 = vcmask 605184
        %v1059 = vsel %vm1058, %v1046, %v1057
        %v1060 = vsel %vm1058, %v1048, %v1054
        %v1061 = vsel %vm566, %v1055, %v1056
        %v1062 = vsel %vm1058, %v1050, %v1061
        %v1063 = vsel %vm1058, %v1052, %v1056
        %1068 = vst [vmem:[#allocation3 + $0x168] sm:$0xff] %v1059
        %1069 = vst [vmem:[#allocation3 + $0x170] sm:$0xf] %v1060
        %1070 = vst [vmem:[#allocation3 + $0x174] sm:$0xff] %v1062
        %1071 = vst [vmem:[#allocation3 + $0x17c] sm:$0xf] %v1063
        %v1072 = vld [vmem:[#allocation2] sm:$0xff]
        %v1073 = vld [vmem:[#allocation2 + $0x8] sm:$0xff]
        %v1074 = vld [vmem:[#allocation2 + $0x10] sm:$0xff]
        %v1075 = vld [vmem:[#allocation2 + $0x18] sm:$0xff]
        %1080 = vrot.lane.b32.xlu0 %v1072, 73
        %v1081 = vpop.permute.xlu0 %1080
        %1082 = vrot.lane.b32.xlu0 %v1073, 73
        %v1083 = vpop.permute.xlu0 %1082
        %1084 = vrot.lane.b32.xlu0 %v1074, 73
        %v1085 = vpop.permute.xlu0 %1084
        %1086 = vrot.lane.b32.xlu0 %v1075, 73
        %v1087 = vpop.permute.xlu0 %1086
        %v1088 = vrot.slane %v1081, 4
        %v1089 = vrot.slane %v1083, 4
        %v1090 = vrot.slane %v1085, 4
        %v1091 = vrot.slane %v1087, 4
        %v1092 = vsel %vm566, %v1088, %v1089
        %vm1093 = vcmask 596992
        %v1094 = vsel %vm1093, %v1081, %v1092
        %v1095 = vsel %vm1093, %v1083, %v1089
        %v1096 = vsel %vm566, %v1090, %v1091
        %v1097 = vsel %vm1093, %v1085, %v1096
        %v1098 = vsel %vm1093, %v1087, %v1091
        %1103 = vst [vmem:[#allocation3 + $0x180] sm:$0xff] %v1094
        %1104 = vst [vmem:[#allocation3 + $0x188] sm:$0xf] %v1095
        %1105 = vst [vmem:[#allocation3 + $0x18c] sm:$0xff] %v1097
        %1106 = vst [vmem:[#allocation3 + $0x194] sm:$0xf] %v1098
        %v1107 = vld [vmem:[#allocation2] sm:$0xff]
        %v1108 = vld [vmem:[#allocation2 + $0x8] sm:$0xff]
        %v1109 = vld [vmem:[#allocation2 + $0x10] sm:$0xff]
        %v1110 = vld [vmem:[#allocation2 + $0x18] sm:$0xff]
        %1115 = vrot.lane.b32.xlu0 %v1107, 72
        %v1116 = vpop.permute.xlu0 %1115
        %1117 = vrot.lane.b32.xlu0 %v1108, 72
        %v1118 = vpop.permute.xlu0 %1117
        %1119 = vrot.lane.b32.xlu0 %v1109, 72
        %v1120 = vpop.permute.xlu0 %1119
        %1121 = vrot.lane.b32.xlu0 %v1110, 72
        %v1122 = vpop.permute.xlu0 %1121
        %v1123 = vrot.slane %v1116, 4
        %v1124 = vrot.slane %v1118, 4
        %v1125 = vrot.slane %v1120, 4
        %v1126 = vrot.slane %v1122, 4
        %v1127 = vsel %vm566, %v1123, %v1124
        %vm1128 = vcmask 588800
        %v1129 = vsel %vm1128, %v1116, %v1127
        %v1130 = vsel %vm1128, %v1118, %v1124
        %v1131 = vsel %vm566, %v1125, %v1126
        %v1132 = vsel %vm1128, %v1120, %v1131
        %v1133 = vsel %vm1128, %v1122, %v1126
        %1138 = vst [vmem:[#allocation3 + $0x198] sm:$0xff] %v1129
        %1139 = vst [vmem:[#allocation3 + $0x1a0] sm:$0xf] %v1130
        %1140 = vst [vmem:[#allocation3 + $0x1a4] sm:$0xff] %v1132
        %1141 = vst [vmem:[#allocation3 + $0x1ac] sm:$0xf] %v1133
        %v1142 = vld [vmem:[#allocation2] sm:$0xff]
        %v1143 = vld [vmem:[#allocation2 + $0x8] sm:$0xff]
        %v1144 = vld [vmem:[#allocation2 + $0x10] sm:$0xff]
        %v1145 = vld [vmem:[#allocation2 + $0x18] sm:$0xff]
        %1150 = vrot.lane.b32.xlu0 %v1142, 71
        %v1151 = vpop.permute.xlu0 %1150
        %1152 = vrot.lane.b32.xlu0 %v1143, 71
        %v1153 = vpop.permute.xlu0 %1152
        %1154 = vrot.lane.b32.xlu0 %v1144, 71
        %v1155 = vpop.permute.xlu0 %1154
        %1156 = vrot.lane.b32.xlu0 %v1145, 71
        %v1157 = vpop.permute.xlu0 %1156
        %v1158 = vrot.slane %v1151, 4
        %v1159 = vrot.slane %v1153, 4
        %v1160 = vrot.slane %v1155, 4
        %v1161 = vrot.slane %v1157, 4
        %v1162 = vsel %vm566, %v1158, %v1159
        %vm1163 = vcmask 580608
        %v1164 = vsel %vm1163, %v1151, %v1162
        %v1165 = vsel %vm1163, %v1153, %v1159
        %v1166 = vsel %vm566, %v1160, %v1161
        %v1167 = vsel %vm1163, %v1155, %v1166
        %v1168 = vsel %vm1163, %v1157, %v1161
        %1173 = vst [vmem:[#allocation3 + $0x1b0] sm:$0xff] %v1164
        %1174 = vst [vmem:[#allocation3 + $0x1b8] sm:$0xf] %v1165
        %1175 = vst [vmem:[#allocation3 + $0x1bc] sm:$0xff] %v1167
        %1176 = vst [vmem:[#allocation3 + $0x1c4] sm:$0xf] %v1168
        %v1177 = vld [vmem:[#allocation2] sm:$0xff]
        %v1178 = vld [vmem:[#allocation2 + $0x8] sm:$0xff]
        %v1179 = vld [vmem:[#allocation2 + $0x10] sm:$0xff]
        %v1180 = vld [vmem:[#allocation2 + $0x18] sm:$0xff]
        %1185 = vrot.lane.b32.xlu0 %v1177, 70
        %v1186 = vpop.permute.xlu0 %1185
        %1187 = vrot.lane.b32.xlu0 %v1178, 70
        %v1188 = vpop.permute.xlu0 %1187
        %1189 = vrot.lane.b32.xlu0 %v1179, 70
        %v1190 = vpop.permute.xlu0 %1189
        %1191 = vrot.lane.b32.xlu0 %v1180, 70
        %v1192 = vpop.permute.xlu0 %1191
        %v1193 = vrot.slane %v1186, 4
        %v1194 = vrot.slane %v1188, 4
        %v1195 = vrot.slane %v1190, 4
        %v1196 = vrot.slane %v1192, 4
        %v1197 = vsel %vm566, %v1193, %v1194
        %vm1198 = vcmask 572416
        %v1199 = vsel %vm1198, %v1186, %v1197
        %v1200 = vsel %vm1198, %v1188, %v1194
        %v1201 = vsel %vm566, %v1195, %v1196
        %v1202 = vsel %vm1198, %v1190, %v1201
        %v1203 = vsel %vm1198, %v1192, %v1196
        %1208 = vst [vmem:[#allocation3 + $0x1c8] sm:$0xff] %v1199
        %1209 = vst [vmem:[#allocation3 + $0x1d0] sm:$0xf] %v1200
        %1210 = vst [vmem:[#allocation3 + $0x1d4] sm:$0xff] %v1202
        %1211 = vst [vmem:[#allocation3 + $0x1dc] sm:$0xf] %v1203
        %v1212 = vld [vmem:[#allocation2] sm:$0xff]
        %v1213 = vld [vmem:[#allocation2 + $0x8] sm:$0xff]
        %v1214 = vld [vmem:[#allocation2 + $0x10] sm:$0xff]
        %v1215 = vld [vmem:[#allocation2 + $0x18] sm:$0xff]
        %1220 = vrot.lane.b32.xlu0 %v1212, 56
        %v1221 = vpop.permute.xlu0 %1220
        %1222 = vrot.lane.b32.xlu0 %v1213, 56
        %v1223 = vpop.permute.xlu0 %1222
        %1224 = vrot.lane.b32.xlu0 %v1214, 56
        %v1225 = vpop.permute.xlu0 %1224
        %1226 = vrot.lane.b32.xlu0 %v1215, 56
        %v1227 = vpop.permute.xlu0 %1226
        %v1228 = vrot.slane %v1221, 4
        %v1229 = vrot.slane %v1223, 4
        %v1230 = vrot.slane %v1225, 4
        %v1231 = vrot.slane %v1227, 4
        %v1232 = vsel %vm566, %v1228, %v1229
        %vm1233 = vcmask 457728
        %v1234 = vsel %vm1233, %v1221, %v1232
        %v1235 = vsel %vm1233, %v1223, %v1229
        %v1236 = vsel %vm566, %v1230, %v1231
        %v1237 = vsel %vm1233, %v1225, %v1236
        %v1238 = vsel %vm1233, %v1227, %v1231
        %1243 = vst [vmem:[#allocation3 + $0x1e0] sm:$0xff] %v1234
        %1244 = vst [vmem:[#allocation3 + $0x1e8] sm:$0xf] %v1235
        %1245 = vst [vmem:[#allocation3 + $0x1ec] sm:$0xff] %v1237
        %1246 = vst [vmem:[#allocation3 + $0x1f4] sm:$0xf] %v1238
        %v1247 = vld [vmem:[#allocation2] sm:$0xff]
        %v1248 = vld [vmem:[#allocation2 + $0x8] sm:$0xff]
        %v1249 = vld [vmem:[#allocation2 + $0x10] sm:$0xff]
        %v1250 = vld [vmem:[#allocation2 + $0x18] sm:$0xff]
        %1255 = vrot.lane.b32.xlu0 %v1247, 55
        %v1256 = vpop.permute.xlu0 %1255
        %1257 = vrot.lane.b32.xlu0 %v1248, 55
        %v1258 = vpop.permute.xlu0 %1257
        %1259 = vrot.lane.b32.xlu0 %v1249, 55
        %v1260 = vpop.permute.xlu0 %1259
        %1261 = vrot.lane.b32.xlu0 %v1250, 55
        %v1262 = vpop.permute.xlu0 %1261
        %v1263 = vrot.slane %v1256, 4
        %v1264 = vrot.slane %v1258, 4
        %v1265 = vrot.slane %v1260, 4
        %v1266 = vrot.slane %v1262, 4
        %v1267 = vsel %vm566, %v1263, %v1264
        %vm1268 = vcmask 449536
        %v1269 = vsel %vm1268, %v1256, %v1267
        %v1270 = vsel %vm1268, %v1258, %v1264
        %v1271 = vsel %vm566, %v1265, %v1266
        %v1272 = vsel %vm1268, %v1260, %v1271
        %v1273 = vsel %vm1268, %v1262, %v1266
        %1278 = vst [vmem:[#allocation3 + $0x1f8] sm:$0xff] %v1269
        %1279 = vst [vmem:[#allocation3 + $0x200] sm:$0xf] %v1270
        %1280 = vst [vmem:[#allocation3 + $0x204] sm:$0xff] %v1272
        %1281 = vst [vmem:[#allocation3 + $0x20c] sm:$0xf] %v1273
        %v1282 = vld [vmem:[#allocation2] sm:$0xff]
        %v1283 = vld [vmem:[#allocation2 + $0x8] sm:$0xff]
        %v1284 = vld [vmem:[#allocation2 + $0x10] sm:$0xff]
        %v1285 = vld [vmem:[#allocation2 + $0x18] sm:$0xff]
        %1290 = vrot.lane.b32.xlu0 %v1282, 54
        %v1291 = vpop.permute.xlu0 %1290
        %1292 = vrot.lane.b32.xlu0 %v1283, 54
        %v1293 = vpop.permute.xlu0 %1292
        %1294 = vrot.lane.b32.xlu0 %v1284, 54
        %v1295 = vpop.permute.xlu0 %1294
        %1296 = vrot.lane.b32.xlu0 %v1285, 54
        %v1297 = vpop.permute.xlu0 %1296
        %v1298 = vrot.slane %v1291, 4
        %v1299 = vrot.slane %v1293, 4
        %v1300 = vrot.slane %v1295, 4
        %v1301 = vrot.slane %v1297, 4
        %v1302 = vsel %vm566, %v1298, %v1299
        %vm1303 = vcmask 441344
        %v1304 = vsel %vm1303, %v1291, %v1302
        %v1305 = vsel %vm1303, %v1293, %v1299
        %v1306 = vsel %vm566, %v1300, %v1301
        %v1307 = vsel %vm1303, %v1295, %v1306
        %v1308 = vsel %vm1303, %v1297, %v1301
        %1313 = vst [vmem:[#allocation3 + $0x210] sm:$0xff] %v1304
        %1314 = vst [vmem:[#allocation3 + $0x218] sm:$0xf] %v1305
        %1315 = vst [vmem:[#allocation3 + $0x21c] sm:$0xff] %v1307
        %1316 = vst [vmem:[#allocation3 + $0x224] sm:$0xf] %v1308
        %v1317 = vld [vmem:[#allocation2] sm:$0xff]
        %v1318 = vld [vmem:[#allocation2 + $0x8] sm:$0xff]
        %v1319 = vld [vmem:[#allocation2 + $0x10] sm:$0xff]
        %v1320 = vld [vmem:[#allocation2 + $0x18] sm:$0xff]
        %1325 = vrot.lane.b32.xlu0 %v1317, 53
        %v1326 = vpop.permute.xlu0 %1325
        %1327 = vrot.lane.b32.xlu0 %v1318, 53
        %v1328 = vpop.permute.xlu0 %1327
        %1329 = vrot.lane.b32.xlu0 %v1319, 53
        %v1330 = vpop.permute.xlu0 %1329
        %1331 = vrot.lane.b32.xlu0 %v1320, 53
        %v1332 = vpop.permute.xlu0 %1331
        %v1333 = vrot.slane %v1326, 4
        %v1334 = vrot.slane %v1328, 4
        %v1335 = vrot.slane %v1330, 4
        %v1336 = vrot.slane %v1332, 4
        %v1337 = vsel %vm566, %v1333, %v1334
        %vm1338 = vcmask 433152
        %v1339 = vsel %vm1338, %v1326, %v1337
        %v1340 = vsel %vm1338, %v1328, %v1334
        %v1341 = vsel %vm566, %v1335, %v1336
        %v1342 = vsel %vm1338, %v1330, %v1341
        %v1343 = vsel %vm1338, %v1332, %v1336
        %1348 = vst [vmem:[#allocation3 + $0x228] sm:$0xff] %v1339
        %1349 = vst [vmem:[#allocation3 + $0x230] sm:$0xf] %v1340
        %1350 = vst [vmem:[#allocation3 + $0x234] sm:$0xff] %v1342
        %1351 = vst [vmem:[#allocation3 + $0x23c] sm:$0xf] %v1343
        %v1352 = vld [vmem:[#allocation2] sm:$0xff]
        %v1353 = vld [vmem:[#allocation2 + $0x8] sm:$0xff]
        %v1354 = vld [vmem:[#allocation2 + $0x10] sm:$0xff]
        %v1355 = vld [vmem:[#allocation2 + $0x18] sm:$0xff]
        %1360 = vrot.lane.b32.xlu0 %v1352, 52
        %v1361 = vpop.permute.xlu0 %1360
        %1362 = vrot.lane.b32.xlu0 %v1353, 52
        %v1363 = vpop.permute.xlu0 %1362
        %1364 = vrot.lane.b32.xlu0 %v1354, 52
        %v1365 = vpop.permute.xlu0 %1364
        %1366 = vrot.lane.b32.xlu0 %v1355, 52
        %v1367 = vpop.permute.xlu0 %1366
        %v1368 = vrot.slane %v1361, 4
        %v1369 = vrot.slane %v1363, 4
        %v1370 = vrot.slane %v1365, 4
        %v1371 = vrot.slane %v1367, 4
        %v1372 = vsel %vm566, %v1368, %v1369
        %vm1373 = vcmask 424960
        %v1374 = vsel %vm1373, %v1361, %v1372
        %v1375 = vsel %vm1373, %v1363, %v1369
        %v1376 = vsel %vm566, %v1370, %v1371
        %v1377 = vsel %vm1373, %v1365, %v1376
        %v1378 = vsel %vm1373, %v1367, %v1371
        %1383 = vst [vmem:[#allocation3 + $0x240] sm:$0xff] %v1374
        %1384 = vst [vmem:[#allocation3 + $0x248] sm:$0xf] %v1375
        %1385 = vst [vmem:[#allocation3 + $0x24c] sm:$0xff] %v1377
        %1386 = vst [vmem:[#allocation3 + $0x254] sm:$0xf] %v1378
        %v1387 = vld [vmem:[%s0] sm:$0xff]
        %v1388 = vld [vmem:[%s0 + $0x8] sm:$0xff]
        %v1389 = vld [vmem:[%s0 + $0x10] sm:$0xff]
        %v1390 = vld [vmem:[%s0 + $0x18] sm:$0xff]
        %v1391 = vld [vmem:[#allocation3] sm:$0xff]
        %v1392 = vld [vmem:[#allocation3 + $0x8] sm:$0xf]
        %v1393 = vld [vmem:[#allocation3 + $0xc] sm:$0xff]
        %v1394 = vld [vmem:[#allocation3 + $0x14] sm:$0xf]
        %v1395 = vld [vmem:[#allocation3 + $0x18] sm:$0xff]
        %v1396 = vld [vmem:[#allocation3 + $0x20] sm:$0xf]
        %v1397 = vld [vmem:[#allocation3 + $0x24] sm:$0xff]
        %v1398 = vld [vmem:[#allocation3 + $0x2c] sm:$0xf]
        %v1399 = vld [vmem:[#allocation3 + $0x30] sm:$0xff]
        %v1400 = vld [vmem:[#allocation3 + $0x38] sm:$0xf]
        %v1401 = vld [vmem:[#allocation3 + $0x3c] sm:$0xff]
        %v1402 = vld [vmem:[#allocation3 + $0x44] sm:$0xf]
        %v1403 = vld [vmem:[#allocation3 + $0x48] sm:$0xff]
        %v1404 = vld [vmem:[#allocation3 + $0x50] sm:$0xf]
        %v1405 = vld [vmem:[#allocation3 + $0x54] sm:$0xff]
        %v1406 = vld [vmem:[#allocation3 + $0x5c] sm:$0xf]
        %v1407 = vld [vmem:[#allocation3 + $0x60] sm:$0xff]
        %v1408 = vld [vmem:[#allocation3 + $0x68] sm:$0xf]
        %v1409 = vld [vmem:[#allocation3 + $0x6c] sm:$0xff]
        %v1410 = vld [vmem:[#allocation3 + $0x74] sm:$0xf]
        %v1411 = vld [vmem:[#allocation3 + $0x78] sm:$0xff]
        %v1412 = vld [vmem:[#allocation3 + $0x80] sm:$0xf]
        %v1413 = vld [vmem:[#allocation3 + $0x84] sm:$0xff]
        %v1414 = vld [vmem:[#allocation3 + $0x8c] sm:$0xf]
        %v1415 = vld [vmem:[#allocation3 + $0x90] sm:$0xff]
        %v1416 = vld [vmem:[#allocation3 + $0x98] sm:$0xf]
        %v1417 = vld [vmem:[#allocation3 + $0x9c] sm:$0xff]
        %v1418 = vld [vmem:[#allocation3 + $0xa4] sm:$0xf]
        %v1419 = vld [vmem:[#allocation3 + $0xa8] sm:$0xff]
        %v1420 = vld [vmem:[#allocation3 + $0xb0] sm:$0xf]
        %v1421 = vld [vmem:[#allocation3 + $0xb4] sm:$0xff]
        %v1422 = vld [vmem:[#allocation3 + $0xbc] sm:$0xf]
        %v1423 = vld [vmem:[#allocation3 + $0xc0] sm:$0xff]
        %v1424 = vld [vmem:[#allocation3 + $0xc8] sm:$0xf]
        %v1425 = vld [vmem:[#allocation3 + $0xcc] sm:$0xff]
        %v1426 = vld [vmem:[#allocation3 + $0xd4] sm:$0xf]
        %v1427 = vld [vmem:[#allocation3 + $0xd8] sm:$0xff]
        %v1428 = vld [vmem:[#allocation3 + $0xe0] sm:$0xf]
        %v1429 = vld [vmem:[#allocation3 + $0xe4] sm:$0xff]
        %v1430 = vld [vmem:[#allocation3 + $0xec] sm:$0xf]
        %v1431 = vld [vmem:[#allocation3 + $0xf0] sm:$0xff]
        %v1432 = vld [vmem:[#allocation3 + $0xf8] sm:$0xf]
        %v1433 = vld [vmem:[#allocation3 + $0xfc] sm:$0xff]
        %v1434 = vld [vmem:[#allocation3 + $0x104] sm:$0xf]
        %v1435 = vld [vmem:[#allocation3 + $0x108] sm:$0xff]
        %v1436 = vld [vmem:[#allocation3 + $0x110] sm:$0xf]
        %v1437 = vld [vmem:[#allocation3 + $0x114] sm:$0xff]
        %v1438 = vld [vmem:[#allocation3 + $0x11c] sm:$0xf]
        %v1439 = vld [vmem:[#allocation3 + $0x120] sm:$0xff]
        %v1440 = vld [vmem:[#allocation3 + $0x128] sm:$0xf]
        %v1441 = vld [vmem:[#allocation3 + $0x12c] sm:$0xff]
        %v1442 = vld [vmem:[#allocation3 + $0x134] sm:$0xf]
        %v1443 = vld [vmem:[#allocation3 + $0x138] sm:$0xff]
        %v1444 = vld [vmem:[#allocation3 + $0x140] sm:$0xf]
        %v1445 = vld [vmem:[#allocation3 + $0x144] sm:$0xff]
        %v1446 = vld [vmem:[#allocation3 + $0x14c] sm:$0xf]
        %v1447 = vld [vmem:[#allocation3 + $0x150] sm:$0xff]
        %v1448 = vld [vmem:[#allocation3 + $0x158] sm:$0xf]
        %v1449 = vld [vmem:[#allocation3 + $0x15c] sm:$0xff]
        %v1450 = vld [vmem:[#allocation3 + $0x164] sm:$0xf]
        %v1451 = vld [vmem:[#allocation3 + $0x168] sm:$0xff]
        %v1452 = vld [vmem:[#allocation3 + $0x170] sm:$0xf]
        %v1453 = vld [vmem:[#allocation3 + $0x174] sm:$0xff]
        %v1454 = vld [vmem:[#allocation3 + $0x17c] sm:$0xf]
        %v1455 = vld [vmem:[#allocation3 + $0x180] sm:$0xff]
        %v1456 = vld [vmem:[#allocation3 + $0x188] sm:$0xf]
        %v1457 = vld [vmem:[#allocation3 + $0x18c] sm:$0xff]
        %v1458 = vld [vmem:[#allocation3 + $0x194] sm:$0xf]
        %v1459 = vld [vmem:[#allocation3 + $0x198] sm:$0xff]
        %v1460 = vld [vmem:[#allocation3 + $0x1a0] sm:$0xf]
        %v1461 = vld [vmem:[#allocation3 + $0x1a4] sm:$0xff]
        %v1462 = vld [vmem:[#allocation3 + $0x1ac] sm:$0xf]
        %v1463 = vld [vmem:[#allocation3 + $0x1b0] sm:$0xff]
        %v1464 = vld [vmem:[#allocation3 + $0x1b8] sm:$0xf]
        %v1465 = vld [vmem:[#allocation3 + $0x1bc] sm:$0xff]
        %v1466 = vld [vmem:[#allocation3 + $0x1c4] sm:$0xf]
        %v1467 = vld [vmem:[#allocation3 + $0x1c8] sm:$0xff]
        %v1468 = vld [vmem:[#allocation3 + $0x1d0] sm:$0xf]
        %v1469 = vld [vmem:[#allocation3 + $0x1d4] sm:$0xff]
        %v1470 = vld [vmem:[#allocation3 + $0x1dc] sm:$0xf]
        %v1471 = vld [vmem:[#allocation3 + $0x1e0] sm:$0xff]
        %v1472 = vld [vmem:[#allocation3 + $0x1e8] sm:$0xf]
        %v1473 = vld [vmem:[#allocation3 + $0x1ec] sm:$0xff]
        %v1474 = vld [vmem:[#allocation3 + $0x1f4] sm:$0xf]
        %v1475 = vld [vmem:[#allocation3 + $0x1f8] sm:$0xff]
        %v1476 = vld [vmem:[#allocation3 + $0x200] sm:$0xf]
        %v1477 = vld [vmem:[#allocation3 + $0x204] sm:$0xff]
        %v1478 = vld [vmem:[#allocation3 + $0x20c] sm:$0xf]
        %v1479 = vld [vmem:[#allocation3 + $0x210] sm:$0xff]
        %v1480 = vld [vmem:[#allocation3 + $0x218] sm:$0xf]
        %v1481 = vld [vmem:[#allocation3 + $0x21c] sm:$0xff]
        %v1482 = vld [vmem:[#allocation3 + $0x224] sm:$0xf]
        %v1483 = vld [vmem:[#allocation3 + $0x228] sm:$0xff]
        %v1484 = vld [vmem:[#allocation3 + $0x230] sm:$0xf]
        %v1485 = vld [vmem:[#allocation3 + $0x234] sm:$0xff]
        %v1486 = vld [vmem:[#allocation3 + $0x23c] sm:$0xf]
        %v1487 = vld [vmem:[#allocation3 + $0x240] sm:$0xff]
        %v1488 = vld [vmem:[#allocation3 + $0x248] sm:$0xf]
        %v1489 = vld [vmem:[#allocation3 + $0x24c] sm:$0xff]
        %v1490 = vld [vmem:[#allocation3 + $0x254] sm:$0xf]
        %v1495 = vunpack.c.l.b16 %v1387
        %v1496 = vunpack.c.h.b16 %v1387
        %v1497 = vunpack.c.l.b16 %v1388
        %v1498 = vunpack.c.h.b16 %v1388
        %v1499 = vunpack.c.l.b16 %v1389
        %v1500 = vunpack.c.h.b16 %v1389
        %v1501 = vunpack.c.l.b16 %v1390
        %v1502 = vunpack.c.h.b16 %v1390
        %v1503 = vpack.c.b16 %v1499, %v1495
        %v1504 = vpack.c.b16 %v1500, %v1496
        %v1505 = vpack.c.b16 %v1501, %v1497
        %v1506 = vpack.c.b16 %v1502, %v1498
        %v1610 = vunpack.c.l.b16 %v1391
        %v1611 = vunpack.c.h.b16 %v1391
        %v1612 = vunpack.c.l.b16 %v1392
        %v1613 = vunpack.c.l.b16 %v1393
        %v1614 = vunpack.c.h.b16 %v1393
        %v1615 = vunpack.c.l.b16 %v1394
        %v1616 = vunpack.c.l.b16 %v1395
        %v1617 = vunpack.c.h.b16 %v1395
        %v1618 = vunpack.c.l.b16 %v1396
        %v1619 = vunpack.c.l.b16 %v1397
        %v1620 = vunpack.c.h.b16 %v1397
        %v1621 = vunpack.c.l.b16 %v1398
        %v1622 = vunpack.c.l.b16 %v1399
        %v1623 = vunpack.c.h.b16 %v1399
        %v1624 = vunpack.c.l.b16 %v1400
        %v1625 = vunpack.c.l.b16 %v1401
        %v1626 = vunpack.c.h.b16 %v1401
        %v1627 = vunpack.c.l.b16 %v1402
        %v1628 = vunpack.c.l.b16 %v1403
        %v1629 = vunpack.c.h.b16 %v1403
        %v1630 = vunpack.c.l.b16 %v1404
        %v1631 = vunpack.c.l.b16 %v1405
        %v1632 = vunpack.c.h.b16 %v1405
        %v1633 = vunpack.c.l.b16 %v1406
        %v1634 = vunpack.c.l.b16 %v1407
        %v1635 = vunpack.c.h.b16 %v1407
        %v1636 = vunpack.c.l.b16 %v1408
        %v1637 = vunpack.c.l.b16 %v1409
        %v1638 = vunpack.c.h.b16 %v1409
        %v1639 = vunpack.c.l.b16 %v1410
        %v1640 = vunpack.c.l.b16 %v1411
        %v1641 = vunpack.c.h.b16 %v1411
        %v1642 = vunpack.c.l.b16 %v1412
        %v1643 = vunpack.c.l.b16 %v1413
        %v1644 = vunpack.c.h.b16 %v1413
        %v1645 = vunpack.c.l.b16 %v1414
        %v1646 = vunpack.c.l.b16 %v1415
        %v1647 = vunpack.c.h.b16 %v1415
        %v1648 = vunpack.c.l.b16 %v1416
        %v1649 = vunpack.c.l.b16 %v1417
        %v1650 = vunpack.c.h.b16 %v1417
        %v1651 = vunpack.c.l.b16 %v1418
        %v1652 = vunpack.c.l.b16 %v1419
        %v1653 = vunpack.c.h.b16 %v1419
        %v1654 = vunpack.c.l.b16 %v1420
        %v1655 = vunpack.c.l.b16 %v1421
        %v1656 = vunpack.c.h.b16 %v1421
        %v1657 = vunpack.c.l.b16 %v1422
        %v1658 = vunpack.c.l.b16 %v1423
        %v1659 = vunpack.c.h.b16 %v1423
        %v1660 = vunpack.c.l.b16 %v1424
        %v1661 = vunpack.c.l.b16 %v1425
        %v1662 = vunpack.c.h.b16 %v1425
        %v1663 = vunpack.c.l.b16 %v1426
        %v1664 = vunpack.c.l.b16 %v1427
        %v1665 = vunpack.c.h.b16 %v1427
        %v1666 = vunpack.c.l.b16 %v1428
        %v1667 = vunpack.c.l.b16 %v1429
        %v1668 = vunpack.c.h.b16 %v1429
        %v1669 = vunpack.c.l.b16 %v1430
        %v1670 = vunpack.c.l.b16 %v1431
        %v1671 = vunpack.c.h.b16 %v1431
        %v1672 = vunpack.c.l.b16 %v1432
        %v1673 = vunpack.c.l.b16 %v1433
        %v1674 = vunpack.c.h.b16 %v1433
        %v1675 = vunpack.c.l.b16 %v1434
        %v1676 = vunpack.c.l.b16 %v1435
        %v1677 = vunpack.c.h.b16 %v1435
        %v1678 = vunpack.c.l.b16 %v1436
        %v1679 = vunpack.c.l.b16 %v1437
        %v1680 = vunpack.c.h.b16 %v1437
        %v1681 = vunpack.c.l.b16 %v1438
        %v1682 = vunpack.c.l.b16 %v1439
        %v1683 = vunpack.c.h.b16 %v1439
        %v1684 = vunpack.c.l.b16 %v1440
        %v1685 = vunpack.c.l.b16 %v1441
        %v1686 = vunpack.c.h.b16 %v1441
        %v1687 = vunpack.c.l.b16 %v1442
        %v1688 = vunpack.c.l.b16 %v1443
        %v1689 = vunpack.c.h.b16 %v1443
        %v1690 = vunpack.c.l.b16 %v1444
        %v1691 = vunpack.c.l.b16 %v1445
        %v1692 = vunpack.c.h.b16 %v1445
        %v1693 = vunpack.c.l.b16 %v1446
        %v1694 = vunpack.c.l.b16 %v1447
        %v1695 = vunpack.c.h.b16 %v1447
        %v1696 = vunpack.c.l.b16 %v1448
        %v1697 = vunpack.c.l.b16 %v1449
        %v1698 = vunpack.c.h.b16 %v1449
        %v1699 = vunpack.c.l.b16 %v1450
        %v1700 = vunpack.c.l.b16 %v1451
        %v1701 = vunpack.c.h.b16 %v1451
        %v1702 = vunpack.c.l.b16 %v1452
        %v1703 = vunpack.c.l.b16 %v1453
        %v1704 = vunpack.c.h.b16 %v1453
        %v1705 = vunpack.c.l.b16 %v1454
        %v1706 = vunpack.c.l.b16 %v1455
        %v1707 = vunpack.c.h.b16 %v1455
        %v1708 = vunpack.c.l.b16 %v1456
        %v1709 = vunpack.c.l.b16 %v1457
        %v1710 = vunpack.c.h.b16 %v1457
        %v1711 = vunpack.c.l.b16 %v1458
        %v1712 = vunpack.c.l.b16 %v1459
        %v1713 = vunpack.c.h.b16 %v1459
        %v1714 = vunpack.c.l.b16 %v1460
        %v1715 = vunpack.c.l.b16 %v1461
        %v1716 = vunpack.c.h.b16 %v1461
        %v1717 = vunpack.c.l.b16 %v1462
        %v1718 = vunpack.c.l.b16 %v1463
        %v1719 = vunpack.c.h.b16 %v1463
        %v1720 = vunpack.c.l.b16 %v1464
        %v1721 = vunpack.c.l.b16 %v1465
        %v1722 = vunpack.c.h.b16 %v1465
        %v1723 = vunpack.c.l.b16 %v1466
        %v1724 = vunpack.c.l.b16 %v1467
        %v1725 = vunpack.c.h.b16 %v1467
        %v1726 = vunpack.c.l.b16 %v1468
        %v1727 = vunpack.c.l.b16 %v1469
        %v1728 = vunpack.c.h.b16 %v1469
        %v1729 = vunpack.c.l.b16 %v1470
        %v1730 = vunpack.c.l.b16 %v1471
        %v1731 = vunpack.c.h.b16 %v1471
        %v1732 = vunpack.c.l.b16 %v1472
        %v1733 = vunpack.c.l.b16 %v1473
        %v1734 = vunpack.c.h.b16 %v1473
        %v1735 = vunpack.c.l.b16 %v1474
        %v1736 = vunpack.c.l.b16 %v1475
        %v1737 = vunpack.c.h.b16 %v1475
        %v1738 = vunpack.c.l.b16 %v1476
        %v1739 = vunpack.c.l.b16 %v1477
        %v1740 = vunpack.c.h.b16 %v1477
        %v1741 = vunpack.c.l.b16 %v1478
        %v1742 = vunpack.c.l.b16 %v1479
        %v1743 = vunpack.c.h.b16 %v1479
        %v1744 = vunpack.c.l.b16 %v1480
        %v1745 = vunpack.c.l.b16 %v1481
        %v1746 = vunpack.c.h.b16 %v1481
        %v1747 = vunpack.c.l.b16 %v1482
        %v1748 = vunpack.c.l.b16 %v1483
        %v1749 = vunpack.c.h.b16 %v1483
        %v1750 = vunpack.c.l.b16 %v1484
        %v1751 = vunpack.c.l.b16 %v1485
        %v1752 = vunpack.c.h.b16 %v1485
        %v1753 = vunpack.c.l.b16 %v1486
        %v1754 = vunpack.c.l.b16 %v1487
        %v1755 = vunpack.c.h.b16 %v1487
        %v1756 = vunpack.c.l.b16 %v1488
        %v1757 = vunpack.c.l.b16 %v1489
        %v1758 = vunpack.c.h.b16 %v1489
        %v1759 = vunpack.c.l.b16 %v1490
        %v1760 = vpack.c.b16 %v1613, %v1610
        %v1761 = vpack.c.b16 %v1614, %v1611
        %v1762 = vpack.c.b16 %v1615, %v1612
        %v1763 = vpack.c.b16 %v1619, %v1616
        %v1764 = vpack.c.b16 %v1620, %v1617
        %v1765 = vpack.c.b16 %v1621, %v1618
        %v1766 = vpack.c.b16 %v1625, %v1622
        %v1767 = vpack.c.b16 %v1626, %v1623
        %v1768 = vpack.c.b16 %v1627, %v1624
        %v1769 = vpack.c.b16 %v1631, %v1628
        %v1770 = vpack.c.b16 %v1632, %v1629
        %v1771 = vpack.c.b16 %v1633, %v1630
        %v1772 = vpack.c.b16 %v1637, %v1634
        %v1773 = vpack.c.b16 %v1638, %v1635
        %v1774 = vpack.c.b16 %v1639, %v1636
        %v1775 = vpack.c.b16 %v1643, %v1640
        %v1776 = vpack.c.b16 %v1644, %v1641
        %v1777 = vpack.c.b16 %v1645, %v1642
        %v1778 = vpack.c.b16 %v1649, %v1646
        %v1779 = vpack.c.b16 %v1650, %v1647
        %v1780 = vpack.c.b16 %v1651, %v1648
        %v1781 = vpack.c.b16 %v1655, %v1652
        %v1782 = vpack.c.b16 %v1656, %v1653
        %v1783 = vpack.c.b16 %v1657, %v1654
        %v1784 = vpack.c.b16 %v1661, %v1658
        %v1785 = vpack.c.b16 %v1662, %v1659
        %v1786 = vpack.c.b16 %v1663, %v1660
        %v1787 = vpack.c.b16 %v1667, %v1664
        %v1788 = vpack.c.b16 %v1668, %v1665
        %v1789 = vpack.c.b16 %v1669, %v1666
        %v1790 = vpack.c.b16 %v1673, %v1670
        %v1791 = vpack.c.b16 %v1674, %v1671
        %v1792 = vpack.c.b16 %v1675, %v1672
        %v1793 = vpack.c.b16 %v1679, %v1676
        %v1794 = vpack.c.b16 %v1680, %v1677
        %v1795 = vpack.c.b16 %v1681, %v1678
        %v1796 = vpack.c.b16 %v1685, %v1682
        %v1797 = vpack.c.b16 %v1686, %v1683
        %v1798 = vpack.c.b16 %v1687, %v1684
        %v1799 = vpack.c.b16 %v1691, %v1688
        %v1800 = vpack.c.b16 %v1692, %v1689
        %v1801 = vpack.c.b16 %v1693, %v1690
        %v1802 = vpack.c.b16 %v1697, %v1694
        %v1803 = vpack.c.b16 %v1698, %v1695
        %v1804 = vpack.c.b16 %v1699, %v1696
        %v1805 = vpack.c.b16 %v1703, %v1700
        %v1806 = vpack.c.b16 %v1704, %v1701
        %v1807 = vpack.c.b16 %v1705, %v1702
        %v1808 = vpack.c.b16 %v1709, %v1706
        %v1809 = vpack.c.b16 %v1710, %v1707
        %v1810 = vpack.c.b16 %v1711, %v1708
        %v1811 = vpack.c.b16 %v1715, %v1712
        %v1812 = vpack.c.b16 %v1716, %v1713
        %v1813 = vpack.c.b16 %v1717, %v1714
        %v1814 = vpack.c.b16 %v1721, %v1718
        %v1815 = vpack.c.b16 %v1722, %v1719
        %v1816 = vpack.c.b16 %v1723, %v1720
        %v1817 = vpack.c.b16 %v1727, %v1724
        %v1818 = vpack.c.b16 %v1728, %v1725
        %v1819 = vpack.c.b16 %v1729, %v1726
        %v1820 = vpack.c.b16 %v1733, %v1730
        %v1821 = vpack.c.b16 %v1734, %v1731
        %v1822 = vpack.c.b16 %v1735, %v1732
        %v1823 = vpack.c.b16 %v1739, %v1736
        %v1824 = vpack.c.b16 %v1740, %v1737
        %v1825 = vpack.c.b16 %v1741, %v1738
        %v1826 = vpack.c.b16 %v1745, %v1742
        %v1827 = vpack.c.b16 %v1746, %v1743
        %v1828 = vpack.c.b16 %v1747, %v1744
        %v1829 = vpack.c.b16 %v1751, %v1748
        %v1830 = vpack.c.b16 %v1752, %v1749
        %v1831 = vpack.c.b16 %v1753, %v1750
        %v1832 = vpack.c.b16 %v1757, %v1754
        %v1833 = vpack.c.b16 %v1758, %v1755
        %v1834 = vpack.c.b16 %v1759, %v1756
        %vm1910 = vcmask 130048
        %v1912 = vsel %vm1910, %v1506, 0
        %1914 = vmatpush.bf16.msra.mxu0 %v1781
        %1915 = vmatpush.bf16.msra.mxu0 %v1778
        %1916 = vmatpush.bf16.msra.mxu0 %v1775
        %1917 = vmatpush.bf16.msra.mxu0 %v1772
        %1918 = vmatpush.bf16.msra.mxu0 %v1769
        %1919 = vmatpush.bf16.msra.mxu0 %v1766
        %1920 = vmatpush.bf16.msra.mxu0 %v1763
        %1921 = vmatpush.bf16.msra.mxu0 %v1760
        %1922 = vmatmul.bf16.gmra.mxu0 %v1503
        %v1923 = vpop.f32.mrf.mxu0
        %v1924 = vadd.f32 0.0, %v1923
        %v1925 = vpop.f32.mrf.mxu0
        %v1926 = vadd.f32 0.0, %v1925
        %1927 = vdwg.mxu0
        %1928 = vmatpush.bf16.msra.mxu0 %v1805
        %1929 = vmatpush.bf16.msra.mxu0 %v1802
        %1930 = vmatpush.bf16.msra.mxu0 %v1799
        %1931 = vmatpush.bf16.msra.mxu0 %v1796
        %1932 = vmatpush.bf16.msra.mxu0 %v1793
        %1933 = vmatpush.bf16.msra.mxu0 %v1790
        %1934 = vmatpush.bf16.msra.mxu0 %v1787
        %1935 = vmatpush.bf16.msra.mxu0 %v1784
        %1936 = vmatmul.bf16.gmra.mxu0 %v1504
        %v1937 = vpop.f32.mrf.mxu0
        %v1938 = vadd.f32 %v1924, %v1937
        %v1939 = vpop.f32.mrf.mxu0
        %v1940 = vadd.f32 %v1926, %v1939
        %1941 = vdwg.mxu0
        %1942 = vmatpush.bf16.msra.mxu0 %v1829
        %1943 = vmatpush.bf16.msra.mxu0 %v1826
        %1944 = vmatpush.bf16.msra.mxu0 %v1823
        %1945 = vmatpush.bf16.msra.mxu0 %v1820
        %1946 = vmatpush.bf16.msra.mxu0 %v1817
        %1947 = vmatpush.bf16.msra.mxu0 %v1814
        %1948 = vmatpush.bf16.msra.mxu0 %v1811
        %1949 = vmatpush.bf16.msra.mxu0 %v1808
        %1950 = vmatmul.bf16.gmra.mxu0 %v1505
        %v1951 = vpop.f32.mrf.mxu0
        %v1952 = vadd.f32 %v1938, %v1951
        %v1953 = vpop.f32.mrf.mxu0
        %v1954 = vadd.f32 %v1940, %v1953
        %1955 = vdwg.mxu0
        %1956 = vmatpush.bf16.msra.mxu0 0
        %1957 = vmatpush.bf16.msra.mxu0 0
        %1958 = vmatpush.bf16.msra.mxu0 0
        %1959 = vmatpush.bf16.msra.mxu0 0
        %1960 = vmatpush.bf16.msra.mxu0 0
        %1961 = vmatpush.bf16.msra.mxu0 0
        %1962 = vmatpush.bf16.msra.mxu0 0
        %1963 = vmatpush.bf16.msra.mxu0 %v1832
        %1964 = vmatmul.bf16.gmra.mxu0 %v1912
        %v1965 = vpop.f32.mrf.mxu0
        %v1966 = vadd.f32 %v1952, %v1965
        %v1967 = vpop.f32.mrf.mxu0
        %v1968 = vadd.f32 %v1954, %v1967
        %1969 = vdwg.mxu0
        %1970 = vmatpush.bf16.msra.mxu0 %v1782
        %1971 = vmatpush.bf16.msra.mxu0 %v1779
        %1972 = vmatpush.bf16.msra.mxu0 %v1776
        %1973 = vmatpush.bf16.msra.mxu0 %v1773
        %1974 = vmatpush.bf16.msra.mxu0 %v1770
        %1975 = vmatpush.bf16.msra.mxu0 %v1767
        %1976 = vmatpush.bf16.msra.mxu0 %v1764
        %1977 = vmatpush.bf16.msra.mxu0 %v1761
        %1978 = vmatmul.bf16.gmra.mxu0 %v1503
        %v1979 = vpop.f32.mrf.mxu0
        %v1980 = vadd.f32 0.0, %v1979
        %v1981 = vpop.f32.mrf.mxu0
        %v1982 = vadd.f32 0.0, %v1981
        %1983 = vdwg.mxu0
        %1984 = vmatpush.bf16.msra.mxu0 %v1806
        %1985 = vmatpush.bf16.msra.mxu0 %v1803
        %1986 = vmatpush.bf16.msra.mxu0 %v1800
        %1987 = vmatpush.bf16.msra.mxu0 %v1797
        %1988 = vmatpush.bf16.msra.mxu0 %v1794
        %1989 = vmatpush.bf16.msra.mxu0 %v1791
        %1990 = vmatpush.bf16.msra.mxu0 %v1788
        %1991 = vmatpush.bf16.msra.mxu0 %v1785
        %1992 = vmatmul.bf16.gmra.mxu0 %v1504
        %v1993 = vpop.f32.mrf.mxu0
        %v1994 = vadd.f32 %v1980, %v1993
        %v1995 = vpop.f32.mrf.mxu0
        %v1996 = vadd.f32 %v1982, %v1995
        %1997 = vdwg.mxu0
        %1998 = vmatpush.bf16.msra.mxu0 %v1830
        %1999 = vmatpush.bf16.msra.mxu0 %v1827
        %2000 = vmatpush.bf16.msra.mxu0 %v1824
        %2001 = vmatpush.bf16.msra.mxu0 %v1821
        %2002 = vmatpush.bf16.msra.mxu0 %v1818
        %2003 = vmatpush.bf16.msra.mxu0 %v1815
        %2004 = vmatpush.bf16.msra.mxu0 %v1812
        %2005 = vmatpush.bf16.msra.mxu0 %v1809
        %2006 = vmatmul.bf16.gmra.mxu0 %v1505
        %v2007 = vpop.f32.mrf.mxu0
        %v2008 = vadd.f32 %v1994, %v2007
        %v2009 = vpop.f32.mrf.mxu0
        %v2010 = vadd.f32 %v1996, %v2009
        %2011 = vdwg.mxu0
        %2012 = vmatpush.bf16.msra.mxu0 0
        %2013 = vmatpush.bf16.msra.mxu0 0
        %2014 = vmatpush.bf16.msra.mxu0 0
        %2015 = vmatpush.bf16.msra.mxu0 0
        %2016 = vmatpush.bf16.msra.mxu0 0
        %2017 = vmatpush.bf16.msra.mxu0 0
        %2018 = vmatpush.bf16.msra.mxu0 0
        %2019 = vmatpush.bf16.msra.mxu0 %v1833
        %2020 = vmatmul.bf16.gmra.mxu0 %v1912
        %v2021 = vpop.f32.mrf.mxu0
        %v2022 = vadd.f32 %v2008, %v2021
        %v2023 = vpop.f32.mrf.mxu0
        %v2024 = vadd.f32 %v2010, %v2023
        %2025 = vdwg.mxu0
        %2026 = vmatpush.bf16.msra.mxu0 %v1783
        %2027 = vmatpush.bf16.msra.mxu0 %v1780
        %2028 = vmatpush.bf16.msra.mxu0 %v1777
        %2029 = vmatpush.bf16.msra.mxu0 %v1774
        %2030 = vmatpush.bf16.msra.mxu0 %v1771
        %2031 = vmatpush.bf16.msra.mxu0 %v1768
        %2032 = vmatpush.bf16.msra.mxu0 %v1765
        %2033 = vmatpush.bf16.msra.mxu0 %v1762
        %2034 = vmatmul.bf16.gmra.mxu0 %v1503
        %v2035 = vpop.f32.mrf.mxu0
        %v2036 = vadd.f32 0.0, %v2035
        %v2037 = vpop.f32.mrf.mxu0
        %v2038 = vadd.f32 0.0, %v2037
        %2039 = vdwg.mxu0
        %2040 = vmatpush.bf16.msra.mxu0 %v1807
        %2041 = vmatpush.bf16.msra.mxu0 %v1804
        %2042 = vmatpush.bf16.msra.mxu0 %v1801
        %2043 = vmatpush.bf16.msra.mxu0 %v1798
        %2044 = vmatpush.bf16.msra.mxu0 %v1795
        %2045 = vmatpush.bf16.msra.mxu0 %v1792
        %2046 = vmatpush.bf16.msra.mxu0 %v1789
        %2047 = vmatpush.bf16.msra.mxu0 %v1786
        %2048 = vmatmul.bf16.gmra.mxu0 %v1504
        %v2049 = vpop.f32.mrf.mxu0
        %v2050 = vadd.f32 %v2036, %v2049
        %v2051 = vpop.f32.mrf.mxu0
        %v2052 = vadd.f32 %v2038, %v2051
        %2053 = vdwg.mxu0
        %2054 = vmatpush.bf16.msra.mxu0 %v1831
        %2055 = vmatpush.bf16.msra.mxu0 %v1828
        %2056 = vmatpush.bf16.msra.mxu0 %v1825
        %2057 = vmatpush.bf16.msra.mxu0 %v1822
        %2058 = vmatpush.bf16.msra.mxu0 %v1819
        %2059 = vmatpush.bf16.msra.mxu0 %v1816
        %2060 = vmatpush.bf16.msra.mxu0 %v1813
        %2061 = vmatpush.bf16.msra.mxu0 %v1810
        %2062 = vmatmul.bf16.gmra.mxu0 %v1505
        %v2063 = vpop.f32.mrf.mxu0
        %v2064 = vadd.f32 %v2050, %v2063
        %v2065 = vpop.f32.mrf.mxu0
        %v2066 = vadd.f32 %v2052, %v2065
        %2067 = vdwg.mxu0
        %2068 = vmatpush.bf16.msra.mxu0 0
        %2069 = vmatpush.bf16.msra.mxu0 0
        %2070 = vmatpush.bf16.msra.mxu0 0
        %2071 = vmatpush.bf16.msra.mxu0 0
        %2072 = vmatpush.bf16.msra.mxu0 0
        %2073 = vmatpush.bf16.msra.mxu0 0
        %2074 = vmatpush.bf16.msra.mxu0 0
        %2075 = vmatpush.bf16.msra.mxu0 %v1834
        %2076 = vmatmul.bf16.gmra.mxu0 %v1912
        %v2077 = vpop.f32.mrf.mxu0
        %v2078 = vadd.f32 %v2064, %v2077
        %v2079 = vpop.f32.mrf.mxu0
        %v2080 = vadd.f32 %v2066, %v2079
        %2081 = vdwg.mxu0
        %2082 = vst [vmem:[%s516] sm:$0xff] %v1966
        %2083 = vst [vmem:[%s516 + $0x8] sm:$0xff] %v2022
        %2084 = vst [vmem:[%s516 + $0x10] sm:$0xff] %v2078
        %2085 = vst [vmem:[%s516 + $0x18] sm:$0xff] %v1968
        %2086 = vst [vmem:[%s516 + $0x20] sm:$0xff] %v2024
        %2087 = vst [vmem:[%s516 + $0x28] sm:$0xff] %v2080
        %s2088 = sand.u32 %s99, 1
        %s2089 = sand.u32 %s99, 1
        %s2090 = smul.addr %s2089, 48
        %s2091 = scalar_lea.vmem [#allocation6], %s2090
        // Predicated region
        $region140: #{a_call__.1} parent=130 // pred_check
          %p2092 = pneg %p109
        $region141: #{a_call__.1} parent=130 // pred_check_branch
          %2094 = sbr.rel (%p2092) target = $region143
        $region142: #{a_call__.1} parent=130 // pred_region
          %s2095 = smul.u32 3, %s14
          %s2096 = smul.addr %s2095, 8
          %s2097 = scalar_lea.vmem %s3, %s2096
          // Predicated region
          $region144: #{a_call__.1} parent=142 // pred_check
            _
          $region145: #{a_call__.1} parent=142 // pred_check_branch
            %2099 = sbr.rel (0) target = $region147
          $region146: #{a_call__.1} parent=142 // pred_region
            // Predicated region
            $region148: #{a_call__.1} parent=146 // pred_check
              _
            $region149: #{a_call__.1} parent=146 // pred_check_branch
              %2101 = sbr.rel (0) target = $region151
            $region150: #{a_call__.1} parent=146 // pred_region
              loop: start=0, step=1, limit=1
              $region152: #{a_call__.1} parent=150 // loop_pre_header
                _
              $region153: #{a_call__.1} parent=150 // loop_header
                %s2103 = sphi 0, %s2107
                %p2104 = scmp.ge.s32.totalorder %s2103, 1
                %s2108 = sphi %s2091, %s2091
                %s2109 = sphi %s2097, %s2097
              $region154: #{a_call__.1} parent=150 // loop_header_branch
                %2106 = sbr.rel (%p2104) target = $region158
              $region155: #{a_call__.1} parent=150 // loop_body
                %v2110 = vld [vmem:[%s2108] sm:$0xff]
                %2111 = vst [vmem:[%s2109] sm:$0xff] %v2110
                %v2112 = vld [vmem:[%s2108 + $0x8] sm:$0xff]
                %2113 = vst [vmem:[%s2109 + $0x8] sm:$0xff] %v2112
                %v2114 = vld [vmem:[%s2108 + $0x10] sm:$0xff]
                %2115 = vst [vmem:[%s2109 + $0x10] sm:$0xff] %v2114
                %v2116 = vld [vmem:[%s2108 + $0x18] sm:$0xff]
                %2117 = vst [vmem:[%s2109 + $0x30] sm:$0xff] %v2116
                %v2118 = vld [vmem:[%s2108 + $0x20] sm:$0xff]
                %2119 = vst [vmem:[%s2109 + $0x38] sm:$0xff] %v2118
                %v2120 = vld [vmem:[%s2108 + $0x28] sm:$0xff]
                %2121 = vst [vmem:[%s2109 + $0x40] sm:$0xff] %v2120
              $region156: #{a_call__.1} parent=150 // loop_footer
                %s2107 = sadd.s32 1, %s2103
              $region157: #{a_call__.1} parent=150 // loop_footer_branch
                %2102 = sbr.rel target = $region153
              $region158: #{a_call__.1} parent=150 // loop_exit
                _
            $region151: #{a_call__.1} parent=146 // pred_fallthru
              _
            // Predicated region
            $region159: #{a_call__.1} parent=146 // pred_check
              _
            $region160: #{a_call__.1} parent=146 // pred_check_branch
              %2123 = sbr.rel target = $region162
            $region161: #{a_call__.1} parent=146 // pred_region
              _
            $region162: #{a_call__.1} parent=146 // pred_fallthru
              _
          $region147: #{a_call__.1} parent=142 // pred_fallthru
            _
          %2124 = vnop
        $region143: #{a_call__.1} parent=130 // pred_fallthru
          _
      $region131: #{a_call__.1} parent=5 // pred_fallthru
        _
      %p2125 = scmp.le.s32.totalorder 2, %s9
      // Predicated region
      $region163: #{a_call__.1} parent=5 // pred_check
        %p2126 = pneg %p2125
      $region164: #{a_call__.1} parent=5 // pred_check_branch
        %2128 = sbr.rel (%p2126) target = $region166
      $region165: #{a_call__.1} parent=5 // pred_region
        %s2129 = ssub.s32 %s9, 2
        // Predicated region
        $region167: #{a_call__.1} parent=165 // pred_check
          %p2130 = pneg %p115
        $region168: #{a_call__.1} parent=165 // pred_check_branch
          %2132 = sbr.rel (%p2130) target = $region170
        $region169: #{a_call__.1} parent=165 // pred_region
          %s2133 = sand.u32 %s100, 1
          %s2134 = sand.u32 %s100, 1
          %s2135 = smul.addr %s2134, 48
          %s2136 = scalar_lea.vmem [#allocation6], %s2135
        $region170: #{a_call__.1} parent=165 // pred_fallthru
          _
      $region166: #{a_call__.1} parent=5 // pred_fallthru
        _
    $region6: #{a_call__.1} parent=1 // loop_footer
      %s13 = sadd.s32 1, %s9
    $region7: #{a_call__.1} parent=1 // loop_footer_branch
      %8 = sbr.rel target = $region3
    $region8: #{a_call__.1} parent=1 // loop_exit
      _

</llo_original>
